<compile_context>
chip_gen: v7x
topology: tpu7x:2x2x1
jax: 0.10.0
libtpu: 0.0.40
codegen_flags: <defaults>
</compile_context>

<pallas_src>
import functools

import jax
import jax.numpy as jnp
from jax.experimental import pallas as pl
from jax.experimental.pallas import tpu as pltpu


# ------------------------------ fused kernel ----------------------------------

def _transformer_layer_kernel(
    dec_ref, enc_ref,
    # self-attention
    s_wq_ref, s_wk_ref, s_wv_ref, s_pw_ref, s_pb_ref, s_g_ref, s_b_ref,
    # encoder attention
    e_wq_ref, e_wk_ref, e_wv_ref, e_pw_ref, e_pb_ref, e_g_ref, e_b_ref,
    # position-wise FFN
    f_w1_ref, f_b1_ref, f_w2_ref, f_b2_ref, f_g_ref, f_lnb_ref,
    out_ref,
    *, n_head, d_k, d_v, batch_tile, len_q, len_kv, inv_temper, eps, apply_ln):

    x = dec_ref[...].astype(jnp.float32)      # (Bt*Lq, D)  decoder rows of this tile
    enc = enc_ref[...].astype(jnp.float32)    # (Bt*Lkv, D) encoder memory of this tile

    def layer_norm(z, gamma, beta):
        # Matches LayerNormalization: torch.std is UNBIASED (N-1), denom (sigma+eps).
        # Exact divide here (accuracy-sensitive); approx reciprocal only in softmax.
        d = z.shape[-1]
        mu = jnp.mean(z, axis=-1, keepdims=True)
        zc = z - mu
        var = jnp.sum(zc * zc, axis=-1, keepdims=True) * (1.0 / (d - 1))
        return zc / (jnp.sqrt(var) + eps) * gamma + beta

    def mha(q_res, q_bf, kv_bf, wq_ref, wk_ref, wv_ref, pw_ref, pb_ref,
            g_ref, b_ref):
        # Fused-head projections: one lane-dense bf16 MXU matmul per tensor,
        # bf16 cast hoisted out of the head loop (cast once).
        qh = jnp.dot(q_bf, wq_ref[...],
                     preferred_element_type=jnp.float32).astype(jnp.bfloat16)
        kh = jnp.dot(kv_bf, wk_ref[...],
                     preferred_element_type=jnp.float32).astype(jnp.bfloat16)
        vh = jnp.dot(kv_bf, wv_ref[...],
                     preferred_element_type=jnp.float32).astype(jnp.bfloat16)

        # --- per-(batch, head) scores (tiny NT matmuls, VMEM-resident) ---
        scores = []
        for b in range(batch_tile):
            q_b = qh[b * len_q:(b + 1) * len_q, :]
            k_b = kh[b * len_kv:(b + 1) * len_kv, :]
            for h in range(n_head):
                scores.append(jax.lax.dot_general(
                    q_b[:, h * d_k:(h + 1) * d_k],
                    k_b[:, h * d_k:(h + 1) * d_k],
                    (((1,), (1,)), ((), ())),
                    preferred_element_type=jnp.float32))

        # --- ONE batched softmax over all (b, h) stacked along rows ---
        s = jnp.concatenate(scores, axis=0) * inv_temper        # (Bt*H*Lq, Lkv)
        s = s - jnp.max(s, axis=-1, keepdims=True)
        p = jnp.exp(s)
        attn = (p * pl.reciprocal(jnp.sum(p, axis=-1, keepdims=True),
                                  approx=True)).astype(jnp.bfloat16)

        # --- attn @ V per (b, h); concat heads -> ONE output projection matmul ---
        rows = []
        for b in range(batch_tile):
            v_b = vh[b * len_kv:(b + 1) * len_kv, :]
            heads = []
            for h in range(n_head):
                r0 = (b * n_head + h) * len_q
                heads.append(jnp.dot(attn[r0:r0 + len_q, :],
                                     v_b[:, h * d_v:(h + 1) * d_v],
                                     preferred_element_type=jnp.float32))
            rows.append(jnp.concatenate(heads, axis=1))          # (Lq, H*d_v)
        o = jnp.concatenate(rows, axis=0).astype(jnp.bfloat16)   # (Bt*Lq, H*d_v)

        y = jnp.dot(o, pw_ref[...], preferred_element_type=jnp.float32)
        y = y + pb_ref[...] + q_res            # bias + residual (dropout = identity)
        if apply_ln:                           # LayerNormalization is identity if L == 1
            y = layer_norm(y, g_ref[...], b_ref[...])
        return y

    # --- self attention ---
    x_bf = x.astype(jnp.bfloat16)
    x1 = mha(x, x_bf, x_bf,
             s_wq_ref, s_wk_ref, s_wv_ref, s_pw_ref, s_pb_ref, s_g_ref, s_b_ref)

    # --- encoder attention ---
    x2 = mha(x1, x1.astype(jnp.bfloat16), enc.astype(jnp.bfloat16),
             e_wq_ref, e_wk_ref, e_wv_ref, e_pw_ref, e_pb_ref, e_g_ref, e_b_ref)

    # --- position-wise FFN (Conv1d(k=1) == linear over channels) ---
    h = jnp.dot(x2.astype(jnp.bfloat16), f_w1_ref[...],
                preferred_element_type=jnp.float32) + f_b1_ref[...]
    h = jnp.maximum(h, 0.0)                   # ReLU
    y = jnp.dot(h.astype(jnp.bfloat16), f_w2_ref[...],
                preferred_element_type=jnp.float32) + f_b2_ref[...]
    y = y + x2                                # residual (dropout = identity)
    if apply_ln:
        y = layer_norm(y, f_g_ref[...], f_lnb_ref[...])

    out_ref[...] = y.astype(out_ref.dtype)


# ------------------------------ wrapper ----------------------------------------

def _fuse_heads(w):
    # (n_head, D, d) -> (D, n_head*d); column order matches torch.cat over heads.
    n_head, d_model, d = w.shape
    return jnp.transpose(w, (1, 0, 2)).reshape(d_model, n_head * d)


def _pick_batch_tile(B, L, Lk):
    """Largest divisor of B with Bt*L <= 256 rows (MXU M fill) and blocks that
    satisfy the (8,128) sublane rule (Bt == B, or Bt*L and Bt*Lk multiples of 8)."""
    best = 1
    for cand in range(1, B + 1):
        if B % cand != 0:
            continue
        if cand * L > 256:
            continue
        if cand != B and ((cand * L) % 8 != 0 or (cand * Lk) % 8 != 0):
            continue
        best = cand
    return best


def transformer_layer(dec_input, enc_output, params, *, eps=1e-3, batch_tile=None):
    B, L, D = dec_input.shape
    Be, Lk, De = enc_output.shape
    assert Be == B and De == D

    slf, encp, ffn = params['slf_attn'], params['enc_attn'], params['pos_ffn']
    n_head, _, d_k = slf['w_qs'].shape
    d_v = slf['w_vs'].shape[-1]
    d_out = slf['proj_w'].shape[-1]

    apply_ln = (L != 1)                       # LayerNormalization skips when z.size(1)==1
    inv_temper = 1.0 / (float(D) ** 0.5)      # reference scales by sqrt(d_model)

    if batch_tile is None:
        batch_tile = _pick_batch_tile(B, L, Lk)
    Bt = batch_tile
    assert B % Bt == 0
    grid = (B // Bt,)
    rows_q = Bt * L
    rows_k = Bt * Lk

    bf, f32 = jnp.bfloat16, jnp.float32

    def mha_args(p):
        return (
            _fuse_heads(p['w_qs']).astype(bf),
            _fuse_heads(p['w_ks']).astype(bf),
            _fuse_heads(p['w_vs']).astype(bf),
            p['proj_w'].astype(bf),
            p['proj_b'].reshape(1, -1).astype(f32),
            p['ln_g'].reshape(1, -1).astype(f32),
            p['ln_b'].reshape(1, -1).astype(f32),
        )

    ffn_args = (
        ffn['w1'].astype(bf),
        ffn['b1'].reshape(1, -1).astype(f32),
        ffn['w2'].astype(bf),
        ffn['b2'].reshape(1, -1).astype(f32),
        ffn['ln_g'].reshape(1, -1).astype(f32),
        ffn['ln_b'].reshape(1, -1).astype(f32),
    )

    # Flatten batch into rows outside the kernel so each grid step sees a
    # lane/sublane-aligned (Bt*L, D) slab (no in-kernel reshape).
    dec_flat = dec_input.reshape(B * L, D)
    enc_flat = enc_output.reshape(B * Lk, D)

    args = (dec_flat, enc_flat) + mha_args(slf) + mha_args(encp) + ffn_args

    in_specs = [
        pl.BlockSpec((rows_q, D), lambda i: (i, 0)),
        pl.BlockSpec((rows_k, D), lambda i: (i, 0)),
    ] + [pl.BlockSpec(a.shape, lambda i, nd=a.ndim: (0,) * nd) for a in args[2:]]
    out_specs = pl.BlockSpec((rows_q, d_out), lambda i: (i, 0))

    # Explicit scoped-VMEM limit: resident weights + double-buffered activation
    # blocks + headroom, capped at 64 MiB (v7x physical VMEM per TC).
    weight_bytes = sum(int(a.size) * a.dtype.itemsize for a in args[2:])
    block_bytes = 4 * (rows_q * D + rows_k * D + rows_q * d_out)
    vmem_limit = int(min(64 << 20,
                         max(8 << 20, 2 * weight_bytes + 4 * block_bytes + (2 << 20))))

    kernel = functools.partial(
        _transformer_layer_kernel, n_head=n_head, d_k=d_k, d_v=d_v,
        batch_tile=Bt, len_q=L, len_kv=Lk,
        inv_temper=inv_temper, eps=eps, apply_ln=apply_ln)

    out_flat = pl.pallas_call(
        kernel,
        out_shape=jax.ShapeDtypeStruct((B * L, d_out), dec_input.dtype),
        grid_spec=pltpu.PrefetchScalarGridSpec(
            num_scalar_prefetch=0,
            grid=grid,
            in_specs=in_specs,
            out_specs=out_specs,
        ),
        compiler_params=pltpu.CompilerParams(
            dimension_semantics=("parallel",),
            vmem_limit_bytes=vmem_limit,
        ),
    )(*args)

    return out_flat.reshape(B, L, d_out)


# ------------------------------ parameter init --------------------------------

def _xavier_normal(key, shape, fan_in, fan_out):
    std = (2.0 / (fan_in + fan_out)) ** 0.5
    return std * jax.random.normal(key, shape, jnp.float32)


def init_mha_params(key, n_head, d_model, d_k, d_v, d_out):
    ks = jax.random.split(key, 4)
    return dict(
        w_qs=_xavier_normal(ks[0], (n_head, d_model, d_k), d_model * d_k, n_head * d_k),
        w_ks=_xavier_normal(ks[1], (n_head, d_model, d_k), d_model * d_k, n_head * d_k),
        w_vs=_xavier_normal(ks[2], (n_head, d_model, d_v), d_model * d_v, n_head * d_v),
        proj_w=_xavier_normal(ks[3], (n_head * d_v, d_out), n_head * d_v, d_out),
        proj_b=jnp.zeros((d_out,), jnp.float32),
        ln_g=jnp.ones((d_out,), jnp.float32),
        ln_b=jnp.zeros((d_out,), jnp.float32),
    )


def init_ffn_params(key, d_hid, d_inner, d_out):
    ks = jax.random.split(key, 4)
    s1 = (1.0 / d_hid) ** 0.5
    s2 = (1.0 / d_inner) ** 0.5
    return dict(
        w1=s1 * jax.random.normal(ks[0], (d_hid, d_inner), jnp.float32),
        b1=s1 * jax.random.normal(ks[1], (d_inner,), jnp.float32),
        w2=s2 * jax.random.normal(ks[2], (d_inner, d_out), jnp.float32),
        b2=s2 * jax.random.normal(ks[3], (d_out,), jnp.float32),
        ln_g=jnp.ones((d_out,), jnp.float32),
        ln_b=jnp.zeros((d_out,), jnp.float32),
    )


if __name__ == "__main__":
    B, L, d_model, n_head = 2, 8, 32, 8
    d_k = d_v = d_model           # TransformerLayer defaults: d_k = d_v = d_model
    d_inner = 4 * d_model         # default d_inner

    key = jax.random.PRNGKey(0)
    k_dec, k_enc, k_slf, k_ea, k_ffn = jax.random.split(key, 5)

    dec_input = jax.random.normal(k_dec, (B, L, d_model), jnp.float32)
    enc_output = jax.random.normal(k_enc, (B, L, d_model), jnp.float32)

    params = dict(
        slf_attn=init_mha_params(k_slf, n_head, d_model, d_k, d_v, d_model),
        enc_attn=init_mha_params(k_ea, n_head, d_model, d_k, d_v, d_model),
        pos_ffn=init_ffn_params(k_ffn, d_model, d_inner, d_model),
    )

    out = jax.jit(transformer_layer)(dec_input, enc_output, params)
    out = jax.block_until_ready(out)
    assert out.shape == (B, L, d_model) and out.dtype == jnp.float32
    print("KERNEL_OK")
</pallas_src>

<mosaic_0001>
module attributes {stable_mosaic.version = 11 : i64} {
  func.func @_transformer_layer_kernel(%arg0: i32, %arg1: memref<16x32xf32, #tpu.memory_space<vmem>>, %arg2: memref<16x32xf32, #tpu.memory_space<vmem>>, %arg3: memref<32x256xbf16, #tpu.memory_space<vmem>>, %arg4: memref<32x256xbf16, #tpu.memory_space<vmem>>, %arg5: memref<32x256xbf16, #tpu.memory_space<vmem>>, %arg6: memref<256x32xbf16, #tpu.memory_space<vmem>>, %arg7: memref<1x32xf32, #tpu.memory_space<vmem>>, %arg8: memref<1x32xf32, #tpu.memory_space<vmem>>, %arg9: memref<1x32xf32, #tpu.memory_space<vmem>>, %arg10: memref<32x256xbf16, #tpu.memory_space<vmem>>, %arg11: memref<32x256xbf16, #tpu.memory_space<vmem>>, %arg12: memref<32x256xbf16, #tpu.memory_space<vmem>>, %arg13: memref<256x32xbf16, #tpu.memory_space<vmem>>, %arg14: memref<1x32xf32, #tpu.memory_space<vmem>>, %arg15: memref<1x32xf32, #tpu.memory_space<vmem>>, %arg16: memref<1x32xf32, #tpu.memory_space<vmem>>, %arg17: memref<32x128xbf16, #tpu.memory_space<vmem>>, %arg18: memref<1x128xf32, #tpu.memory_space<vmem>>, %arg19: memref<128x32xbf16, #tpu.memory_space<vmem>>, %arg20: memref<1x32xf32, #tpu.memory_space<vmem>>, %arg21: memref<1x32xf32, #tpu.memory_space<vmem>>, %arg22: memref<1x32xf32, #tpu.memory_space<vmem>>, %arg23: memref<16x32xf32, #tpu.memory_space<vmem>>) attributes {dimension_semantics = [#tpu.dimension_semantics<parallel>], iteration_bounds = array<i64: 1>, scalar_prefetch = 0 : i64, scratch_operands = 0 : i64, tpu.core_type = #tpu.core_type<tc>, window_params = [{transform_indices = @transform_0, window_bounds = array<i64: 16, 32>}, {transform_indices = @transform_1, window_bounds = array<i64: 16, 32>}, {pipeline_mode = #tpu.pipeline_mode<synchronous>, transform_indices = @transform_2, window_bounds = array<i64: 32, 256>}, {pipeline_mode = #tpu.pipeline_mode<synchronous>, transform_indices = @transform_3, window_bounds = array<i64: 32, 256>}, {pipeline_mode = #tpu.pipeline_mode<synchronous>, transform_indices = @transform_4, window_bounds = array<i64: 32, 256>}, {pipeline_mode = #tpu.pipeline_mode<synchronous>, transform_indices = @transform_5, window_bounds = array<i64: 256, 32>}, {pipeline_mode = #tpu.pipeline_mode<synchronous>, transform_indices = @transform_6, window_bounds = array<i64: 1, 32>}, {pipeline_mode = #tpu.pipeline_mode<synchronous>, transform_indices = @transform_7, window_bounds = array<i64: 1, 32>}, {pipeline_mode = #tpu.pipeline_mode<synchronous>, transform_indices = @transform_8, window_bounds = array<i64: 1, 32>}, {pipeline_mode = #tpu.pipeline_mode<synchronous>, transform_indices = @transform_9, window_bounds = array<i64: 32, 256>}, {pipeline_mode = #tpu.pipeline_mode<synchronous>, transform_indices = @transform_10, window_bounds = array<i64: 32, 256>}, {pipeline_mode = #tpu.pipeline_mode<synchronous>, transform_indices = @transform_11, window_bounds = array<i64: 32, 256>}, {pipeline_mode = #tpu.pipeline_mode<synchronous>, transform_indices = @transform_12, window_bounds = array<i64: 256, 32>}, {pipeline_mode = #tpu.pipeline_mode<synchronous>, transform_indices = @transform_13, window_bounds = array<i64: 1, 32>}, {pipeline_mode = #tpu.pipeline_mode<synchronous>, transform_indices = @transform_14, window_bounds = array<i64: 1, 32>}, {pipeline_mode = #tpu.pipeline_mode<synchronous>, transform_indices = @transform_15, window_bounds = array<i64: 1, 32>}, {pipeline_mode = #tpu.pipeline_mode<synchronous>, transform_indices = @transform_16, window_bounds = array<i64: 32, 128>}, {pipeline_mode = #tpu.pipeline_mode<synchronous>, transform_indices = @transform_17, window_bounds = array<i64: 1, 128>}, {pipeline_mode = #tpu.pipeline_mode<synchronous>, transform_indices = @transform_18, window_bounds = array<i64: 128, 32>}, {pipeline_mode = #tpu.pipeline_mode<synchronous>, transform_indices = @transform_19, window_bounds = array<i64: 1, 32>}, {pipeline_mode = #tpu.pipeline_mode<synchronous>, transform_indices = @transform_20, window_bounds = array<i64: 1, 32>}, {pipeline_mode = #tpu.pipeline_mode<synchronous>, transform_indices = @transform_21, window_bounds = array<i64: 1, 32>}, {transform_indices = @transform_22, window_bounds = array<i64: 16, 32>}]} {
    %c0 = arith.constant 0 : index
    %c0_0 = arith.constant 0 : index
    %0 = vector.load %arg1[%c0, %c0_0] : memref<16x32xf32, #tpu.memory_space<vmem>>, vector<16x32xf32>
    %c0_1 = arith.constant 0 : index
    %c0_2 = arith.constant 0 : index
    %1 = vector.load %arg2[%c0_1, %c0_2] : memref<16x32xf32, #tpu.memory_space<vmem>>, vector<16x32xf32>
    %2 = arith.truncf %0 : vector<16x32xf32> to vector<16x32xbf16>
    %c0_3 = arith.constant 0 : index
    %c0_4 = arith.constant 0 : index
    %3 = vector.load %arg3[%c0_3, %c0_4] : memref<32x256xbf16, #tpu.memory_space<vmem>>, vector<32x256xbf16>
    %cst = arith.constant dense<0.000000e+00> : vector<16x256xf32>
    %4 = tpu.matmul %2, %3, %cst {dimension_numbers = #tpu.dot_dimension_numbers<[1], [0], [0], [1], [0, 0, 1, 1], [], []>} : vector<16x32xbf16>, vector<32x256xbf16>, vector<16x256xf32> -> vector<16x256xf32>
    %5 = arith.truncf %4 : vector<16x256xf32> to vector<16x256xbf16>
    %c0_5 = arith.constant 0 : index
    %c0_6 = arith.constant 0 : index
    %6 = vector.load %arg4[%c0_5, %c0_6] : memref<32x256xbf16, #tpu.memory_space<vmem>>, vector<32x256xbf16>
    %cst_7 = arith.constant dense<0.000000e+00> : vector<16x256xf32>
    %7 = tpu.matmul %2, %6, %cst_7 {dimension_numbers = #tpu.dot_dimension_numbers<[1], [0], [0], [1], [0, 0, 1, 1], [], []>} : vector<16x32xbf16>, vector<32x256xbf16>, vector<16x256xf32> -> vector<16x256xf32>
    %8 = arith.truncf %7 : vector<16x256xf32> to vector<16x256xbf16>
    %c0_8 = arith.constant 0 : index
    %c0_9 = arith.constant 0 : index
    %9 = vector.load %arg5[%c0_8, %c0_9] : memref<32x256xbf16, #tpu.memory_space<vmem>>, vector<32x256xbf16>
    %cst_10 = arith.constant dense<0.000000e+00> : vector<16x256xf32>
    %10 = tpu.matmul %2, %9, %cst_10 {dimension_numbers = #tpu.dot_dimension_numbers<[1], [0], [0], [1], [0, 0, 1, 1], [], []>} : vector<16x32xbf16>, vector<32x256xbf16>, vector<16x256xf32> -> vector<16x256xf32>
    %11 = arith.truncf %10 : vector<16x256xf32> to vector<16x256xbf16>
    %12 = vector.extract_strided_slice %5 {offsets = [0, 0], sizes = [8, 256], strides = [1, 1]} : vector<16x256xbf16> to vector<8x256xbf16>
    %13 = vector.extract_strided_slice %8 {offsets = [0, 0], sizes = [8, 256], strides = [1, 1]} : vector<16x256xbf16> to vector<8x256xbf16>
    %14 = vector.extract_strided_slice %12 {offsets = [0, 0], sizes = [8, 32], strides = [1, 1]} : vector<8x256xbf16> to vector<8x32xbf16>
    %15 = vector.extract_strided_slice %13 {offsets = [0, 0], sizes = [8, 32], strides = [1, 1]} : vector<8x256xbf16> to vector<8x32xbf16>
    %cst_11 = arith.constant dense<0.000000e+00> : vector<8x8xf32>
    %16 = tpu.matmul %14, %15, %cst_11 {dimension_numbers = #tpu.dot_dimension_numbers<[1], [1], [0], [0], [0, 0, 1, 0], [], []>} : vector<8x32xbf16>, vector<8x32xbf16>, vector<8x8xf32> -> vector<8x8xf32>
    %17 = vector.extract_strided_slice %12 {offsets = [0, 32], sizes = [8, 32], strides = [1, 1]} : vector<8x256xbf16> to vector<8x32xbf16>
    %18 = vector.extract_strided_slice %13 {offsets = [0, 32], sizes = [8, 32], strides = [1, 1]} : vector<8x256xbf16> to vector<8x32xbf16>
    %cst_12 = arith.constant dense<0.000000e+00> : vector<8x8xf32>
    %19 = tpu.matmul %17, %18, %cst_12 {dimension_numbers = #tpu.dot_dimension_numbers<[1], [1], [0], [0], [0, 0, 1, 0], [], []>} : vector<8x32xbf16>, vector<8x32xbf16>, vector<8x8xf32> -> vector<8x8xf32>
    %20 = vector.extract_strided_slice %12 {offsets = [0, 64], sizes = [8, 32], strides = [1, 1]} : vector<8x256xbf16> to vector<8x32xbf16>
    %21 = vector.extract_strided_slice %13 {offsets = [0, 64], sizes = [8, 32], strides = [1, 1]} : vector<8x256xbf16> to vector<8x32xbf16>
    %cst_13 = arith.constant dense<0.000000e+00> : vector<8x8xf32>
    %22 = tpu.matmul %20, %21, %cst_13 {dimension_numbers = #tpu.dot_dimension_numbers<[1], [1], [0], [0], [0, 0, 1, 0], [], []>} : vector<8x32xbf16>, vector<8x32xbf16>, vector<8x8xf32> -> vector<8x8xf32>
    %23 = vector.extract_strided_slice %12 {offsets = [0, 96], sizes = [8, 32], strides = [1, 1]} : vector<8x256xbf16> to vector<8x32xbf16>
    %24 = vector.extract_strided_slice %13 {offsets = [0, 96], sizes = [8, 32], strides = [1, 1]} : vector<8x256xbf16> to vector<8x32xbf16>
    %cst_14 = arith.constant dense<0.000000e+00> : vector<8x8xf32>
    %25 = tpu.matmul %23, %24, %cst_14 {dimension_numbers = #tpu.dot_dimension_numbers<[1], [1], [0], [0], [0, 0, 1, 0], [], []>} : vector<8x32xbf16>, vector<8x32xbf16>, vector<8x8xf32> -> vector<8x8xf32>
    %26 = vector.extract_strided_slice %12 {offsets = [0, 128], sizes = [8, 32], strides = [1, 1]} : vector<8x256xbf16> to vector<8x32xbf16>
    %27 = vector.extract_strided_slice %13 {offsets = [0, 128], sizes = [8, 32], strides = [1, 1]} : vector<8x256xbf16> to vector<8x32xbf16>
    %cst_15 = arith.constant dense<0.000000e+00> : vector<8x8xf32>
    %28 = tpu.matmul %26, %27, %cst_15 {dimension_numbers = #tpu.dot_dimension_numbers<[1], [1], [0], [0], [0, 0, 1, 0], [], []>} : vector<8x32xbf16>, vector<8x32xbf16>, vector<8x8xf32> -> vector<8x8xf32>
    %29 = vector.extract_strided_slice %12 {offsets = [0, 160], sizes = [8, 32], strides = [1, 1]} : vector<8x256xbf16> to vector<8x32xbf16>
    %30 = vector.extract_strided_slice %13 {offsets = [0, 160], sizes = [8, 32], strides = [1, 1]} : vector<8x256xbf16> to vector<8x32xbf16>
    %cst_16 = arith.constant dense<0.000000e+00> : vector<8x8xf32>
    %31 = tpu.matmul %29, %30, %cst_16 {dimension_numbers = #tpu.dot_dimension_numbers<[1], [1], [0], [0], [0, 0, 1, 0], [], []>} : vector<8x32xbf16>, vector<8x32xbf16>, vector<8x8xf32> -> vector<8x8xf32>
    %32 = vector.extract_strided_slice %12 {offsets = [0, 192], sizes = [8, 32], strides = [1, 1]} : vector<8x256xbf16> to vector<8x32xbf16>
    %33 = vector.extract_strided_slice %13 {offsets = [0, 192], sizes = [8, 32], strides = [1, 1]} : vector<8x256xbf16> to vector<8x32xbf16>
    %cst_17 = arith.constant dense<0.000000e+00> : vector<8x8xf32>
    %34 = tpu.matmul %32, %33, %cst_17 {dimension_numbers = #tpu.dot_dimension_numbers<[1], [1], [0], [0], [0, 0, 1, 0], [], []>} : vector<8x32xbf16>, vector<8x32xbf16>, vector<8x8xf32> -> vector<8x8xf32>
    %35 = vector.extract_strided_slice %12 {offsets = [0, 224], sizes = [8, 32], strides = [1, 1]} : vector<8x256xbf16> to vector<8x32xbf16>
    %36 = vector.extract_strided_slice %13 {offsets = [0, 224], sizes = [8, 32], strides = [1, 1]} : vector<8x256xbf16> to vector<8x32xbf16>
    %cst_18 = arith.constant dense<0.000000e+00> : vector<8x8xf32>
    %37 = tpu.matmul %35, %36, %cst_18 {dimension_numbers = #tpu.dot_dimension_numbers<[1], [1], [0], [0], [0, 0, 1, 0], [], []>} : vector<8x32xbf16>, vector<8x32xbf16>, vector<8x8xf32> -> vector<8x8xf32>
    %38 = vector.extract_strided_slice %5 {offsets = [8, 0], sizes = [8, 256], strides = [1, 1]} : vector<16x256xbf16> to vector<8x256xbf16>
    %39 = vector.extract_strided_slice %8 {offsets = [8, 0], sizes = [8, 256], strides = [1, 1]} : vector<16x256xbf16> to vector<8x256xbf16>
    %40 = vector.extract_strided_slice %38 {offsets = [0, 0], sizes = [8, 32], strides = [1, 1]} : vector<8x256xbf16> to vector<8x32xbf16>
    %41 = vector.extract_strided_slice %39 {offsets = [0, 0], sizes = [8, 32], strides = [1, 1]} : vector<8x256xbf16> to vector<8x32xbf16>
    %cst_19 = arith.constant dense<0.000000e+00> : vector<8x8xf32>
    %42 = tpu.matmul %40, %41, %cst_19 {dimension_numbers = #tpu.dot_dimension_numbers<[1], [1], [0], [0], [0, 0, 1, 0], [], []>} : vector<8x32xbf16>, vector<8x32xbf16>, vector<8x8xf32> -> vector<8x8xf32>
    %43 = vector.extract_strided_slice %38 {offsets = [0, 32], sizes = [8, 32], strides = [1, 1]} : vector<8x256xbf16> to vector<8x32xbf16>
    %44 = vector.extract_strided_slice %39 {offsets = [0, 32], sizes = [8, 32], strides = [1, 1]} : vector<8x256xbf16> to vector<8x32xbf16>
    %cst_20 = arith.constant dense<0.000000e+00> : vector<8x8xf32>
    %45 = tpu.matmul %43, %44, %cst_20 {dimension_numbers = #tpu.dot_dimension_numbers<[1], [1], [0], [0], [0, 0, 1, 0], [], []>} : vector<8x32xbf16>, vector<8x32xbf16>, vector<8x8xf32> -> vector<8x8xf32>
    %46 = vector.extract_strided_slice %38 {offsets = [0, 64], sizes = [8, 32], strides = [1, 1]} : vector<8x256xbf16> to vector<8x32xbf16>
    %47 = vector.extract_strided_slice %39 {offsets = [0, 64], sizes = [8, 32], strides = [1, 1]} : vector<8x256xbf16> to vector<8x32xbf16>
    %cst_21 = arith.constant dense<0.000000e+00> : vector<8x8xf32>
    %48 = tpu.matmul %46, %47, %cst_21 {dimension_numbers = #tpu.dot_dimension_numbers<[1], [1], [0], [0], [0, 0, 1, 0], [], []>} : vector<8x32xbf16>, vector<8x32xbf16>, vector<8x8xf32> -> vector<8x8xf32>
    %49 = vector.extract_strided_slice %38 {offsets = [0, 96], sizes = [8, 32], strides = [1, 1]} : vector<8x256xbf16> to vector<8x32xbf16>
    %50 = vector.extract_strided_slice %39 {offsets = [0, 96], sizes = [8, 32], strides = [1, 1]} : vector<8x256xbf16> to vector<8x32xbf16>
    %cst_22 = arith.constant dense<0.000000e+00> : vector<8x8xf32>
    %51 = tpu.matmul %49, %50, %cst_22 {dimension_numbers = #tpu.dot_dimension_numbers<[1], [1], [0], [0], [0, 0, 1, 0], [], []>} : vector<8x32xbf16>, vector<8x32xbf16>, vector<8x8xf32> -> vector<8x8xf32>
    %52 = vector.extract_strided_slice %38 {offsets = [0, 128], sizes = [8, 32], strides = [1, 1]} : vector<8x256xbf16> to vector<8x32xbf16>
    %53 = vector.extract_strided_slice %39 {offsets = [0, 128], sizes = [8, 32], strides = [1, 1]} : vector<8x256xbf16> to vector<8x32xbf16>
    %cst_23 = arith.constant dense<0.000000e+00> : vector<8x8xf32>
    %54 = tpu.matmul %52, %53, %cst_23 {dimension_numbers = #tpu.dot_dimension_numbers<[1], [1], [0], [0], [0, 0, 1, 0], [], []>} : vector<8x32xbf16>, vector<8x32xbf16>, vector<8x8xf32> -> vector<8x8xf32>
    %55 = vector.extract_strided_slice %38 {offsets = [0, 160], sizes = [8, 32], strides = [1, 1]} : vector<8x256xbf16> to vector<8x32xbf16>
    %56 = vector.extract_strided_slice %39 {offsets = [0, 160], sizes = [8, 32], strides = [1, 1]} : vector<8x256xbf16> to vector<8x32xbf16>
    %cst_24 = arith.constant dense<0.000000e+00> : vector<8x8xf32>
    %57 = tpu.matmul %55, %56, %cst_24 {dimension_numbers = #tpu.dot_dimension_numbers<[1], [1], [0], [0], [0, 0, 1, 0], [], []>} : vector<8x32xbf16>, vector<8x32xbf16>, vector<8x8xf32> -> vector<8x8xf32>
    %58 = vector.extract_strided_slice %38 {offsets = [0, 192], sizes = [8, 32], strides = [1, 1]} : vector<8x256xbf16> to vector<8x32xbf16>
    %59 = vector.extract_strided_slice %39 {offsets = [0, 192], sizes = [8, 32], strides = [1, 1]} : vector<8x256xbf16> to vector<8x32xbf16>
    %cst_25 = arith.constant dense<0.000000e+00> : vector<8x8xf32>
    %60 = tpu.matmul %58, %59, %cst_25 {dimension_numbers = #tpu.dot_dimension_numbers<[1], [1], [0], [0], [0, 0, 1, 0], [], []>} : vector<8x32xbf16>, vector<8x32xbf16>, vector<8x8xf32> -> vector<8x8xf32>
    %61 = vector.extract_strided_slice %38 {offsets = [0, 224], sizes = [8, 32], strides = [1, 1]} : vector<8x256xbf16> to vector<8x32xbf16>
    %62 = vector.extract_strided_slice %39 {offsets = [0, 224], sizes = [8, 32], strides = [1, 1]} : vector<8x256xbf16> to vector<8x32xbf16>
    %cst_26 = arith.constant dense<0.000000e+00> : vector<8x8xf32>
    %63 = tpu.matmul %61, %62, %cst_26 {dimension_numbers = #tpu.dot_dimension_numbers<[1], [1], [0], [0], [0, 0, 1, 0], [], []>} : vector<8x32xbf16>, vector<8x32xbf16>, vector<8x8xf32> -> vector<8x8xf32>
    %64 = tpu.concatenate %16, %19, %22, %25, %28, %31, %34, %37, %42, %45, %48, %51, %54, %57, %60, %63 in 0 : vector<8x8xf32>, vector<8x8xf32>, vector<8x8xf32>, vector<8x8xf32>, vector<8x8xf32>, vector<8x8xf32>, vector<8x8xf32>, vector<8x8xf32>, vector<8x8xf32>, vector<8x8xf32>, vector<8x8xf32>, vector<8x8xf32>, vector<8x8xf32>, vector<8x8xf32>, vector<8x8xf32>, vector<8x8xf32> -> vector<128x8xf32>
    %cst_27 = arith.constant 0.176776692 : f32
    %65 = vector.broadcast %cst_27 : f32 to vector<128x8xf32>
    %66 = arith.mulf %64, %65 : vector<128x8xf32>
    %cst_28 = arith.constant dense<0xFF800000> : vector<128xf32>
    %67 = vector.multi_reduction <maximumf>, %66, %cst_28 [1] : vector<128x8xf32> to vector<128xf32>
    %68 = vector.shape_cast %67 : vector<128xf32> to vector<128x1xf32>
    %69 = vector.broadcast %68 : vector<128x1xf32> to vector<128x8xf32>
    %70 = arith.subf %66, %69 : vector<128x8xf32>
    %71 = math.exp %70 : vector<128x8xf32>
    %cst_29 = arith.constant dense<0.000000e+00> : vector<128xf32>
    %72 = vector.multi_reduction <add>, %71, %cst_29 [1] : vector<128x8xf32> to vector<128xf32>
    %73 = vector.shape_cast %72 : vector<128xf32> to vector<128x1xf32>
    %74 = tpu.reciprocal %73 {approx = true} : vector<128x1xf32> -> vector<128x1xf32>
    %75 = vector.broadcast %74 : vector<128x1xf32> to vector<128x8xf32>
    %76 = arith.mulf %71, %75 : vector<128x8xf32>
    %77 = arith.truncf %76 : vector<128x8xf32> to vector<128x8xbf16>
    %78 = vector.extract_strided_slice %11 {offsets = [0, 0], sizes = [8, 256], strides = [1, 1]} : vector<16x256xbf16> to vector<8x256xbf16>
    %79 = vector.extract_strided_slice %77 {offsets = [0, 0], sizes = [8, 8], strides = [1, 1]} : vector<128x8xbf16> to vector<8x8xbf16>
    %80 = vector.extract_strided_slice %78 {offsets = [0, 0], sizes = [8, 32], strides = [1, 1]} : vector<8x256xbf16> to vector<8x32xbf16>
    %cst_30 = arith.constant dense<0.000000e+00> : vector<8x32xf32>
    %81 = tpu.matmul %79, %80, %cst_30 {dimension_numbers = #tpu.dot_dimension_numbers<[1], [0], [0], [1], [0, 0, 1, 1], [], []>} : vector<8x8xbf16>, vector<8x32xbf16>, vector<8x32xf32> -> vector<8x32xf32>
    %82 = vector.extract_strided_slice %77 {offsets = [8, 0], sizes = [8, 8], strides = [1, 1]} : vector<128x8xbf16> to vector<8x8xbf16>
    %83 = vector.extract_strided_slice %78 {offsets = [0, 32], sizes = [8, 32], strides = [1, 1]} : vector<8x256xbf16> to vector<8x32xbf16>
    %cst_31 = arith.constant dense<0.000000e+00> : vector<8x32xf32>
    %84 = tpu.matmul %82, %83, %cst_31 {dimension_numbers = #tpu.dot_dimension_numbers<[1], [0], [0], [1], [0, 0, 1, 1], [], []>} : vector<8x8xbf16>, vector<8x32xbf16>, vector<8x32xf32> -> vector<8x32xf32>
    %85 = vector.extract_strided_slice %77 {offsets = [16, 0], sizes = [8, 8], strides = [1, 1]} : vector<128x8xbf16> to vector<8x8xbf16>
    %86 = vector.extract_strided_slice %78 {offsets = [0, 64], sizes = [8, 32], strides = [1, 1]} : vector<8x256xbf16> to vector<8x32xbf16>
    %cst_32 = arith.constant dense<0.000000e+00> : vector<8x32xf32>
    %87 = tpu.matmul %85, %86, %cst_32 {dimension_numbers = #tpu.dot_dimension_numbers<[1], [0], [0], [1], [0, 0, 1, 1], [], []>} : vector<8x8xbf16>, vector<8x32xbf16>, vector<8x32xf32> -> vector<8x32xf32>
    %88 = vector.extract_strided_slice %77 {offsets = [24, 0], sizes = [8, 8], strides = [1, 1]} : vector<128x8xbf16> to vector<8x8xbf16>
    %89 = vector.extract_strided_slice %78 {offsets = [0, 96], sizes = [8, 32], strides = [1, 1]} : vector<8x256xbf16> to vector<8x32xbf16>
    %cst_33 = arith.constant dense<0.000000e+00> : vector<8x32xf32>
    %90 = tpu.matmul %88, %89, %cst_33 {dimension_numbers = #tpu.dot_dimension_numbers<[1], [0], [0], [1], [0, 0, 1, 1], [], []>} : vector<8x8xbf16>, vector<8x32xbf16>, vector<8x32xf32> -> vector<8x32xf32>
    %91 = vector.extract_strided_slice %77 {offsets = [32, 0], sizes = [8, 8], strides = [1, 1]} : vector<128x8xbf16> to vector<8x8xbf16>
    %92 = vector.extract_strided_slice %78 {offsets = [0, 128], sizes = [8, 32], strides = [1, 1]} : vector<8x256xbf16> to vector<8x32xbf16>
    %cst_34 = arith.constant dense<0.000000e+00> : vector<8x32xf32>
    %93 = tpu.matmul %91, %92, %cst_34 {dimension_numbers = #tpu.dot_dimension_numbers<[1], [0], [0], [1], [0, 0, 1, 1], [], []>} : vector<8x8xbf16>, vector<8x32xbf16>, vector<8x32xf32> -> vector<8x32xf32>
    %94 = vector.extract_strided_slice %77 {offsets = [40, 0], sizes = [8, 8], strides = [1, 1]} : vector<128x8xbf16> to vector<8x8xbf16>
    %95 = vector.extract_strided_slice %78 {offsets = [0, 160], sizes = [8, 32], strides = [1, 1]} : vector<8x256xbf16> to vector<8x32xbf16>
    %cst_35 = arith.constant dense<0.000000e+00> : vector<8x32xf32>
    %96 = tpu.matmul %94, %95, %cst_35 {dimension_numbers = #tpu.dot_dimension_numbers<[1], [0], [0], [1], [0, 0, 1, 1], [], []>} : vector<8x8xbf16>, vector<8x32xbf16>, vector<8x32xf32> -> vector<8x32xf32>
    %97 = vector.extract_strided_slice %77 {offsets = [48, 0], sizes = [8, 8], strides = [1, 1]} : vector<128x8xbf16> to vector<8x8xbf16>
    %98 = vector.extract_strided_slice %78 {offsets = [0, 192], sizes = [8, 32], strides = [1, 1]} : vector<8x256xbf16> to vector<8x32xbf16>
    %cst_36 = arith.constant dense<0.000000e+00> : vector<8x32xf32>
    %99 = tpu.matmul %97, %98, %cst_36 {dimension_numbers = #tpu.dot_dimension_numbers<[1], [0], [0], [1], [0, 0, 1, 1], [], []>} : vector<8x8xbf16>, vector<8x32xbf16>, vector<8x32xf32> -> vector<8x32xf32>
    %100 = vector.extract_strided_slice %77 {offsets = [56, 0], sizes = [8, 8], strides = [1, 1]} : vector<128x8xbf16> to vector<8x8xbf16>
    %101 = vector.extract_strided_slice %78 {offsets = [0, 224], sizes = [8, 32], strides = [1, 1]} : vector<8x256xbf16> to vector<8x32xbf16>
    %cst_37 = arith.constant dense<0.000000e+00> : vector<8x32xf32>
    %102 = tpu.matmul %100, %101, %cst_37 {dimension_numbers = #tpu.dot_dimension_numbers<[1], [0], [0], [1], [0, 0, 1, 1], [], []>} : vector<8x8xbf16>, vector<8x32xbf16>, vector<8x32xf32> -> vector<8x32xf32>
    %103 = tpu.concatenate %81, %84, %87, %90, %93, %96, %99, %102 in 1 : vector<8x32xf32>, vector<8x32xf32>, vector<8x32xf32>, vector<8x32xf32>, vector<8x32xf32>, vector<8x32xf32>, vector<8x32xf32>, vector<8x32xf32> -> vector<8x256xf32>
    %104 = vector.extract_strided_slice %11 {offsets = [8, 0], sizes = [8, 256], strides = [1, 1]} : vector<16x256xbf16> to vector<8x256xbf16>
    %105 = vector.extract_strided_slice %77 {offsets = [64, 0], sizes = [8, 8], strides = [1, 1]} : vector<128x8xbf16> to vector<8x8xbf16>
    %106 = vector.extract_strided_slice %104 {offsets = [0, 0], sizes = [8, 32], strides = [1, 1]} : vector<8x256xbf16> to vector<8x32xbf16>
    %cst_38 = arith.constant dense<0.000000e+00> : vector<8x32xf32>
    %107 = tpu.matmul %105, %106, %cst_38 {dimension_numbers = #tpu.dot_dimension_numbers<[1], [0], [0], [1], [0, 0, 1, 1], [], []>} : vector<8x8xbf16>, vector<8x32xbf16>, vector<8x32xf32> -> vector<8x32xf32>
    %108 = vector.extract_strided_slice %77 {offsets = [72, 0], sizes = [8, 8], strides = [1, 1]} : vector<128x8xbf16> to vector<8x8xbf16>
    %109 = vector.extract_strided_slice %104 {offsets = [0, 32], sizes = [8, 32], strides = [1, 1]} : vector<8x256xbf16> to vector<8x32xbf16>
    %cst_39 = arith.constant dense<0.000000e+00> : vector<8x32xf32>
    %110 = tpu.matmul %108, %109, %cst_39 {dimension_numbers = #tpu.dot_dimension_numbers<[1], [0], [0], [1], [0, 0, 1, 1], [], []>} : vector<8x8xbf16>, vector<8x32xbf16>, vector<8x32xf32> -> vector<8x32xf32>
    %111 = vector.extract_strided_slice %77 {offsets = [80, 0], sizes = [8, 8], strides = [1, 1]} : vector<128x8xbf16> to vector<8x8xbf16>
    %112 = vector.extract_strided_slice %104 {offsets = [0, 64], sizes = [8, 32], strides = [1, 1]} : vector<8x256xbf16> to vector<8x32xbf16>
    %cst_40 = arith.constant dense<0.000000e+00> : vector<8x32xf32>
    %113 = tpu.matmul %111, %112, %cst_40 {dimension_numbers = #tpu.dot_dimension_numbers<[1], [0], [0], [1], [0, 0, 1, 1], [], []>} : vector<8x8xbf16>, vector<8x32xbf16>, vector<8x32xf32> -> vector<8x32xf32>
    %114 = vector.extract_strided_slice %77 {offsets = [88, 0], sizes = [8, 8], strides = [1, 1]} : vector<128x8xbf16> to vector<8x8xbf16>
    %115 = vector.extract_strided_slice %104 {offsets = [0, 96], sizes = [8, 32], strides = [1, 1]} : vector<8x256xbf16> to vector<8x32xbf16>
    %cst_41 = arith.constant dense<0.000000e+00> : vector<8x32xf32>
    %116 = tpu.matmul %114, %115, %cst_41 {dimension_numbers = #tpu.dot_dimension_numbers<[1], [0], [0], [1], [0, 0, 1, 1], [], []>} : vector<8x8xbf16>, vector<8x32xbf16>, vector<8x32xf32> -> vector<8x32xf32>
    %117 = vector.extract_strided_slice %77 {offsets = [96, 0], sizes = [8, 8], strides = [1, 1]} : vector<128x8xbf16> to vector<8x8xbf16>
    %118 = vector.extract_strided_slice %104 {offsets = [0, 128], sizes = [8, 32], strides = [1, 1]} : vector<8x256xbf16> to vector<8x32xbf16>
    %cst_42 = arith.constant dense<0.000000e+00> : vector<8x32xf32>
    %119 = tpu.matmul %117, %118, %cst_42 {dimension_numbers = #tpu.dot_dimension_numbers<[1], [0], [0], [1], [0, 0, 1, 1], [], []>} : vector<8x8xbf16>, vector<8x32xbf16>, vector<8x32xf32> -> vector<8x32xf32>
    %120 = vector.extract_strided_slice %77 {offsets = [104, 0], sizes = [8, 8], strides = [1, 1]} : vector<128x8xbf16> to vector<8x8xbf16>
    %121 = vector.extract_strided_slice %104 {offsets = [0, 160], sizes = [8, 32], strides = [1, 1]} : vector<8x256xbf16> to vector<8x32xbf16>
    %cst_43 = arith.constant dense<0.000000e+00> : vector<8x32xf32>
    %122 = tpu.matmul %120, %121, %cst_43 {dimension_numbers = #tpu.dot_dimension_numbers<[1], [0], [0], [1], [0, 0, 1, 1], [], []>} : vector<8x8xbf16>, vector<8x32xbf16>, vector<8x32xf32> -> vector<8x32xf32>
    %123 = vector.extract_strided_slice %77 {offsets = [112, 0], sizes = [8, 8], strides = [1, 1]} : vector<128x8xbf16> to vector<8x8xbf16>
    %124 = vector.extract_strided_slice %104 {offsets = [0, 192], sizes = [8, 32], strides = [1, 1]} : vector<8x256xbf16> to vector<8x32xbf16>
    %cst_44 = arith.constant dense<0.000000e+00> : vector<8x32xf32>
    %125 = tpu.matmul %123, %124, %cst_44 {dimension_numbers = #tpu.dot_dimension_numbers<[1], [0], [0], [1], [0, 0, 1, 1], [], []>} : vector<8x8xbf16>, vector<8x32xbf16>, vector<8x32xf32> -> vector<8x32xf32>
    %126 = vector.extract_strided_slice %77 {offsets = [120, 0], sizes = [8, 8], strides = [1, 1]} : vector<128x8xbf16> to vector<8x8xbf16>
    %127 = vector.extract_strided_slice %104 {offsets = [0, 224], sizes = [8, 32], strides = [1, 1]} : vector<8x256xbf16> to vector<8x32xbf16>
    %cst_45 = arith.constant dense<0.000000e+00> : vector<8x32xf32>
    %128 = tpu.matmul %126, %127, %cst_45 {dimension_numbers = #tpu.dot_dimension_numbers<[1], [0], [0], [1], [0, 0, 1, 1], [], []>} : vector<8x8xbf16>, vector<8x32xbf16>, vector<8x32xf32> -> vector<8x32xf32>
    %129 = tpu.concatenate %107, %110, %113, %116, %119, %122, %125, %128 in 1 : vector<8x32xf32>, vector<8x32xf32>, vector<8x32xf32>, vector<8x32xf32>, vector<8x32xf32>, vector<8x32xf32>, vector<8x32xf32>, vector<8x32xf32> -> vector<8x256xf32>
    %130 = tpu.concatenate %103, %129 in 0 : vector<8x256xf32>, vector<8x256xf32> -> vector<16x256xf32>
    %131 = arith.truncf %130 : vector<16x256xf32> to vector<16x256xbf16>
    %c0_46 = arith.constant 0 : index
    %c0_47 = arith.constant 0 : index
    %132 = vector.load %arg6[%c0_46, %c0_47] : memref<256x32xbf16, #tpu.memory_space<vmem>>, vector<256x32xbf16>
    %cst_48 = arith.constant dense<0.000000e+00> : vector<16x32xf32>
    %133 = tpu.matmul %131, %132, %cst_48 {dimension_numbers = #tpu.dot_dimension_numbers<[1], [0], [0], [1], [0, 0, 1, 1], [], []>} : vector<16x256xbf16>, vector<256x32xbf16>, vector<16x32xf32> -> vector<16x32xf32>
    %c0_49 = arith.constant 0 : index
    %c0_50 = arith.constant 0 : index
    %134 = vector.load %arg7[%c0_49, %c0_50] : memref<1x32xf32, #tpu.memory_space<vmem>>, vector<1x32xf32>
    %135 = vector.broadcast %134 : vector<1x32xf32> to vector<16x32xf32>
    %136 = arith.addf %133, %135 : vector<16x32xf32>
    %137 = arith.addf %136, %0 : vector<16x32xf32>
    %c0_51 = arith.constant 0 : index
    %c0_52 = arith.constant 0 : index
    %138 = vector.load %arg8[%c0_51, %c0_52] : memref<1x32xf32, #tpu.memory_space<vmem>>, vector<1x32xf32>
    %c0_53 = arith.constant 0 : index
    %c0_54 = arith.constant 0 : index
    %139 = vector.load %arg9[%c0_53, %c0_54] : memref<1x32xf32, #tpu.memory_space<vmem>>, vector<1x32xf32>
    %cst_55 = arith.constant dense<0.000000e+00> : vector<16xf32>
    %140 = vector.multi_reduction <add>, %137, %cst_55 [1] : vector<16x32xf32> to vector<16xf32>
    %141 = vector.shape_cast %140 : vector<16xf32> to vector<16x1xf32>
    %cst_56 = arith.constant 3.200000e+01 : f32
    %142 = vector.broadcast %cst_56 : f32 to vector<16x1xf32>
    %143 = arith.divf %141, %142 : vector<16x1xf32>
    %144 = vector.broadcast %143 : vector<16x1xf32> to vector<16x32xf32>
    %145 = arith.subf %137, %144 : vector<16x32xf32>
    %146 = arith.mulf %145, %145 : vector<16x32xf32>
    %cst_57 = arith.constant dense<0.000000e+00> : vector<16xf32>
    %147 = vector.multi_reduction <add>, %146, %cst_57 [1] : vector<16x32xf32> to vector<16xf32>
    %148 = vector.shape_cast %147 : vector<16xf32> to vector<16x1xf32>
    %cst_58 = arith.constant 0.0322580636 : f32
    %149 = vector.broadcast %cst_58 : f32 to vector<16x1xf32>
    %150 = arith.mulf %148, %149 : vector<16x1xf32>
    %151 = math.sqrt %150 : vector<16x1xf32>
    %cst_59 = arith.constant 1.000000e-03 : f32
    %152 = vector.broadcast %cst_59 : f32 to vector<16x1xf32>
    %153 = arith.addf %151, %152 : vector<16x1xf32>
    %154 = vector.broadcast %153 : vector<16x1xf32> to vector<16x32xf32>
    %155 = arith.divf %145, %154 : vector<16x32xf32>
    %156 = vector.broadcast %138 : vector<1x32xf32> to vector<16x32xf32>
    %157 = arith.mulf %155, %156 : vector<16x32xf32>
    %158 = vector.broadcast %139 : vector<1x32xf32> to vector<16x32xf32>
    %159 = arith.addf %157, %158 : vector<16x32xf32>
    %160 = arith.truncf %159 : vector<16x32xf32> to vector<16x32xbf16>
    %161 = arith.truncf %1 : vector<16x32xf32> to vector<16x32xbf16>
    %c0_60 = arith.constant 0 : index
    %c0_61 = arith.constant 0 : index
    %162 = vector.load %arg10[%c0_60, %c0_61] : memref<32x256xbf16, #tpu.memory_space<vmem>>, vector<32x256xbf16>
    %cst_62 = arith.constant dense<0.000000e+00> : vector<16x256xf32>
    %163 = tpu.matmul %160, %162, %cst_62 {dimension_numbers = #tpu.dot_dimension_numbers<[1], [0], [0], [1], [0, 0, 1, 1], [], []>} : vector<16x32xbf16>, vector<32x256xbf16>, vector<16x256xf32> -> vector<16x256xf32>
    %164 = arith.truncf %163 : vector<16x256xf32> to vector<16x256xbf16>
    %c0_63 = arith.constant 0 : index
    %c0_64 = arith.constant 0 : index
    %165 = vector.load %arg11[%c0_63, %c0_64] : memref<32x256xbf16, #tpu.memory_space<vmem>>, vector<32x256xbf16>
    %cst_65 = arith.constant dense<0.000000e+00> : vector<16x256xf32>
    %166 = tpu.matmul %161, %165, %cst_65 {dimension_numbers = #tpu.dot_dimension_numbers<[1], [0], [0], [1], [0, 0, 1, 1], [], []>} : vector<16x32xbf16>, vector<32x256xbf16>, vector<16x256xf32> -> vector<16x256xf32>
    %167 = arith.truncf %166 : vector<16x256xf32> to vector<16x256xbf16>
    %c0_66 = arith.constant 0 : index
    %c0_67 = arith.constant 0 : index
    %168 = vector.load %arg12[%c0_66, %c0_67] : memref<32x256xbf16, #tpu.memory_space<vmem>>, vector<32x256xbf16>
    %cst_68 = arith.constant dense<0.000000e+00> : vector<16x256xf32>
    %169 = tpu.matmul %161, %168, %cst_68 {dimension_numbers = #tpu.dot_dimension_numbers<[1], [0], [0], [1], [0, 0, 1, 1], [], []>} : vector<16x32xbf16>, vector<32x256xbf16>, vector<16x256xf32> -> vector<16x256xf32>
    %170 = arith.truncf %169 : vector<16x256xf32> to vector<16x256xbf16>
    %171 = vector.extract_strided_slice %164 {offsets = [0, 0], sizes = [8, 256], strides = [1, 1]} : vector<16x256xbf16> to vector<8x256xbf16>
    %172 = vector.extract_strided_slice %167 {offsets = [0, 0], sizes = [8, 256], strides = [1, 1]} : vector<16x256xbf16> to vector<8x256xbf16>
    %173 = vector.extract_strided_slice %171 {offsets = [0, 0], sizes = [8, 32], strides = [1, 1]} : vector<8x256xbf16> to vector<8x32xbf16>
    %174 = vector.extract_strided_slice %172 {offsets = [0, 0], sizes = [8, 32], strides = [1, 1]} : vector<8x256xbf16> to vector<8x32xbf16>
    %cst_69 = arith.constant dense<0.000000e+00> : vector<8x8xf32>
    %175 = tpu.matmul %173, %174, %cst_69 {dimension_numbers = #tpu.dot_dimension_numbers<[1], [1], [0], [0], [0, 0, 1, 0], [], []>} : vector<8x32xbf16>, vector<8x32xbf16>, vector<8x8xf32> -> vector<8x8xf32>
    %176 = vector.extract_strided_slice %171 {offsets = [0, 32], sizes = [8, 32], strides = [1, 1]} : vector<8x256xbf16> to vector<8x32xbf16>
    %177 = vector.extract_strided_slice %172 {offsets = [0, 32], sizes = [8, 32], strides = [1, 1]} : vector<8x256xbf16> to vector<8x32xbf16>
    %cst_70 = arith.constant dense<0.000000e+00> : vector<8x8xf32>
    %178 = tpu.matmul %176, %177, %cst_70 {dimension_numbers = #tpu.dot_dimension_numbers<[1], [1], [0], [0], [0, 0, 1, 0], [], []>} : vector<8x32xbf16>, vector<8x32xbf16>, vector<8x8xf32> -> vector<8x8xf32>
    %179 = vector.extract_strided_slice %171 {offsets = [0, 64], sizes = [8, 32], strides = [1, 1]} : vector<8x256xbf16> to vector<8x32xbf16>
    %180 = vector.extract_strided_slice %172 {offsets = [0, 64], sizes = [8, 32], strides = [1, 1]} : vector<8x256xbf16> to vector<8x32xbf16>
    %cst_71 = arith.constant dense<0.000000e+00> : vector<8x8xf32>
    %181 = tpu.matmul %179, %180, %cst_71 {dimension_numbers = #tpu.dot_dimension_numbers<[1], [1], [0], [0], [0, 0, 1, 0], [], []>} : vector<8x32xbf16>, vector<8x32xbf16>, vector<8x8xf32> -> vector<8x8xf32>
    %182 = vector.extract_strided_slice %171 {offsets = [0, 96], sizes = [8, 32], strides = [1, 1]} : vector<8x256xbf16> to vector<8x32xbf16>
    %183 = vector.extract_strided_slice %172 {offsets = [0, 96], sizes = [8, 32], strides = [1, 1]} : vector<8x256xbf16> to vector<8x32xbf16>
    %cst_72 = arith.constant dense<0.000000e+00> : vector<8x8xf32>
    %184 = tpu.matmul %182, %183, %cst_72 {dimension_numbers = #tpu.dot_dimension_numbers<[1], [1], [0], [0], [0, 0, 1, 0], [], []>} : vector<8x32xbf16>, vector<8x32xbf16>, vector<8x8xf32> -> vector<8x8xf32>
    %185 = vector.extract_strided_slice %171 {offsets = [0, 128], sizes = [8, 32], strides = [1, 1]} : vector<8x256xbf16> to vector<8x32xbf16>
    %186 = vector.extract_strided_slice %172 {offsets = [0, 128], sizes = [8, 32], strides = [1, 1]} : vector<8x256xbf16> to vector<8x32xbf16>
    %cst_73 = arith.constant dense<0.000000e+00> : vector<8x8xf32>
    %187 = tpu.matmul %185, %186, %cst_73 {dimension_numbers = #tpu.dot_dimension_numbers<[1], [1], [0], [0], [0, 0, 1, 0], [], []>} : vector<8x32xbf16>, vector<8x32xbf16>, vector<8x8xf32> -> vector<8x8xf32>
    %188 = vector.extract_strided_slice %171 {offsets = [0, 160], sizes = [8, 32], strides = [1, 1]} : vector<8x256xbf16> to vector<8x32xbf16>
    %189 = vector.extract_strided_slice %172 {offsets = [0, 160], sizes = [8, 32], strides = [1, 1]} : vector<8x256xbf16> to vector<8x32xbf16>
    %cst_74 = arith.constant dense<0.000000e+00> : vector<8x8xf32>
    %190 = tpu.matmul %188, %189, %cst_74 {dimension_numbers = #tpu.dot_dimension_numbers<[1], [1], [0], [0], [0, 0, 1, 0], [], []>} : vector<8x32xbf16>, vector<8x32xbf16>, vector<8x8xf32> -> vector<8x8xf32>
    %191 = vector.extract_strided_slice %171 {offsets = [0, 192], sizes = [8, 32], strides = [1, 1]} : vector<8x256xbf16> to vector<8x32xbf16>
    %192 = vector.extract_strided_slice %172 {offsets = [0, 192], sizes = [8, 32], strides = [1, 1]} : vector<8x256xbf16> to vector<8x32xbf16>
    %cst_75 = arith.constant dense<0.000000e+00> : vector<8x8xf32>
    %193 = tpu.matmul %191, %192, %cst_75 {dimension_numbers = #tpu.dot_dimension_numbers<[1], [1], [0], [0], [0, 0, 1, 0], [], []>} : vector<8x32xbf16>, vector<8x32xbf16>, vector<8x8xf32> -> vector<8x8xf32>
    %194 = vector.extract_strided_slice %171 {offsets = [0, 224], sizes = [8, 32], strides = [1, 1]} : vector<8x256xbf16> to vector<8x32xbf16>
    %195 = vector.extract_strided_slice %172 {offsets = [0, 224], sizes = [8, 32], strides = [1, 1]} : vector<8x256xbf16> to vector<8x32xbf16>
    %cst_76 = arith.constant dense<0.000000e+00> : vector<8x8xf32>
    %196 = tpu.matmul %194, %195, %cst_76 {dimension_numbers = #tpu.dot_dimension_numbers<[1], [1], [0], [0], [0, 0, 1, 0], [], []>} : vector<8x32xbf16>, vector<8x32xbf16>, vector<8x8xf32> -> vector<8x8xf32>
    %197 = vector.extract_strided_slice %164 {offsets = [8, 0], sizes = [8, 256], strides = [1, 1]} : vector<16x256xbf16> to vector<8x256xbf16>
    %198 = vector.extract_strided_slice %167 {offsets = [8, 0], sizes = [8, 256], strides = [1, 1]} : vector<16x256xbf16> to vector<8x256xbf16>
    %199 = vector.extract_strided_slice %197 {offsets = [0, 0], sizes = [8, 32], strides = [1, 1]} : vector<8x256xbf16> to vector<8x32xbf16>
    %200 = vector.extract_strided_slice %198 {offsets = [0, 0], sizes = [8, 32], strides = [1, 1]} : vector<8x256xbf16> to vector<8x32xbf16>
    %cst_77 = arith.constant dense<0.000000e+00> : vector<8x8xf32>
    %201 = tpu.matmul %199, %200, %cst_77 {dimension_numbers = #tpu.dot_dimension_numbers<[1], [1], [0], [0], [0, 0, 1, 0], [], []>} : vector<8x32xbf16>, vector<8x32xbf16>, vector<8x8xf32> -> vector<8x8xf32>
    %202 = vector.extract_strided_slice %197 {offsets = [0, 32], sizes = [8, 32], strides = [1, 1]} : vector<8x256xbf16> to vector<8x32xbf16>
    %203 = vector.extract_strided_slice %198 {offsets = [0, 32], sizes = [8, 32], strides = [1, 1]} : vector<8x256xbf16> to vector<8x32xbf16>
    %cst_78 = arith.constant dense<0.000000e+00> : vector<8x8xf32>
    %204 = tpu.matmul %202, %203, %cst_78 {dimension_numbers = #tpu.dot_dimension_numbers<[1], [1], [0], [0], [0, 0, 1, 0], [], []>} : vector<8x32xbf16>, vector<8x32xbf16>, vector<8x8xf32> -> vector<8x8xf32>
    %205 = vector.extract_strided_slice %197 {offsets = [0, 64], sizes = [8, 32], strides = [1, 1]} : vector<8x256xbf16> to vector<8x32xbf16>
    %206 = vector.extract_strided_slice %198 {offsets = [0, 64], sizes = [8, 32], strides = [1, 1]} : vector<8x256xbf16> to vector<8x32xbf16>
    %cst_79 = arith.constant dense<0.000000e+00> : vector<8x8xf32>
    %207 = tpu.matmul %205, %206, %cst_79 {dimension_numbers = #tpu.dot_dimension_numbers<[1], [1], [0], [0], [0, 0, 1, 0], [], []>} : vector<8x32xbf16>, vector<8x32xbf16>, vector<8x8xf32> -> vector<8x8xf32>
    %208 = vector.extract_strided_slice %197 {offsets = [0, 96], sizes = [8, 32], strides = [1, 1]} : vector<8x256xbf16> to vector<8x32xbf16>
    %209 = vector.extract_strided_slice %198 {offsets = [0, 96], sizes = [8, 32], strides = [1, 1]} : vector<8x256xbf16> to vector<8x32xbf16>
    %cst_80 = arith.constant dense<0.000000e+00> : vector<8x8xf32>
    %210 = tpu.matmul %208, %209, %cst_80 {dimension_numbers = #tpu.dot_dimension_numbers<[1], [1], [0], [0], [0, 0, 1, 0], [], []>} : vector<8x32xbf16>, vector<8x32xbf16>, vector<8x8xf32> -> vector<8x8xf32>
    %211 = vector.extract_strided_slice %197 {offsets = [0, 128], sizes = [8, 32], strides = [1, 1]} : vector<8x256xbf16> to vector<8x32xbf16>
    %212 = vector.extract_strided_slice %198 {offsets = [0, 128], sizes = [8, 32], strides = [1, 1]} : vector<8x256xbf16> to vector<8x32xbf16>
    %cst_81 = arith.constant dense<0.000000e+00> : vector<8x8xf32>
    %213 = tpu.matmul %211, %212, %cst_81 {dimension_numbers = #tpu.dot_dimension_numbers<[1], [1], [0], [0], [0, 0, 1, 0], [], []>} : vector<8x32xbf16>, vector<8x32xbf16>, vector<8x8xf32> -> vector<8x8xf32>
    %214 = vector.extract_strided_slice %197 {offsets = [0, 160], sizes = [8, 32], strides = [1, 1]} : vector<8x256xbf16> to vector<8x32xbf16>
    %215 = vector.extract_strided_slice %198 {offsets = [0, 160], sizes = [8, 32], strides = [1, 1]} : vector<8x256xbf16> to vector<8x32xbf16>
    %cst_82 = arith.constant dense<0.000000e+00> : vector<8x8xf32>
    %216 = tpu.matmul %214, %215, %cst_82 {dimension_numbers = #tpu.dot_dimension_numbers<[1], [1], [0], [0], [0, 0, 1, 0], [], []>} : vector<8x32xbf16>, vector<8x32xbf16>, vector<8x8xf32> -> vector<8x8xf32>
    %217 = vector.extract_strided_slice %197 {offsets = [0, 192], sizes = [8, 32], strides = [1, 1]} : vector<8x256xbf16> to vector<8x32xbf16>
    %218 = vector.extract_strided_slice %198 {offsets = [0, 192], sizes = [8, 32], strides = [1, 1]} : vector<8x256xbf16> to vector<8x32xbf16>
    %cst_83 = arith.constant dense<0.000000e+00> : vector<8x8xf32>
    %219 = tpu.matmul %217, %218, %cst_83 {dimension_numbers = #tpu.dot_dimension_numbers<[1], [1], [0], [0], [0, 0, 1, 0], [], []>} : vector<8x32xbf16>, vector<8x32xbf16>, vector<8x8xf32> -> vector<8x8xf32>
    %220 = vector.extract_strided_slice %197 {offsets = [0, 224], sizes = [8, 32], strides = [1, 1]} : vector<8x256xbf16> to vector<8x32xbf16>
    %221 = vector.extract_strided_slice %198 {offsets = [0, 224], sizes = [8, 32], strides = [1, 1]} : vector<8x256xbf16> to vector<8x32xbf16>
    %cst_84 = arith.constant dense<0.000000e+00> : vector<8x8xf32>
    %222 = tpu.matmul %220, %221, %cst_84 {dimension_numbers = #tpu.dot_dimension_numbers<[1], [1], [0], [0], [0, 0, 1, 0], [], []>} : vector<8x32xbf16>, vector<8x32xbf16>, vector<8x8xf32> -> vector<8x8xf32>
    %223 = tpu.concatenate %175, %178, %181, %184, %187, %190, %193, %196, %201, %204, %207, %210, %213, %216, %219, %222 in 0 : vector<8x8xf32>, vector<8x8xf32>, vector<8x8xf32>, vector<8x8xf32>, vector<8x8xf32>, vector<8x8xf32>, vector<8x8xf32>, vector<8x8xf32>, vector<8x8xf32>, vector<8x8xf32>, vector<8x8xf32>, vector<8x8xf32>, vector<8x8xf32>, vector<8x8xf32>, vector<8x8xf32>, vector<8x8xf32> -> vector<128x8xf32>
    %cst_85 = arith.constant 0.176776692 : f32
    %224 = vector.broadcast %cst_85 : f32 to vector<128x8xf32>
    %225 = arith.mulf %223, %224 : vector<128x8xf32>
    %cst_86 = arith.constant dense<0xFF800000> : vector<128xf32>
    %226 = vector.multi_reduction <maximumf>, %225, %cst_86 [1] : vector<128x8xf32> to vector<128xf32>
    %227 = vector.shape_cast %226 : vector<128xf32> to vector<128x1xf32>
    %228 = vector.broadcast %227 : vector<128x1xf32> to vector<128x8xf32>
    %229 = arith.subf %225, %228 : vector<128x8xf32>
    %230 = math.exp %229 : vector<128x8xf32>
    %cst_87 = arith.constant dense<0.000000e+00> : vector<128xf32>
    %231 = vector.multi_reduction <add>, %230, %cst_87 [1] : vector<128x8xf32> to vector<128xf32>
    %232 = vector.shape_cast %231 : vector<128xf32> to vector<128x1xf32>
    %233 = tpu.reciprocal %232 {approx = true} : vector<128x1xf32> -> vector<128x1xf32>
    %234 = vector.broadcast %233 : vector<128x1xf32> to vector<128x8xf32>
    %235 = arith.mulf %230, %234 : vector<128x8xf32>
    %236 = arith.truncf %235 : vector<128x8xf32> to vector<128x8xbf16>
    %237 = vector.extract_strided_slice %170 {offsets = [0, 0], sizes = [8, 256], strides = [1, 1]} : vector<16x256xbf16> to vector<8x256xbf16>
    %238 = vector.extract_strided_slice %236 {offsets = [0, 0], sizes = [8, 8], strides = [1, 1]} : vector<128x8xbf16> to vector<8x8xbf16>
    %239 = vector.extract_strided_slice %237 {offsets = [0, 0], sizes = [8, 32], strides = [1, 1]} : vector<8x256xbf16> to vector<8x32xbf16>
    %cst_88 = arith.constant dense<0.000000e+00> : vector<8x32xf32>
    %240 = tpu.matmul %238, %239, %cst_88 {dimension_numbers = #tpu.dot_dimension_numbers<[1], [0], [0], [1], [0, 0, 1, 1], [], []>} : vector<8x8xbf16>, vector<8x32xbf16>, vector<8x32xf32> -> vector<8x32xf32>
    %241 = vector.extract_strided_slice %236 {offsets = [8, 0], sizes = [8, 8], strides = [1, 1]} : vector<128x8xbf16> to vector<8x8xbf16>
    %242 = vector.extract_strided_slice %237 {offsets = [0, 32], sizes = [8, 32], strides = [1, 1]} : vector<8x256xbf16> to vector<8x32xbf16>
    %cst_89 = arith.constant dense<0.000000e+00> : vector<8x32xf32>
    %243 = tpu.matmul %241, %242, %cst_89 {dimension_numbers = #tpu.dot_dimension_numbers<[1], [0], [0], [1], [0, 0, 1, 1], [], []>} : vector<8x8xbf16>, vector<8x32xbf16>, vector<8x32xf32> -> vector<8x32xf32>
    %244 = vector.extract_strided_slice %236 {offsets = [16, 0], sizes = [8, 8], strides = [1, 1]} : vector<128x8xbf16> to vector<8x8xbf16>
    %245 = vector.extract_strided_slice %237 {offsets = [0, 64], sizes = [8, 32], strides = [1, 1]} : vector<8x256xbf16> to vector<8x32xbf16>
    %cst_90 = arith.constant dense<0.000000e+00> : vector<8x32xf32>
    %246 = tpu.matmul %244, %245, %cst_90 {dimension_numbers = #tpu.dot_dimension_numbers<[1], [0], [0], [1], [0, 0, 1, 1], [], []>} : vector<8x8xbf16>, vector<8x32xbf16>, vector<8x32xf32> -> vector<8x32xf32>
    %247 = vector.extract_strided_slice %236 {offsets = [24, 0], sizes = [8, 8], strides = [1, 1]} : vector<128x8xbf16> to vector<8x8xbf16>
    %248 = vector.extract_strided_slice %237 {offsets = [0, 96], sizes = [8, 32], strides = [1, 1]} : vector<8x256xbf16> to vector<8x32xbf16>
    %cst_91 = arith.constant dense<0.000000e+00> : vector<8x32xf32>
    %249 = tpu.matmul %247, %248, %cst_91 {dimension_numbers = #tpu.dot_dimension_numbers<[1], [0], [0], [1], [0, 0, 1, 1], [], []>} : vector<8x8xbf16>, vector<8x32xbf16>, vector<8x32xf32> -> vector<8x32xf32>
    %250 = vector.extract_strided_slice %236 {offsets = [32, 0], sizes = [8, 8], strides = [1, 1]} : vector<128x8xbf16> to vector<8x8xbf16>
    %251 = vector.extract_strided_slice %237 {offsets = [0, 128], sizes = [8, 32], strides = [1, 1]} : vector<8x256xbf16> to vector<8x32xbf16>
    %cst_92 = arith.constant dense<0.000000e+00> : vector<8x32xf32>
    %252 = tpu.matmul %250, %251, %cst_92 {dimension_numbers = #tpu.dot_dimension_numbers<[1], [0], [0], [1], [0, 0, 1, 1], [], []>} : vector<8x8xbf16>, vector<8x32xbf16>, vector<8x32xf32> -> vector<8x32xf32>
    %253 = vector.extract_strided_slice %236 {offsets = [40, 0], sizes = [8, 8], strides = [1, 1]} : vector<128x8xbf16> to vector<8x8xbf16>
    %254 = vector.extract_strided_slice %237 {offsets = [0, 160], sizes = [8, 32], strides = [1, 1]} : vector<8x256xbf16> to vector<8x32xbf16>
    %cst_93 = arith.constant dense<0.000000e+00> : vector<8x32xf32>
    %255 = tpu.matmul %253, %254, %cst_93 {dimension_numbers = #tpu.dot_dimension_numbers<[1], [0], [0], [1], [0, 0, 1, 1], [], []>} : vector<8x8xbf16>, vector<8x32xbf16>, vector<8x32xf32> -> vector<8x32xf32>
    %256 = vector.extract_strided_slice %236 {offsets = [48, 0], sizes = [8, 8], strides = [1, 1]} : vector<128x8xbf16> to vector<8x8xbf16>
    %257 = vector.extract_strided_slice %237 {offsets = [0, 192], sizes = [8, 32], strides = [1, 1]} : vector<8x256xbf16> to vector<8x32xbf16>
    %cst_94 = arith.constant dense<0.000000e+00> : vector<8x32xf32>
    %258 = tpu.matmul %256, %257, %cst_94 {dimension_numbers = #tpu.dot_dimension_numbers<[1], [0], [0], [1], [0, 0, 1, 1], [], []>} : vector<8x8xbf16>, vector<8x32xbf16>, vector<8x32xf32> -> vector<8x32xf32>
    %259 = vector.extract_strided_slice %236 {offsets = [56, 0], sizes = [8, 8], strides = [1, 1]} : vector<128x8xbf16> to vector<8x8xbf16>
    %260 = vector.extract_strided_slice %237 {offsets = [0, 224], sizes = [8, 32], strides = [1, 1]} : vector<8x256xbf16> to vector<8x32xbf16>
    %cst_95 = arith.constant dense<0.000000e+00> : vector<8x32xf32>
    %261 = tpu.matmul %259, %260, %cst_95 {dimension_numbers = #tpu.dot_dimension_numbers<[1], [0], [0], [1], [0, 0, 1, 1], [], []>} : vector<8x8xbf16>, vector<8x32xbf16>, vector<8x32xf32> -> vector<8x32xf32>
    %262 = tpu.concatenate %240, %243, %246, %249, %252, %255, %258, %261 in 1 : vector<8x32xf32>, vector<8x32xf32>, vector<8x32xf32>, vector<8x32xf32>, vector<8x32xf32>, vector<8x32xf32>, vector<8x32xf32>, vector<8x32xf32> -> vector<8x256xf32>
    %263 = vector.extract_strided_slice %170 {offsets = [8, 0], sizes = [8, 256], strides = [1, 1]} : vector<16x256xbf16> to vector<8x256xbf16>
    %264 = vector.extract_strided_slice %236 {offsets = [64, 0], sizes = [8, 8], strides = [1, 1]} : vector<128x8xbf16> to vector<8x8xbf16>
    %265 = vector.extract_strided_slice %263 {offsets = [0, 0], sizes = [8, 32], strides = [1, 1]} : vector<8x256xbf16> to vector<8x32xbf16>
    %cst_96 = arith.constant dense<0.000000e+00> : vector<8x32xf32>
    %266 = tpu.matmul %264, %265, %cst_96 {dimension_numbers = #tpu.dot_dimension_numbers<[1], [0], [0], [1], [0, 0, 1, 1], [], []>} : vector<8x8xbf16>, vector<8x32xbf16>, vector<8x32xf32> -> vector<8x32xf32>
    %267 = vector.extract_strided_slice %236 {offsets = [72, 0], sizes = [8, 8], strides = [1, 1]} : vector<128x8xbf16> to vector<8x8xbf16>
    %268 = vector.extract_strided_slice %263 {offsets = [0, 32], sizes = [8, 32], strides = [1, 1]} : vector<8x256xbf16> to vector<8x32xbf16>
    %cst_97 = arith.constant dense<0.000000e+00> : vector<8x32xf32>
    %269 = tpu.matmul %267, %268, %cst_97 {dimension_numbers = #tpu.dot_dimension_numbers<[1], [0], [0], [1], [0, 0, 1, 1], [], []>} : vector<8x8xbf16>, vector<8x32xbf16>, vector<8x32xf32> -> vector<8x32xf32>
    %270 = vector.extract_strided_slice %236 {offsets = [80, 0], sizes = [8, 8], strides = [1, 1]} : vector<128x8xbf16> to vector<8x8xbf16>
    %271 = vector.extract_strided_slice %263 {offsets = [0, 64], sizes = [8, 32], strides = [1, 1]} : vector<8x256xbf16> to vector<8x32xbf16>
    %cst_98 = arith.constant dense<0.000000e+00> : vector<8x32xf32>
    %272 = tpu.matmul %270, %271, %cst_98 {dimension_numbers = #tpu.dot_dimension_numbers<[1], [0], [0], [1], [0, 0, 1, 1], [], []>} : vector<8x8xbf16>, vector<8x32xbf16>, vector<8x32xf32> -> vector<8x32xf32>
    %273 = vector.extract_strided_slice %236 {offsets = [88, 0], sizes = [8, 8], strides = [1, 1]} : vector<128x8xbf16> to vector<8x8xbf16>
    %274 = vector.extract_strided_slice %263 {offsets = [0, 96], sizes = [8, 32], strides = [1, 1]} : vector<8x256xbf16> to vector<8x32xbf16>
    %cst_99 = arith.constant dense<0.000000e+00> : vector<8x32xf32>
    %275 = tpu.matmul %273, %274, %cst_99 {dimension_numbers = #tpu.dot_dimension_numbers<[1], [0], [0], [1], [0, 0, 1, 1], [], []>} : vector<8x8xbf16>, vector<8x32xbf16>, vector<8x32xf32> -> vector<8x32xf32>
    %276 = vector.extract_strided_slice %236 {offsets = [96, 0], sizes = [8, 8], strides = [1, 1]} : vector<128x8xbf16> to vector<8x8xbf16>
    %277 = vector.extract_strided_slice %263 {offsets = [0, 128], sizes = [8, 32], strides = [1, 1]} : vector<8x256xbf16> to vector<8x32xbf16>
    %cst_100 = arith.constant dense<0.000000e+00> : vector<8x32xf32>
    %278 = tpu.matmul %276, %277, %cst_100 {dimension_numbers = #tpu.dot_dimension_numbers<[1], [0], [0], [1], [0, 0, 1, 1], [], []>} : vector<8x8xbf16>, vector<8x32xbf16>, vector<8x32xf32> -> vector<8x32xf32>
    %279 = vector.extract_strided_slice %236 {offsets = [104, 0], sizes = [8, 8], strides = [1, 1]} : vector<128x8xbf16> to vector<8x8xbf16>
    %280 = vector.extract_strided_slice %263 {offsets = [0, 160], sizes = [8, 32], strides = [1, 1]} : vector<8x256xbf16> to vector<8x32xbf16>
    %cst_101 = arith.constant dense<0.000000e+00> : vector<8x32xf32>
    %281 = tpu.matmul %279, %280, %cst_101 {dimension_numbers = #tpu.dot_dimension_numbers<[1], [0], [0], [1], [0, 0, 1, 1], [], []>} : vector<8x8xbf16>, vector<8x32xbf16>, vector<8x32xf32> -> vector<8x32xf32>
    %282 = vector.extract_strided_slice %236 {offsets = [112, 0], sizes = [8, 8], strides = [1, 1]} : vector<128x8xbf16> to vector<8x8xbf16>
    %283 = vector.extract_strided_slice %263 {offsets = [0, 192], sizes = [8, 32], strides = [1, 1]} : vector<8x256xbf16> to vector<8x32xbf16>
    %cst_102 = arith.constant dense<0.000000e+00> : vector<8x32xf32>
    %284 = tpu.matmul %282, %283, %cst_102 {dimension_numbers = #tpu.dot_dimension_numbers<[1], [0], [0], [1], [0, 0, 1, 1], [], []>} : vector<8x8xbf16>, vector<8x32xbf16>, vector<8x32xf32> -> vector<8x32xf32>
    %285 = vector.extract_strided_slice %236 {offsets = [120, 0], sizes = [8, 8], strides = [1, 1]} : vector<128x8xbf16> to vector<8x8xbf16>
    %286 = vector.extract_strided_slice %263 {offsets = [0, 224], sizes = [8, 32], strides = [1, 1]} : vector<8x256xbf16> to vector<8x32xbf16>
    %cst_103 = arith.constant dense<0.000000e+00> : vector<8x32xf32>
    %287 = tpu.matmul %285, %286, %cst_103 {dimension_numbers = #tpu.dot_dimension_numbers<[1], [0], [0], [1], [0, 0, 1, 1], [], []>} : vector<8x8xbf16>, vector<8x32xbf16>, vector<8x32xf32> -> vector<8x32xf32>
    %288 = tpu.concatenate %266, %269, %272, %275, %278, %281, %284, %287 in 1 : vector<8x32xf32>, vector<8x32xf32>, vector<8x32xf32>, vector<8x32xf32>, vector<8x32xf32>, vector<8x32xf32>, vector<8x32xf32>, vector<8x32xf32> -> vector<8x256xf32>
    %289 = tpu.concatenate %262, %288 in 0 : vector<8x256xf32>, vector<8x256xf32> -> vector<16x256xf32>
    %290 = arith.truncf %289 : vector<16x256xf32> to vector<16x256xbf16>
    %c0_104 = arith.constant 0 : index
    %c0_105 = arith.constant 0 : index
    %291 = vector.load %arg13[%c0_104, %c0_105] : memref<256x32xbf16, #tpu.memory_space<vmem>>, vector<256x32xbf16>
    %cst_106 = arith.constant dense<0.000000e+00> : vector<16x32xf32>
    %292 = tpu.matmul %290, %291, %cst_106 {dimension_numbers = #tpu.dot_dimension_numbers<[1], [0], [0], [1], [0, 0, 1, 1], [], []>} : vector<16x256xbf16>, vector<256x32xbf16>, vector<16x32xf32> -> vector<16x32xf32>
    %c0_107 = arith.constant 0 : index
    %c0_108 = arith.constant 0 : index
    %293 = vector.load %arg14[%c0_107, %c0_108] : memref<1x32xf32, #tpu.memory_space<vmem>>, vector<1x32xf32>
    %294 = vector.broadcast %293 : vector<1x32xf32> to vector<16x32xf32>
    %295 = arith.addf %292, %294 : vector<16x32xf32>
    %296 = arith.addf %295, %159 : vector<16x32xf32>
    %c0_109 = arith.constant 0 : index
    %c0_110 = arith.constant 0 : index
    %297 = vector.load %arg15[%c0_109, %c0_110] : memref<1x32xf32, #tpu.memory_space<vmem>>, vector<1x32xf32>
    %c0_111 = arith.constant 0 : index
    %c0_112 = arith.constant 0 : index
    %298 = vector.load %arg16[%c0_111, %c0_112] : memref<1x32xf32, #tpu.memory_space<vmem>>, vector<1x32xf32>
    %cst_113 = arith.constant dense<0.000000e+00> : vector<16xf32>
    %299 = vector.multi_reduction <add>, %296, %cst_113 [1] : vector<16x32xf32> to vector<16xf32>
    %300 = vector.shape_cast %299 : vector<16xf32> to vector<16x1xf32>
    %cst_114 = arith.constant 3.200000e+01 : f32
    %301 = vector.broadcast %cst_114 : f32 to vector<16x1xf32>
    %302 = arith.divf %300, %301 : vector<16x1xf32>
    %303 = vector.broadcast %302 : vector<16x1xf32> to vector<16x32xf32>
    %304 = arith.subf %296, %303 : vector<16x32xf32>
    %305 = arith.mulf %304, %304 : vector<16x32xf32>
    %cst_115 = arith.constant dense<0.000000e+00> : vector<16xf32>
    %306 = vector.multi_reduction <add>, %305, %cst_115 [1] : vector<16x32xf32> to vector<16xf32>
    %307 = vector.shape_cast %306 : vector<16xf32> to vector<16x1xf32>
    %cst_116 = arith.constant 0.0322580636 : f32
    %308 = vector.broadcast %cst_116 : f32 to vector<16x1xf32>
    %309 = arith.mulf %307, %308 : vector<16x1xf32>
    %310 = math.sqrt %309 : vector<16x1xf32>
    %cst_117 = arith.constant 1.000000e-03 : f32
    %311 = vector.broadcast %cst_117 : f32 to vector<16x1xf32>
    %312 = arith.addf %310, %311 : vector<16x1xf32>
    %313 = vector.broadcast %312 : vector<16x1xf32> to vector<16x32xf32>
    %314 = arith.divf %304, %313 : vector<16x32xf32>
    %315 = vector.broadcast %297 : vector<1x32xf32> to vector<16x32xf32>
    %316 = arith.mulf %314, %315 : vector<16x32xf32>
    %317 = vector.broadcast %298 : vector<1x32xf32> to vector<16x32xf32>
    %318 = arith.addf %316, %317 : vector<16x32xf32>
    %319 = arith.truncf %318 : vector<16x32xf32> to vector<16x32xbf16>
    %c0_118 = arith.constant 0 : index
    %c0_119 = arith.constant 0 : index
    %320 = vector.load %arg17[%c0_118, %c0_119] : memref<32x128xbf16, #tpu.memory_space<vmem>>, vector<32x128xbf16>
    %cst_120 = arith.constant dense<0.000000e+00> : vector<16x128xf32>
    %321 = tpu.matmul %319, %320, %cst_120 {dimension_numbers = #tpu.dot_dimension_numbers<[1], [0], [0], [1], [0, 0, 1, 1], [], []>} : vector<16x32xbf16>, vector<32x128xbf16>, vector<16x128xf32> -> vector<16x128xf32>
    %c0_121 = arith.constant 0 : index
    %c0_122 = arith.constant 0 : index
    %322 = vector.load %arg18[%c0_121, %c0_122] : memref<1x128xf32, #tpu.memory_space<vmem>>, vector<1x128xf32>
    %323 = vector.broadcast %322 : vector<1x128xf32> to vector<16x128xf32>
    %324 = arith.addf %321, %323 : vector<16x128xf32>
    %cst_123 = arith.constant 0.000000e+00 : f32
    %325 = vector.broadcast %cst_123 : f32 to vector<16x128xf32>
    %326 = arith.maximumf %324, %325 : vector<16x128xf32>
    %327 = arith.truncf %326 : vector<16x128xf32> to vector<16x128xbf16>
    %c0_124 = arith.constant 0 : index
    %c0_125 = arith.constant 0 : index
    %328 = vector.load %arg19[%c0_124, %c0_125] : memref<128x32xbf16, #tpu.memory_space<vmem>>, vector<128x32xbf16>
    %cst_126 = arith.constant dense<0.000000e+00> : vector<16x32xf32>
    %329 = tpu.matmul %327, %328, %cst_126 {dimension_numbers = #tpu.dot_dimension_numbers<[1], [0], [0], [1], [0, 0, 1, 1], [], []>} : vector<16x128xbf16>, vector<128x32xbf16>, vector<16x32xf32> -> vector<16x32xf32>
    %c0_127 = arith.constant 0 : index
    %c0_128 = arith.constant 0 : index
    %330 = vector.load %arg20[%c0_127, %c0_128] : memref<1x32xf32, #tpu.memory_space<vmem>>, vector<1x32xf32>
    %331 = vector.broadcast %330 : vector<1x32xf32> to vector<16x32xf32>
    %332 = arith.addf %329, %331 : vector<16x32xf32>
    %333 = arith.addf %332, %318 : vector<16x32xf32>
    %c0_129 = arith.constant 0 : index
    %c0_130 = arith.constant 0 : index
    %334 = vector.load %arg21[%c0_129, %c0_130] : memref<1x32xf32, #tpu.memory_space<vmem>>, vector<1x32xf32>
    %c0_131 = arith.constant 0 : index
    %c0_132 = arith.constant 0 : index
    %335 = vector.load %arg22[%c0_131, %c0_132] : memref<1x32xf32, #tpu.memory_space<vmem>>, vector<1x32xf32>
    %cst_133 = arith.constant dense<0.000000e+00> : vector<16xf32>
    %336 = vector.multi_reduction <add>, %333, %cst_133 [1] : vector<16x32xf32> to vector<16xf32>
    %337 = vector.shape_cast %336 : vector<16xf32> to vector<16x1xf32>
    %cst_134 = arith.constant 3.200000e+01 : f32
    %338 = vector.broadcast %cst_134 : f32 to vector<16x1xf32>
    %339 = arith.divf %337, %338 : vector<16x1xf32>
    %340 = vector.broadcast %339 : vector<16x1xf32> to vector<16x32xf32>
    %341 = arith.subf %333, %340 : vector<16x32xf32>
    %342 = arith.mulf %341, %341 : vector<16x32xf32>
    %cst_135 = arith.constant dense<0.000000e+00> : vector<16xf32>
    %343 = vector.multi_reduction <add>, %342, %cst_135 [1] : vector<16x32xf32> to vector<16xf32>
    %344 = vector.shape_cast %343 : vector<16xf32> to vector<16x1xf32>
    %cst_136 = arith.constant 0.0322580636 : f32
    %345 = vector.broadcast %cst_136 : f32 to vector<16x1xf32>
    %346 = arith.mulf %344, %345 : vector<16x1xf32>
    %347 = math.sqrt %346 : vector<16x1xf32>
    %cst_137 = arith.constant 1.000000e-03 : f32
    %348 = vector.broadcast %cst_137 : f32 to vector<16x1xf32>
    %349 = arith.addf %347, %348 : vector<16x1xf32>
    %350 = vector.broadcast %349 : vector<16x1xf32> to vector<16x32xf32>
    %351 = arith.divf %341, %350 : vector<16x32xf32>
    %352 = vector.broadcast %334 : vector<1x32xf32> to vector<16x32xf32>
    %353 = arith.mulf %351, %352 : vector<16x32xf32>
    %354 = vector.broadcast %335 : vector<1x32xf32> to vector<16x32xf32>
    %355 = arith.addf %353, %354 : vector<16x32xf32>
    %c0_138 = arith.constant 0 : index
    %c0_139 = arith.constant 0 : index
    %356 = vector.load %arg23[%c0_138, %c0_139] : memref<16x32xf32, #tpu.memory_space<vmem>>, vector<16x32xf32>
    tpu.vector_store %arg23[%c0_138, %c0_139], %355 {strides = array<i32>} : memref<16x32xf32, #tpu.memory_space<vmem>>, vector<16x32xf32>,
    return
  }
  func.func @transform_0(%arg0: i32) -> (i32, i32) {
    %c0_i32 = arith.constant 0 : i32
    %c0_i32_0 = arith.constant 0 : i32
    return %arg0, %c0_i32 : i32, i32
  }
  func.func @transform_1(%arg0: i32) -> (i32, i32) {
    %c0_i32 = arith.constant 0 : i32
    %c0_i32_0 = arith.constant 0 : i32
    return %arg0, %c0_i32 : i32, i32
  }
  func.func @transform_2(%arg0: i32) -> (i32, i32) {
    %c0_i32 = arith.constant 0 : i32
    %c0_i32_0 = arith.constant 0 : i32
    %c0_i32_1 = arith.constant 0 : i32
    return %c0_i32, %c0_i32_0 : i32, i32
  }
  func.func @transform_3(%arg0: i32) -> (i32, i32) {
    %c0_i32 = arith.constant 0 : i32
    %c0_i32_0 = arith.constant 0 : i32
    %c0_i32_1 = arith.constant 0 : i32
    return %c0_i32, %c0_i32_0 : i32, i32
  }
  func.func @transform_4(%arg0: i32) -> (i32, i32) {
    %c0_i32 = arith.constant 0 : i32
    %c0_i32_0 = arith.constant 0 : i32
    %c0_i32_1 = arith.constant 0 : i32
    return %c0_i32, %c0_i32_0 : i32, i32
  }
  func.func @transform_5(%arg0: i32) -> (i32, i32) {
    %c0_i32 = arith.constant 0 : i32
    %c0_i32_0 = arith.constant 0 : i32
    %c0_i32_1 = arith.constant 0 : i32
    return %c0_i32, %c0_i32_0 : i32, i32
  }
  func.func @transform_6(%arg0: i32) -> (i32, i32) {
    %c0_i32 = arith.constant 0 : i32
    %c0_i32_0 = arith.constant 0 : i32
    %c0_i32_1 = arith.constant 0 : i32
    return %c0_i32, %c0_i32_0 : i32, i32
  }
  func.func @transform_7(%arg0: i32) -> (i32, i32) {
    %c0_i32 = arith.constant 0 : i32
    %c0_i32_0 = arith.constant 0 : i32
    %c0_i32_1 = arith.constant 0 : i32
    return %c0_i32, %c0_i32_0 : i32, i32
  }
  func.func @transform_8(%arg0: i32) -> (i32, i32) {
    %c0_i32 = arith.constant 0 : i32
    %c0_i32_0 = arith.constant 0 : i32
    %c0_i32_1 = arith.constant 0 : i32
    return %c0_i32, %c0_i32_0 : i32, i32
  }
  func.func @transform_9(%arg0: i32) -> (i32, i32) {
    %c0_i32 = arith.constant 0 : i32
    %c0_i32_0 = arith.constant 0 : i32
    %c0_i32_1 = arith.constant 0 : i32
    return %c0_i32, %c0_i32_0 : i32, i32
  }
  func.func @transform_10(%arg0: i32) -> (i32, i32) {
    %c0_i32 = arith.constant 0 : i32
    %c0_i32_0 = arith.constant 0 : i32
    %c0_i32_1 = arith.constant 0 : i32
    return %c0_i32, %c0_i32_0 : i32, i32
  }
  func.func @transform_11(%arg0: i32) -> (i32, i32) {
    %c0_i32 = arith.constant 0 : i32
    %c0_i32_0 = arith.constant 0 : i32
    %c0_i32_1 = arith.constant 0 : i32
    return %c0_i32, %c0_i32_0 : i32, i32
  }
  func.func @transform_12(%arg0: i32) -> (i32, i32) {
    %c0_i32 = arith.constant 0 : i32
    %c0_i32_0 = arith.constant 0 : i32
    %c0_i32_1 = arith.constant 0 : i32
    return %c0_i32, %c0_i32_0 : i32, i32
  }
  func.func @transform_13(%arg0: i32) -> (i32, i32) {
    %c0_i32 = arith.constant 0 : i32
    %c0_i32_0 = arith.constant 0 : i32
    %c0_i32_1 = arith.constant 0 : i32
    return %c0_i32, %c0_i32_0 : i32, i32
  }
  func.func @transform_14(%arg0: i32) -> (i32, i32) {
    %c0_i32 = arith.constant 0 : i32
    %c0_i32_0 = arith.constant 0 : i32
    %c0_i32_1 = arith.constant 0 : i32
    return %c0_i32, %c0_i32_0 : i32, i32
  }
  func.func @transform_15(%arg0: i32) -> (i32, i32) {
    %c0_i32 = arith.constant 0 : i32
    %c0_i32_0 = arith.constant 0 : i32
    %c0_i32_1 = arith.constant 0 : i32
    return %c0_i32, %c0_i32_0 : i32, i32
  }
  func.func @transform_16(%arg0: i32) -> (i32, i32) {
    %c0_i32 = arith.constant 0 : i32
    %c0_i32_0 = arith.constant 0 : i32
    %c0_i32_1 = arith.constant 0 : i32
    return %c0_i32, %c0_i32_0 : i32, i32
  }
  func.func @transform_17(%arg0: i32) -> (i32, i32) {
    %c0_i32 = arith.constant 0 : i32
    %c0_i32_0 = arith.constant 0 : i32
    %c0_i32_1 = arith.constant 0 : i32
    return %c0_i32, %c0_i32_0 : i32, i32
  }
  func.func @transform_18(%arg0: i32) -> (i32, i32) {
    %c0_i32 = arith.constant 0 : i32
    %c0_i32_0 = arith.constant 0 : i32
    %c0_i32_1 = arith.constant 0 : i32
    return %c0_i32, %c0_i32_0 : i32, i32
  }
  func.func @transform_19(%arg0: i32) -> (i32, i32) {
    %c0_i32 = arith.constant 0 : i32
    %c0_i32_0 = arith.constant 0 : i32
    %c0_i32_1 = arith.constant 0 : i32
    return %c0_i32, %c0_i32_0 : i32, i32
  }
  func.func @transform_20(%arg0: i32) -> (i32, i32) {
    %c0_i32 = arith.constant 0 : i32
    %c0_i32_0 = arith.constant 0 : i32
    %c0_i32_1 = arith.constant 0 : i32
    return %c0_i32, %c0_i32_0 : i32, i32
  }
  func.func @transform_21(%arg0: i32) -> (i32, i32) {
    %c0_i32 = arith.constant 0 : i32
    %c0_i32_0 = arith.constant 0 : i32
    %c0_i32_1 = arith.constant 0 : i32
    return %c0_i32, %c0_i32_0 : i32, i32
  }
  func.func @transform_22(%arg0: i32) -> (i32, i32) {
    %c0_i32 = arith.constant 0 : i32
    %c0_i32_0 = arith.constant 0 : i32
    return %arg0, %c0_i32 : i32, i32
  }
}

</mosaic_0001>

<llo_original>
// kernel: transformer_layer.1
$region0: #{transformer_layer.1}
  #allocation0 [shape = 'u32[]', space=smem, size = 0x4, offset = 0x4, fixed_abs, tag = 'smem constant byte address 0x4 - core index']
  #allocation1 [shape = 'u32[144,128]{1,0:T(1,128)}', space=vmem, size = 0x12000, scoped, tag = 'internal scratch']
  %s0 = inlined_call_operand.vmem [shape: f32[16,32], index: 0, kind: input, shape index: {}]
  %s1 = inlined_call_operand.vmem [shape: f32[16,32], index: 1, kind: input, shape index: {}]
  %s2 = inlined_call_operand.vmem [shape: bf16[32,256], index: 2, kind: input, shape index: {}]
  %s3 = inlined_call_operand.vmem [shape: bf16[32,256], index: 3, kind: input, shape index: {}]
  %s4 = inlined_call_operand.vmem [shape: bf16[32,256], index: 4, kind: input, shape index: {}]
  %s5 = inlined_call_operand.vmem [shape: bf16[256,32], index: 5, kind: input, shape index: {}]
  %s6 = inlined_call_operand.vmem [shape: f32[1,32], index: 6, kind: input, shape index: {}]
  %s7 = inlined_call_operand.vmem [shape: f32[1,32], index: 7, kind: input, shape index: {}]
  %s8 = inlined_call_operand.vmem [shape: f32[1,32], index: 8, kind: input, shape index: {}]
  %s9 = inlined_call_operand.vmem [shape: bf16[32,256], index: 9, kind: input, shape index: {}]
  %s10 = inlined_call_operand.vmem [shape: bf16[32,256], index: 10, kind: input, shape index: {}]
  %s11 = inlined_call_operand.vmem [shape: bf16[32,256], index: 11, kind: input, shape index: {}]
  %s12 = inlined_call_operand.vmem [shape: bf16[256,32], index: 12, kind: input, shape index: {}]
  %s13 = inlined_call_operand.vmem [shape: f32[1,32], index: 13, kind: input, shape index: {}]
  %s14 = inlined_call_operand.vmem [shape: f32[1,32], index: 14, kind: input, shape index: {}]
  %s15 = inlined_call_operand.vmem [shape: f32[1,32], index: 15, kind: input, shape index: {}]
  %s16 = inlined_call_operand.vmem [shape: bf16[32,128], index: 16, kind: input, shape index: {}]
  %s17 = inlined_call_operand.vmem [shape: f32[1,128], index: 17, kind: input, shape index: {}]
  %s18 = inlined_call_operand.vmem [shape: bf16[128,32], index: 18, kind: input, shape index: {}]
  %s19 = inlined_call_operand.vmem [shape: f32[1,32], index: 19, kind: input, shape index: {}]
  %s20 = inlined_call_operand.vmem [shape: f32[1,32], index: 20, kind: input, shape index: {}]
  %s21 = inlined_call_operand.vmem [shape: f32[1,32], index: 21, kind: input, shape index: {}]
  %s22 = inlined_call_operand.hbm [shape: f32[16,32], index: 22, kind: output, shape index: {}]
  %s23 = sld [smem:[#allocation0]]
  $region98: #{transformer_layer.1} parent=0
    _
  %s25 = ssub.s32 1, %s23
  %s26 = scalar_select 0, %s25, %s23
  $region1: #{transformer_layer.1} parent=0
    #allocation2 [shape = 'u8[8192]{0}', space=vmem, size = 0x2000, scoped, tag = 'output window, operand 0, single buffered']
    #allocation3 [shape = 's32[1]{0}', space=sflag, size = 0x4, scoped, tag = 'scoped memory for transformer_layer.1']
    %27 = vsyncpa [#allocation3], 0
    // Predicated region
    $region2: #{transformer_layer.1} parent=1 // pred_check
      _
    $region3: #{transformer_layer.1} parent=1 // pred_check_branch
      %29 = sbr.rel (0) target = $region5
    $region4: #{transformer_layer.1} parent=1 // pred_region
      _
    $region5: #{transformer_layer.1} parent=1 // pred_fallthru
      _
    // Predicated region
    $region6: #{transformer_layer.1} parent=1 // pred_check
      _
    $region7: #{transformer_layer.1} parent=1 // pred_check_branch
      %31 = sbr.rel (0) target = $region9
    $region8: #{transformer_layer.1} parent=1 // pred_region
      _
    $region9: #{transformer_layer.1} parent=1 // pred_fallthru
      _
    // Predicated region
    $region10: #{transformer_layer.1} parent=1 // pred_check
      _
    $region11: #{transformer_layer.1} parent=1 // pred_check_branch
      %33 = sbr.rel (0) target = $region13
    $region12: #{transformer_layer.1} parent=1 // pred_region
      _
    $region13: #{transformer_layer.1} parent=1 // pred_fallthru
      _
    // Predicated region
    $region14: #{transformer_layer.1} parent=1 // pred_check
      _
    $region15: #{transformer_layer.1} parent=1 // pred_check_branch
      %35 = sbr.rel (0) target = $region17
    $region16: #{transformer_layer.1} parent=1 // pred_region
      _
    $region17: #{transformer_layer.1} parent=1 // pred_fallthru
      _
    // Predicated region
    $region18: #{transformer_layer.1} parent=1 // pred_check
      _
    $region19: #{transformer_layer.1} parent=1 // pred_check_branch
      %37 = sbr.rel (0) target = $region21
    $region20: #{transformer_layer.1} parent=1 // pred_region
      _
    $region21: #{transformer_layer.1} parent=1 // pred_fallthru
      _
    // Predicated region
    $region22: #{transformer_layer.1} parent=1 // pred_check
      _
    $region23: #{transformer_layer.1} parent=1 // pred_check_branch
      %39 = sbr.rel (0) target = $region25
    $region24: #{transformer_layer.1} parent=1 // pred_region
      _
    $region25: #{transformer_layer.1} parent=1 // pred_fallthru
      _
    // Predicated region
    $region26: #{transformer_layer.1} parent=1 // pred_check
      _
    $region27: #{transformer_layer.1} parent=1 // pred_check_branch
      %41 = sbr.rel (0) target = $region29
    $region28: #{transformer_layer.1} parent=1 // pred_region
      _
    $region29: #{transformer_layer.1} parent=1 // pred_fallthru
      _
    // Predicated region
    $region30: #{transformer_layer.1} parent=1 // pred_check
      _
    $region31: #{transformer_layer.1} parent=1 // pred_check_branch
      %43 = sbr.rel (0) target = $region33
    $region32: #{transformer_layer.1} parent=1 // pred_region
      _
    $region33: #{transformer_layer.1} parent=1 // pred_fallthru
      _
    // Predicated region
    $region34: #{transformer_layer.1} parent=1 // pred_check
      _
    $region35: #{transformer_layer.1} parent=1 // pred_check_branch
      %45 = sbr.rel (0) target = $region37
    $region36: #{transformer_layer.1} parent=1 // pred_region
      _
    $region37: #{transformer_layer.1} parent=1 // pred_fallthru
      _
    // Predicated region
    $region38: #{transformer_layer.1} parent=1 // pred_check
      _
    $region39: #{transformer_layer.1} parent=1 // pred_check_branch
      %47 = sbr.rel (0) target = $region41
    $region40: #{transformer_layer.1} parent=1 // pred_region
      _
    $region41: #{transformer_layer.1} parent=1 // pred_fallthru
      _
    // Predicated region
    $region42: #{transformer_layer.1} parent=1 // pred_check
      _
    $region43: #{transformer_layer.1} parent=1 // pred_check_branch
      %49 = sbr.rel (0) target = $region45
    $region44: #{transformer_layer.1} parent=1 // pred_region
      _
    $region45: #{transformer_layer.1} parent=1 // pred_fallthru
      _
    // Predicated region
    $region46: #{transformer_layer.1} parent=1 // pred_check
      _
    $region47: #{transformer_layer.1} parent=1 // pred_check_branch
      %51 = sbr.rel (0) target = $region49
    $region48: #{transformer_layer.1} parent=1 // pred_region
      _
    $region49: #{transformer_layer.1} parent=1 // pred_fallthru
      _
    // Predicated region
    $region50: #{transformer_layer.1} parent=1 // pred_check
      _
    $region51: #{transformer_layer.1} parent=1 // pred_check_branch
      %53 = sbr.rel (0) target = $region53
    $region52: #{transformer_layer.1} parent=1 // pred_region
      _
    $region53: #{transformer_layer.1} parent=1 // pred_fallthru
      _
    // Predicated region
    $region54: #{transformer_layer.1} parent=1 // pred_check
      _
    $region55: #{transformer_layer.1} parent=1 // pred_check_branch
      %55 = sbr.rel (0) target = $region57
    $region56: #{transformer_layer.1} parent=1 // pred_region
      _
    $region57: #{transformer_layer.1} parent=1 // pred_fallthru
      _
    // Predicated region
    $region58: #{transformer_layer.1} parent=1 // pred_check
      _
    $region59: #{transformer_layer.1} parent=1 // pred_check_branch
      %57 = sbr.rel (0) target = $region61
    $region60: #{transformer_layer.1} parent=1 // pred_region
      _
    $region61: #{transformer_layer.1} parent=1 // pred_fallthru
      _
    // Predicated region
    $region62: #{transformer_layer.1} parent=1 // pred_check
      _
    $region63: #{transformer_layer.1} parent=1 // pred_check_branch
      %59 = sbr.rel (0) target = $region65
    $region64: #{transformer_layer.1} parent=1 // pred_region
      _
    $region65: #{transformer_layer.1} parent=1 // pred_fallthru
      _
    // Predicated region
    $region66: #{transformer_layer.1} parent=1 // pred_check
      _
    $region67: #{transformer_layer.1} parent=1 // pred_check_branch
      %61 = sbr.rel (0) target = $region69
    $region68: #{transformer_layer.1} parent=1 // pred_region
      _
    $region69: #{transformer_layer.1} parent=1 // pred_fallthru
      _
    // Predicated region
    $region70: #{transformer_layer.1} parent=1 // pred_check
      _
    $region71: #{transformer_layer.1} parent=1 // pred_check_branch
      %63 = sbr.rel (0) target = $region73
    $region72: #{transformer_layer.1} parent=1 // pred_region
      _
    $region73: #{transformer_layer.1} parent=1 // pred_fallthru
      _
    // Predicated region
    $region74: #{transformer_layer.1} parent=1 // pred_check
      _
    $region75: #{transformer_layer.1} parent=1 // pred_check_branch
      %65 = sbr.rel (0) target = $region77
    $region76: #{transformer_layer.1} parent=1 // pred_region
      _
    $region77: #{transformer_layer.1} parent=1 // pred_fallthru
      _
    // Predicated region
    $region78: #{transformer_layer.1} parent=1 // pred_check
      _
    $region79: #{transformer_layer.1} parent=1 // pred_check_branch
      %67 = sbr.rel (0) target = $region81
    $region80: #{transformer_layer.1} parent=1 // pred_region
      _
    $region81: #{transformer_layer.1} parent=1 // pred_fallthru
      _
    // Predicated region
    $region82: #{transformer_layer.1} parent=1 // pred_check
      _
    $region83: #{transformer_layer.1} parent=1 // pred_check_branch
      %69 = sbr.rel (0) target = $region85
    $region84: #{transformer_layer.1} parent=1 // pred_region
      _
    $region85: #{transformer_layer.1} parent=1 // pred_fallthru
      _
    // Predicated region
    $region86: #{transformer_layer.1} parent=1 // pred_check
      _
    $region87: #{transformer_layer.1} parent=1 // pred_check_branch
      %71 = sbr.rel (0) target = $region89
    $region88: #{transformer_layer.1} parent=1 // pred_region
      _
    $region89: #{transformer_layer.1} parent=1 // pred_fallthru
      _
    %v73 = vld [vmem:[%s0] sm:$0xff]
    %v74 = vld [vmem:[%s0 + $0x8] sm:$0xff]
    %v75 = vld [vmem:[%s1] sm:$0xff]
    %v76 = vld [vmem:[%s1 + $0x8] sm:$0xff]
    %v77 = vpack.c.bf16 %v74, %v73
    %v78 = vld [vmem:[%s2] sm:$0xff]
    %v79 = vld [vmem:[%s2 + $0x8] sm:$0xff]
    %v80 = vld [vmem:[%s2 + $0x10] sm:$0xff]
    %v81 = vld [vmem:[%s2 + $0x18] sm:$0xff]
    %v86 = vunpack.c.l.b16 %v78
    %v87 = vunpack.c.h.b16 %v78
    %v88 = vunpack.c.l.b16 %v79
    %v89 = vunpack.c.h.b16 %v79
    %v90 = vunpack.c.l.b16 %v80
    %v91 = vunpack.c.h.b16 %v80
    %v92 = vunpack.c.l.b16 %v81
    %v93 = vunpack.c.h.b16 %v81
    %v94 = vpack.c.b16 %v88, %v86
    %v95 = vpack.c.b16 %v89, %v87
    %v96 = vpack.c.b16 %v92, %v90
    %v97 = vpack.c.b16 %v93, %v91
    %vm102 = vcmask 261120
    %v104 = vsel %vm102, %v77, 0
    %106 = vmatprep.subr.bf16.mxu0 %v95
    %107 = vmatpush1.bf16.msra.mxu0 %v94
    %108 = vmatprep.subr.bf16.mxu0 %v97
    %109 = vmatpush1.bf16.msra.mxu0 %v96
    %110 = vmatprep.subr.bf16.mxu0 0
    %111 = vmatpush1.bf16.msra.mxu0 0
    %112 = vmatprep.subr.bf16.mxu0 0
    %113 = vmatpush1.bf16.msra.mxu0 0
    %114 = vmatprep.subr.bf16.mxu0 0
    %115 = vmatpush1.bf16.msra.mxu0 0
    %116 = vmatprep.subr.bf16.mxu0 0
    %117 = vmatpush1.bf16.msra.mxu0 0
    %118 = vmatprep.subr.bf16.mxu0 0
    %119 = vmatpush1.bf16.msra.mxu0 0
    %120 = vmatprep.subr.bf16.mxu0 0
    %121 = vmatpush1.bf16.msra.mxu0 0
    %122 = vmatprep.subr.bf16.mxu0 0
    %123 = vmatpush1.bf16.msra.mxu0 0
    %124 = vmatprep.subr.bf16.mxu0 0
    %125 = vmatpush1.bf16.msra.mxu0 0
    %126 = vmatprep.subr.bf16.mxu0 0
    %127 = vmatpush1.bf16.msra.mxu0 0
    %128 = vmatprep.subr.bf16.mxu0 0
    %129 = vmatpush1.bf16.msra.mxu0 0
    %130 = vmatprep.subr.bf16.mxu0 0
    %131 = vmatpush1.bf16.msra.mxu0 0
    %132 = vmatprep.subr.bf16.mxu0 0
    %133 = vmatpush1.bf16.msra.mxu0 0
    %134 = vmatprep.subr.bf16.mxu0 0
    %135 = vmatpush1.bf16.msra.mxu0 0
    %136 = vmatprep.subr.bf16.mxu0 0
    %137 = vmatpush1.bf16.msra.mxu0 0
    %138 = vmatprep.mubr.bf16.mxu0 0
    %139 = vmatmul.mubr.bf16.gmra.mrb[0].mxu0 %v104
    %v140 = vpop.f32.mrb[0].mxu0
    %v141 = vadd.f32 0.0, %v140
    %v142 = vpop.f32.mrb[0].mxu0
    %v143 = vadd.f32 0.0, %v142
    %v144 = vpop.f32.mrb[0].mxu0
    %v145 = vadd.f32 0.0, %v144
    %v146 = vpop.f32.mrb[0].mxu0
    %v147 = vadd.f32 0.0, %v146
    %148 = vdwg.mxu0
    %v149 = vpack.c.bf16 %v145, %v141
    %v150 = vpack.c.bf16 %v147, %v143
    %v151 = vld [vmem:[%s3] sm:$0xff]
    %v152 = vld [vmem:[%s3 + $0x8] sm:$0xff]
    %v153 = vld [vmem:[%s3 + $0x10] sm:$0xff]
    %v154 = vld [vmem:[%s3 + $0x18] sm:$0xff]
    %v159 = vunpack.c.l.b16 %v151
    %v160 = vunpack.c.h.b16 %v151
    %v161 = vunpack.c.l.b16 %v152
    %v162 = vunpack.c.h.b16 %v152
    %v163 = vunpack.c.l.b16 %v153
    %v164 = vunpack.c.h.b16 %v153
    %v165 = vunpack.c.l.b16 %v154
    %v166 = vunpack.c.h.b16 %v154
    %v167 = vpack.c.b16 %v161, %v159
    %v168 = vpack.c.b16 %v162, %v160
    %v169 = vpack.c.b16 %v165, %v163
    %v170 = vpack.c.b16 %v166, %v164
    %175 = vmatprep.subr.bf16.mxu0 %v168
    %176 = vmatpush1.bf16.msra.mxu0 %v167
    %177 = vmatprep.subr.bf16.mxu0 %v170
    %178 = vmatpush1.bf16.msra.mxu0 %v169
    %179 = vmatprep.subr.bf16.mxu0 0
    %180 = vmatpush1.bf16.msra.mxu0 0
    %181 = vmatprep.subr.bf16.mxu0 0
    %182 = vmatpush1.bf16.msra.mxu0 0
    %183 = vmatprep.subr.bf16.mxu0 0
    %184 = vmatpush1.bf16.msra.mxu0 0
    %185 = vmatprep.subr.bf16.mxu0 0
    %186 = vmatpush1.bf16.msra.mxu0 0
    %187 = vmatprep.subr.bf16.mxu0 0
    %188 = vmatpush1.bf16.msra.mxu0 0
    %189 = vmatprep.subr.bf16.mxu0 0
    %190 = vmatpush1.bf16.msra.mxu0 0
    %191 = vmatprep.subr.bf16.mxu0 0
    %192 = vmatpush1.bf16.msra.mxu0 0
    %193 = vmatprep.subr.bf16.mxu0 0
    %194 = vmatpush1.bf16.msra.mxu0 0
    %195 = vmatprep.subr.bf16.mxu0 0
    %196 = vmatpush1.bf16.msra.mxu0 0
    %197 = vmatprep.subr.bf16.mxu0 0
    %198 = vmatpush1.bf16.msra.mxu0 0
    %199 = vmatprep.subr.bf16.mxu0 0
    %200 = vmatpush1.bf16.msra.mxu0 0
    %201 = vmatprep.subr.bf16.mxu0 0
    %202 = vmatpush1.bf16.msra.mxu0 0
    %203 = vmatprep.subr.bf16.mxu0 0
    %204 = vmatpush1.bf16.msra.mxu0 0
    %205 = vmatprep.subr.bf16.mxu0 0
    %206 = vmatpush1.bf16.msra.mxu0 0
    %207 = vmatprep.mubr.bf16.mxu0 0
    %208 = vmatmul.mubr.bf16.gmra.mrb[0].mxu0 %v104
    %v209 = vpop.f32.mrb[0].mxu0
    %v210 = vadd.f32 0.0, %v209
    %v211 = vpop.f32.mrb[0].mxu0
    %v212 = vadd.f32 0.0, %v211
    %v213 = vpop.f32.mrb[0].mxu0
    %v214 = vadd.f32 0.0, %v213
    %v215 = vpop.f32.mrb[0].mxu0
    %v216 = vadd.f32 0.0, %v215
    %217 = vdwg.mxu0
    %v218 = vpack.c.bf16 %v214, %v210
    %v219 = vpack.c.bf16 %v216, %v212
    %v220 = vld [vmem:[%s4] sm:$0xff]
    %v221 = vld [vmem:[%s4 + $0x8] sm:$0xff]
    %v222 = vld [vmem:[%s4 + $0x10] sm:$0xff]
    %v223 = vld [vmem:[%s4 + $0x18] sm:$0xff]
    %v228 = vunpack.c.l.b16 %v220
    %v229 = vunpack.c.h.b16 %v220
    %v230 = vunpack.c.l.b16 %v221
    %v231 = vunpack.c.h.b16 %v221
    %v232 = vunpack.c.l.b16 %v222
    %v233 = vunpack.c.h.b16 %v222
    %v234 = vunpack.c.l.b16 %v223
    %v235 = vunpack.c.h.b16 %v223
    %v236 = vpack.c.b16 %v230, %v228
    %v237 = vpack.c.b16 %v231, %v229
    %v238 = vpack.c.b16 %v234, %v232
    %v239 = vpack.c.b16 %v235, %v233
    %244 = vmatprep.subr.bf16.mxu0 %v237
    %245 = vmatpush1.bf16.msra.mxu0 %v236
    %246 = vmatprep.subr.bf16.mxu0 %v239
    %247 = vmatpush1.bf16.msra.mxu0 %v238
    %248 = vmatprep.subr.bf16.mxu0 0
    %249 = vmatpush1.bf16.msra.mxu0 0
    %250 = vmatprep.subr.bf16.mxu0 0
    %251 = vmatpush1.bf16.msra.mxu0 0
    %252 = vmatprep.subr.bf16.mxu0 0
    %253 = vmatpush1.bf16.msra.mxu0 0
    %254 = vmatprep.subr.bf16.mxu0 0
    %255 = vmatpush1.bf16.msra.mxu0 0
    %256 = vmatprep.subr.bf16.mxu0 0
    %257 = vmatpush1.bf16.msra.mxu0 0
    %258 = vmatprep.subr.bf16.mxu0 0
    %259 = vmatpush1.bf16.msra.mxu0 0
    %260 = vmatprep.subr.bf16.mxu0 0
    %261 = vmatpush1.bf16.msra.mxu0 0
    %262 = vmatprep.subr.bf16.mxu0 0
    %263 = vmatpush1.bf16.msra.mxu0 0
    %264 = vmatprep.subr.bf16.mxu0 0
    %265 = vmatpush1.bf16.msra.mxu0 0
    %266 = vmatprep.subr.bf16.mxu0 0
    %267 = vmatpush1.bf16.msra.mxu0 0
    %268 = vmatprep.subr.bf16.mxu0 0
    %269 = vmatpush1.bf16.msra.mxu0 0
    %270 = vmatprep.subr.bf16.mxu0 0
    %271 = vmatpush1.bf16.msra.mxu0 0
    %272 = vmatprep.subr.bf16.mxu0 0
    %273 = vmatpush1.bf16.msra.mxu0 0
    %274 = vmatprep.subr.bf16.mxu0 0
    %275 = vmatpush1.bf16.msra.mxu0 0
    %276 = vmatprep.mubr.bf16.mxu0 0
    %277 = vmatmul.mubr.bf16.gmra.mrb[0].mxu0 %v104
    %v278 = vpop.f32.mrb[0].mxu0
    %v279 = vadd.f32 0.0, %v278
    %v280 = vpop.f32.mrb[0].mxu0
    %v281 = vadd.f32 0.0, %v280
    %v282 = vpop.f32.mrb[0].mxu0
    %v283 = vadd.f32 0.0, %v282
    %v284 = vpop.f32.mrb[0].mxu0
    %v285 = vadd.f32 0.0, %v284
    %286 = vdwg.mxu0
    %v287 = vpack.c.bf16 %v283, %v279
    %v288 = vpack.c.bf16 %v285, %v281
    %v290 = vsel %vm102, %v149, 0
    %v293 = vsel %vm102, %v218, 0
    %295 = vmatprep.subr.bf16.mxu0 0
    %296 = vmatpush1.bf16.xpose.msra.mxu0 %v293
    %297 = vmatprep.subr.bf16.mxu0 0
    %298 = vmatpush1.bf16.xpose.msra.mxu0 0
    %299 = vmatprep.subr.bf16.mxu0 0
    %300 = vmatpush1.bf16.xpose.msra.mxu0 0
    %301 = vmatprep.subr.bf16.mxu0 0
    %302 = vmatpush1.bf16.xpose.msra.mxu0 0
    %303 = vmatprep.subr.bf16.mxu0 0
    %304 = vmatpush1.bf16.xpose.msra.mxu0 0
    %305 = vmatprep.subr.bf16.mxu0 0
    %306 = vmatpush1.bf16.xpose.msra.mxu0 0
    %307 = vmatprep.subr.bf16.mxu0 0
    %308 = vmatpush1.bf16.xpose.msra.mxu0 0
    %309 = vmatprep.subr.bf16.mxu0 0
    %310 = vmatpush1.bf16.xpose.msra.mxu0 0
    %311 = vmatprep.subr.bf16.mxu0 0
    %312 = vmatpush1.bf16.xpose.msra.mxu0 0
    %313 = vmatprep.subr.bf16.mxu0 0
    %314 = vmatpush1.bf16.xpose.msra.mxu0 0
    %315 = vmatprep.subr.bf16.mxu0 0
    %316 = vmatpush1.bf16.xpose.msra.mxu0 0
    %317 = vmatprep.subr.bf16.mxu0 0
    %318 = vmatpush1.bf16.xpose.msra.mxu0 0
    %319 = vmatprep.subr.bf16.mxu0 0
    %320 = vmatpush1.bf16.xpose.msra.mxu0 0
    %321 = vmatprep.subr.bf16.mxu0 0
    %322 = vmatpush1.bf16.xpose.msra.mxu0 0
    %323 = vmatprep.subr.bf16.mxu0 0
    %324 = vmatpush1.bf16.xpose.msra.mxu0 0
    %325 = vmatprep.subr.bf16.mxu0 0
    %326 = vmatpush1.bf16.xpose.msra.mxu0 0
    %327 = vmatprep.mubr.bf16.mxu0 0
    %328 = vmatmul.mubr.bf16.gmra.mrb[0].mxu0 %v290
    %v329 = vpop.f32.mrb[0].mxu0
    %v330 = vadd.f32 0.0, %v329
    %v331 = vpop.f32.mrb[0].mxu0
    %v332 = vpop.f32.mrb[0].mxu0
    %v333 = vpop.f32.mrb[0].mxu0
    %334 = vdwg.mxu0
    %336 = vrot.lane.b32.xlu0 %v149, 96
    %v337 = vpop.permute.xlu0 %336
    %339 = vrot.lane.b32.xlu0 %v218, 96
    %v340 = vpop.permute.xlu0 %339
    %v342 = vsel %vm102, %v337, 0
    %v345 = vsel %vm102, %v340, 0
    %347 = vmatprep.subr.bf16.mxu0 0
    %348 = vmatpush1.bf16.xpose.msra.mxu0 %v345
    %349 = vmatprep.subr.bf16.mxu0 0
    %350 = vmatpush1.bf16.xpose.msra.mxu0 0
    %351 = vmatprep.subr.bf16.mxu0 0
    %352 = vmatpush1.bf16.xpose.msra.mxu0 0
    %353 = vmatprep.subr.bf16.mxu0 0
    %354 = vmatpush1.bf16.xpose.msra.mxu0 0
    %355 = vmatprep.subr.bf16.mxu0 0
    %356 = vmatpush1.bf16.xpose.msra.mxu0 0
    %357 = vmatprep.subr.bf16.mxu0 0
    %358 = vmatpush1.bf16.xpose.msra.mxu0 0
    %359 = vmatprep.subr.bf16.mxu0 0
    %360 = vmatpush1.bf16.xpose.msra.mxu0 0
    %361 = vmatprep.subr.bf16.mxu0 0
    %362 = vmatpush1.bf16.xpose.msra.mxu0 0
    %363 = vmatprep.subr.bf16.mxu0 0
    %364 = vmatpush1.bf16.xpose.msra.mxu0 0
    %365 = vmatprep.subr.bf16.mxu0 0
    %366 = vmatpush1.bf16.xpose.msra.mxu0 0
    %367 = vmatprep.subr.bf16.mxu0 0
    %368 = vmatpush1.bf16.xpose.msra.mxu0 0
    %369 = vmatprep.subr.bf16.mxu0 0
    %370 = vmatpush1.bf16.xpose.msra.mxu0 0
    %371 = vmatprep.subr.bf16.mxu0 0
    %372 = vmatpush1.bf16.xpose.msra.mxu0 0
    %373 = vmatprep.subr.bf16.mxu0 0
    %374 = vmatpush1.bf16.xpose.msra.mxu0 0
    %375 = vmatprep.subr.bf16.mxu0 0
    %376 = vmatpush1.bf16.xpose.msra.mxu0 0
    %377 = vmatprep.subr.bf16.mxu0 0
    %378 = vmatpush1.bf16.xpose.msra.mxu0 0
    %379 = vmatprep.mubr.bf16.mxu0 0
    %380 = vmatmul.mubr.bf16.gmra.mrb[0].mxu0 %v342
    %v381 = vpop.f32.mrb[0].mxu0
    %v382 = vadd.f32 0.0, %v381
    %v383 = vpop.f32.mrb[0].mxu0
    %v384 = vpop.f32.mrb[0].mxu0
    %v385 = vpop.f32.mrb[0].mxu0
    %386 = vdwg.mxu0
    %387 = vrot.lane.b32.xlu0 %v149, 64
    %v388 = vpop.permute.xlu0 %387
    %389 = vrot.lane.b32.xlu0 %v218, 64
    %v390 = vpop.permute.xlu0 %389
    %v392 = vsel %vm102, %v388, 0
    %v395 = vsel %vm102, %v390, 0
    %397 = vmatprep.subr.bf16.mxu0 0
    %398 = vmatpush1.bf16.xpose.msra.mxu0 %v395
    %399 = vmatprep.subr.bf16.mxu0 0
    %400 = vmatpush1.bf16.xpose.msra.mxu0 0
    %401 = vmatprep.subr.bf16.mxu0 0
    %402 = vmatpush1.bf16.xpose.msra.mxu0 0
    %403 = vmatprep.subr.bf16.mxu0 0
    %404 = vmatpush1.bf16.xpose.msra.mxu0 0
    %405 = vmatprep.subr.bf16.mxu0 0
    %406 = vmatpush1.bf16.xpose.msra.mxu0 0
    %407 = vmatprep.subr.bf16.mxu0 0
    %408 = vmatpush1.bf16.xpose.msra.mxu0 0
    %409 = vmatprep.subr.bf16.mxu0 0
    %410 = vmatpush1.bf16.xpose.msra.mxu0 0
    %411 = vmatprep.subr.bf16.mxu0 0
    %412 = vmatpush1.bf16.xpose.msra.mxu0 0
    %413 = vmatprep.subr.bf16.mxu0 0
    %414 = vmatpush1.bf16.xpose.msra.mxu0 0
    %415 = vmatprep.subr.bf16.mxu0 0
    %416 = vmatpush1.bf16.xpose.msra.mxu0 0
    %417 = vmatprep.subr.bf16.mxu0 0
    %418 = vmatpush1.bf16.xpose.msra.mxu0 0
    %419 = vmatprep.subr.bf16.mxu0 0
    %420 = vmatpush1.bf16.xpose.msra.mxu0 0
    %421 = vmatprep.subr.bf16.mxu0 0
    %422 = vmatpush1.bf16.xpose.msra.mxu0 0
    %423 = vmatprep.subr.bf16.mxu0 0
    %424 = vmatpush1.bf16.xpose.msra.mxu0 0
    %425 = vmatprep.subr.bf16.mxu0 0
    %426 = vmatpush1.bf16.xpose.msra.mxu0 0
    %427 = vmatprep.subr.bf16.mxu0 0
    %428 = vmatpush1.bf16.xpose.msra.mxu0 0
    %429 = vmatprep.mubr.bf16.mxu0 0
    %430 = vmatmul.mubr.bf16.gmra.mrb[0].mxu0 %v392
    %v431 = vpop.f32.mrb[0].mxu0
    %v432 = vadd.f32 0.0, %v431
    %v433 = vpop.f32.mrb[0].mxu0
    %v434 = vpop.f32.mrb[0].mxu0
    %v435 = vpop.f32.mrb[0].mxu0
    %436 = vdwg.mxu0
    %437 = vrot.lane.b32.xlu0 %v149, 32
    %v438 = vpop.permute.xlu0 %437
    %439 = vrot.lane.b32.xlu0 %v218, 32
    %v440 = vpop.permute.xlu0 %439
    %v442 = vsel %vm102, %v438, 0
    %v445 = vsel %vm102, %v440, 0
    %447 = vmatprep.subr.bf16.mxu0 0
    %448 = vmatpush1.bf16.xpose.msra.mxu0 %v445
    %449 = vmatprep.subr.bf16.mxu0 0
    %450 = vmatpush1.bf16.xpose.msra.mxu0 0
    %451 = vmatprep.subr.bf16.mxu0 0
    %452 = vmatpush1.bf16.xpose.msra.mxu0 0
    %453 = vmatprep.subr.bf16.mxu0 0
    %454 = vmatpush1.bf16.xpose.msra.mxu0 0
    %455 = vmatprep.subr.bf16.mxu0 0
    %456 = vmatpush1.bf16.xpose.msra.mxu0 0
    %457 = vmatprep.subr.bf16.mxu0 0
    %458 = vmatpush1.bf16.xpose.msra.mxu0 0
    %459 = vmatprep.subr.bf16.mxu0 0
    %460 = vmatpush1.bf16.xpose.msra.mxu0 0
    %461 = vmatprep.subr.bf16.mxu0 0
    %462 = vmatpush1.bf16.xpose.msra.mxu0 0
    %463 = vmatprep.subr.bf16.mxu0 0
    %464 = vmatpush1.bf16.xpose.msra.mxu0 0
    %465 = vmatprep.subr.bf16.mxu0 0
    %466 = vmatpush1.bf16.xpose.msra.mxu0 0
    %467 = vmatprep.subr.bf16.mxu0 0
    %468 = vmatpush1.bf16.xpose.msra.mxu0 0
    %469 = vmatprep.subr.bf16.mxu0 0
    %470 = vmatpush1.bf16.xpose.msra.mxu0 0
    %471 = vmatprep.subr.bf16.mxu0 0
    %472 = vmatpush1.bf16.xpose.msra.mxu0 0
    %473 = vmatprep.subr.bf16.mxu0 0
    %474 = vmatpush1.bf16.xpose.msra.mxu0 0
    %475 = vmatprep.subr.bf16.mxu0 0
    %476 = vmatpush1.bf16.xpose.msra.mxu0 0
    %477 = vmatprep.subr.bf16.mxu0 0
    %478 = vmatpush1.bf16.xpose.msra.mxu0 0
    %479 = vmatprep.mubr.bf16.mxu0 0
    %480 = vmatmul.mubr.bf16.gmra.mrb[0].mxu0 %v442
    %v481 = vpop.f32.mrb[0].mxu0
    %v482 = vadd.f32 0.0, %v481
    %v483 = vpop.f32.mrb[0].mxu0
    %v484 = vpop.f32.mrb[0].mxu0
    %v485 = vpop.f32.mrb[0].mxu0
    %486 = vdwg.mxu0
    %v488 = vsel %vm102, %v150, 0
    %v491 = vsel %vm102, %v219, 0
    %493 = vmatprep.subr.bf16.mxu0 0
    %494 = vmatpush1.bf16.xpose.msra.mxu0 %v491
    %495 = vmatprep.subr.bf16.mxu0 0
    %496 = vmatpush1.bf16.xpose.msra.mxu0 0
    %497 = vmatprep.subr.bf16.mxu0 0
    %498 = vmatpush1.bf16.xpose.msra.mxu0 0
    %499 = vmatprep.subr.bf16.mxu0 0
    %500 = vmatpush1.bf16.xpose.msra.mxu0 0
    %501 = vmatprep.subr.bf16.mxu0 0
    %502 = vmatpush1.bf16.xpose.msra.mxu0 0
    %503 = vmatprep.subr.bf16.mxu0 0
    %504 = vmatpush1.bf16.xpose.msra.mxu0 0
    %505 = vmatprep.subr.bf16.mxu0 0
    %506 = vmatpush1.bf16.xpose.msra.mxu0 0
    %507 = vmatprep.subr.bf16.mxu0 0
    %508 = vmatpush1.bf16.xpose.msra.mxu0 0
    %509 = vmatprep.subr.bf16.mxu0 0
    %510 = vmatpush1.bf16.xpose.msra.mxu0 0
    %511 = vmatprep.subr.bf16.mxu0 0
    %512 = vmatpush1.bf16.xpose.msra.mxu0 0
    %513 = vmatprep.subr.bf16.mxu0 0
    %514 = vmatpush1.bf16.xpose.msra.mxu0 0
    %515 = vmatprep.subr.bf16.mxu0 0
    %516 = vmatpush1.bf16.xpose.msra.mxu0 0
    %517 = vmatprep.subr.bf16.mxu0 0
    %518 = vmatpush1.bf16.xpose.msra.mxu0 0
    %519 = vmatprep.subr.bf16.mxu0 0
    %520 = vmatpush1.bf16.xpose.msra.mxu0 0
    %521 = vmatprep.subr.bf16.mxu0 0
    %522 = vmatpush1.bf16.xpose.msra.mxu0 0
    %523 = vmatprep.subr.bf16.mxu0 0
    %524 = vmatpush1.bf16.xpose.msra.mxu0 0
    %525 = vmatprep.mubr.bf16.mxu0 0
    %526 = vmatmul.mubr.bf16.gmra.mrb[0].mxu0 %v488
    %v527 = vpop.f32.mrb[0].mxu0
    %v528 = vadd.f32 0.0, %v527
    %v529 = vpop.f32.mrb[0].mxu0
    %v530 = vpop.f32.mrb[0].mxu0
    %v531 = vpop.f32.mrb[0].mxu0
    %532 = vdwg.mxu0
    %534 = vrot.lane.b32.xlu0 %v150, 96
    %v535 = vpop.permute.xlu0 %534
    %537 = vrot.lane.b32.xlu0 %v219, 96
    %v538 = vpop.permute.xlu0 %537
    %v540 = vsel %vm102, %v535, 0
    %v543 = vsel %vm102, %v538, 0
    %545 = vmatprep.subr.bf16.mxu0 0
    %546 = vmatpush1.bf16.xpose.msra.mxu0 %v543
    %547 = vmatprep.subr.bf16.mxu0 0
    %548 = vmatpush1.bf16.xpose.msra.mxu0 0
    %549 = vmatprep.subr.bf16.mxu0 0
    %550 = vmatpush1.bf16.xpose.msra.mxu0 0
    %551 = vmatprep.subr.bf16.mxu0 0
    %552 = vmatpush1.bf16.xpose.msra.mxu0 0
    %553 = vmatprep.subr.bf16.mxu0 0
    %554 = vmatpush1.bf16.xpose.msra.mxu0 0
    %555 = vmatprep.subr.bf16.mxu0 0
    %556 = vmatpush1.bf16.xpose.msra.mxu0 0
    %557 = vmatprep.subr.bf16.mxu0 0
    %558 = vmatpush1.bf16.xpose.msra.mxu0 0
    %559 = vmatprep.subr.bf16.mxu0 0
    %560 = vmatpush1.bf16.xpose.msra.mxu0 0
    %561 = vmatprep.subr.bf16.mxu0 0
    %562 = vmatpush1.bf16.xpose.msra.mxu0 0
    %563 = vmatprep.subr.bf16.mxu0 0
    %564 = vmatpush1.bf16.xpose.msra.mxu0 0
    %565 = vmatprep.subr.bf16.mxu0 0
    %566 = vmatpush1.bf16.xpose.msra.mxu0 0
    %567 = vmatprep.subr.bf16.mxu0 0
    %568 = vmatpush1.bf16.xpose.msra.mxu0 0
    %569 = vmatprep.subr.bf16.mxu0 0
    %570 = vmatpush1.bf16.xpose.msra.mxu0 0
    %571 = vmatprep.subr.bf16.mxu0 0
    %572 = vmatpush1.bf16.xpose.msra.mxu0 0
    %573 = vmatprep.subr.bf16.mxu0 0
    %574 = vmatpush1.bf16.xpose.msra.mxu0 0
    %575 = vmatprep.subr.bf16.mxu0 0
    %576 = vmatpush1.bf16.xpose.msra.mxu0 0
    %577 = vmatprep.mubr.bf16.mxu0 0
    %578 = vmatmul.mubr.bf16.gmra.mrb[0].mxu0 %v540
    %v579 = vpop.f32.mrb[0].mxu0
    %v580 = vadd.f32 0.0, %v579
    %v581 = vpop.f32.mrb[0].mxu0
    %v582 = vpop.f32.mrb[0].mxu0
    %v583 = vpop.f32.mrb[0].mxu0
    %584 = vdwg.mxu0
    %585 = vrot.lane.b32.xlu0 %v150, 64
    %v586 = vpop.permute.xlu0 %585
    %587 = vrot.lane.b32.xlu0 %v219, 64
    %v588 = vpop.permute.xlu0 %587
    %v590 = vsel %vm102, %v586, 0
    %v593 = vsel %vm102, %v588, 0
    %595 = vmatprep.subr.bf16.mxu0 0
    %596 = vmatpush1.bf16.xpose.msra.mxu0 %v593
    %597 = vmatprep.subr.bf16.mxu0 0
    %598 = vmatpush1.bf16.xpose.msra.mxu0 0
    %599 = vmatprep.subr.bf16.mxu0 0
    %600 = vmatpush1.bf16.xpose.msra.mxu0 0
    %601 = vmatprep.subr.bf16.mxu0 0
    %602 = vmatpush1.bf16.xpose.msra.mxu0 0
    %603 = vmatprep.subr.bf16.mxu0 0
    %604 = vmatpush1.bf16.xpose.msra.mxu0 0
    %605 = vmatprep.subr.bf16.mxu0 0
    %606 = vmatpush1.bf16.xpose.msra.mxu0 0
    %607 = vmatprep.subr.bf16.mxu0 0
    %608 = vmatpush1.bf16.xpose.msra.mxu0 0
    %609 = vmatprep.subr.bf16.mxu0 0
    %610 = vmatpush1.bf16.xpose.msra.mxu0 0
    %611 = vmatprep.subr.bf16.mxu0 0
    %612 = vmatpush1.bf16.xpose.msra.mxu0 0
    %613 = vmatprep.subr.bf16.mxu0 0
    %614 = vmatpush1.bf16.xpose.msra.mxu0 0
    %615 = vmatprep.subr.bf16.mxu0 0
    %616 = vmatpush1.bf16.xpose.msra.mxu0 0
    %617 = vmatprep.subr.bf16.mxu0 0
    %618 = vmatpush1.bf16.xpose.msra.mxu0 0
    %619 = vmatprep.subr.bf16.mxu0 0
    %620 = vmatpush1.bf16.xpose.msra.mxu0 0
    %621 = vmatprep.subr.bf16.mxu0 0
    %622 = vmatpush1.bf16.xpose.msra.mxu0 0
    %623 = vmatprep.subr.bf16.mxu0 0
    %624 = vmatpush1.bf16.xpose.msra.mxu0 0
    %625 = vmatprep.subr.bf16.mxu0 0
    %626 = vmatpush1.bf16.xpose.msra.mxu0 0
    %627 = vmatprep.mubr.bf16.mxu0 0
    %628 = vmatmul.mubr.bf16.gmra.mrb[0].mxu0 %v590
    %v629 = vpop.f32.mrb[0].mxu0
    %v630 = vadd.f32 0.0, %v629
    %v631 = vpop.f32.mrb[0].mxu0
    %v632 = vpop.f32.mrb[0].mxu0
    %v633 = vpop.f32.mrb[0].mxu0
    %634 = vdwg.mxu0
    %635 = vrot.lane.b32.xlu0 %v150, 32
    %v636 = vpop.permute.xlu0 %635
    %637 = vrot.lane.b32.xlu0 %v219, 32
    %v638 = vpop.permute.xlu0 %637
    %v640 = vsel %vm102, %v636, 0
    %v643 = vsel %vm102, %v638, 0
    %645 = vmatprep.subr.bf16.mxu0 0
    %646 = vmatpush1.bf16.xpose.msra.mxu0 %v643
    %647 = vmatprep.subr.bf16.mxu0 0
    %648 = vmatpush1.bf16.xpose.msra.mxu0 0
    %649 = vmatprep.subr.bf16.mxu0 0
    %650 = vmatpush1.bf16.xpose.msra.mxu0 0
    %651 = vmatprep.subr.bf16.mxu0 0
    %652 = vmatpush1.bf16.xpose.msra.mxu0 0
    %653 = vmatprep.subr.bf16.mxu0 0
    %654 = vmatpush1.bf16.xpose.msra.mxu0 0
    %655 = vmatprep.subr.bf16.mxu0 0
    %656 = vmatpush1.bf16.xpose.msra.mxu0 0
    %657 = vmatprep.subr.bf16.mxu0 0
    %658 = vmatpush1.bf16.xpose.msra.mxu0 0
    %659 = vmatprep.subr.bf16.mxu0 0
    %660 = vmatpush1.bf16.xpose.msra.mxu0 0
    %661 = vmatprep.subr.bf16.mxu0 0
    %662 = vmatpush1.bf16.xpose.msra.mxu0 0
    %663 = vmatprep.subr.bf16.mxu0 0
    %664 = vmatpush1.bf16.xpose.msra.mxu0 0
    %665 = vmatprep.subr.bf16.mxu0 0
    %666 = vmatpush1.bf16.xpose.msra.mxu0 0
    %667 = vmatprep.subr.bf16.mxu0 0
    %668 = vmatpush1.bf16.xpose.msra.mxu0 0
    %669 = vmatprep.subr.bf16.mxu0 0
    %670 = vmatpush1.bf16.xpose.msra.mxu0 0
    %671 = vmatprep.subr.bf16.mxu0 0
    %672 = vmatpush1.bf16.xpose.msra.mxu0 0
    %673 = vmatprep.subr.bf16.mxu0 0
    %674 = vmatpush1.bf16.xpose.msra.mxu0 0
    %675 = vmatprep.subr.bf16.mxu0 0
    %676 = vmatpush1.bf16.xpose.msra.mxu0 0
    %677 = vmatprep.mubr.bf16.mxu0 0
    %678 = vmatmul.mubr.bf16.gmra.mrb[0].mxu0 %v640
    %v679 = vpop.f32.mrb[0].mxu0
    %v680 = vadd.f32 0.0, %v679
    %v681 = vpop.f32.mrb[0].mxu0
    %v682 = vpop.f32.mrb[0].mxu0
    %v683 = vpop.f32.mrb[0].mxu0
    %684 = vdwg.mxu0
    %v685 = vrot.slane %v149, 4
    %v686 = vrot.slane %v218, 4
    %v688 = vsel %vm102, %v685, 0
    %v691 = vsel %vm102, %v686, 0
    %693 = vmatprep.subr.bf16.mxu0 0
    %694 = vmatpush1.bf16.xpose.msra.mxu0 %v691
    %695 = vmatprep.subr.bf16.mxu0 0
    %696 = vmatpush1.bf16.xpose.msra.mxu0 0
    %697 = vmatprep.subr.bf16.mxu0 0
    %698 = vmatpush1.bf16.xpose.msra.mxu0 0
    %699 = vmatprep.subr.bf16.mxu0 0
    %700 = vmatpush1.bf16.xpose.msra.mxu0 0
    %701 = vmatprep.subr.bf16.mxu0 0
    %702 = vmatpush1.bf16.xpose.msra.mxu0 0
    %703 = vmatprep.subr.bf16.mxu0 0
    %704 = vmatpush1.bf16.xpose.msra.mxu0 0
    %705 = vmatprep.subr.bf16.mxu0 0
    %706 = vmatpush1.bf16.xpose.msra.mxu0 0
    %707 = vmatprep.subr.bf16.mxu0 0
    %708 = vmatpush1.bf16.xpose.msra.mxu0 0
    %709 = vmatprep.subr.bf16.mxu0 0
    %710 = vmatpush1.bf16.xpose.msra.mxu0 0
    %711 = vmatprep.subr.bf16.mxu0 0
    %712 = vmatpush1.bf16.xpose.msra.mxu0 0
    %713 = vmatprep.subr.bf16.mxu0 0
    %714 = vmatpush1.bf16.xpose.msra.mxu0 0
    %715 = vmatprep.subr.bf16.mxu0 0
    %716 = vmatpush1.bf16.xpose.msra.mxu0 0
    %717 = vmatprep.subr.bf16.mxu0 0
    %718 = vmatpush1.bf16.xpose.msra.mxu0 0
    %719 = vmatprep.subr.bf16.mxu0 0
    %720 = vmatpush1.bf16.xpose.msra.mxu0 0
    %721 = vmatprep.subr.bf16.mxu0 0
    %722 = vmatpush1.bf16.xpose.msra.mxu0 0
    %723 = vmatprep.subr.bf16.mxu0 0
    %724 = vmatpush1.bf16.xpose.msra.mxu0 0
    %725 = vmatprep.mubr.bf16.mxu0 0
    %726 = vmatmul.mubr.bf16.gmra.mrb[0].mxu0 %v688
    %v727 = vpop.f32.mrb[0].mxu0
    %v728 = vadd.f32 0.0, %v727
    %v729 = vpop.f32.mrb[0].mxu0
    %v730 = vpop.f32.mrb[0].mxu0
    %v731 = vpop.f32.mrb[0].mxu0
    %732 = vdwg.mxu0
    %733 = vrot.lane.b32.xlu0 %v685, 96
    %v734 = vpop.permute.xlu0 %733
    %735 = vrot.lane.b32.xlu0 %v686, 96
    %v736 = vpop.permute.xlu0 %735
    %v738 = vsel %vm102, %v734, 0
    %v741 = vsel %vm102, %v736, 0
    %743 = vmatprep.subr.bf16.mxu0 0
    %744 = vmatpush1.bf16.xpose.msra.mxu0 %v741
    %745 = vmatprep.subr.bf16.mxu0 0
    %746 = vmatpush1.bf16.xpose.msra.mxu0 0
    %747 = vmatprep.subr.bf16.mxu0 0
    %748 = vmatpush1.bf16.xpose.msra.mxu0 0
    %749 = vmatprep.subr.bf16.mxu0 0
    %750 = vmatpush1.bf16.xpose.msra.mxu0 0
    %751 = vmatprep.subr.bf16.mxu0 0
    %752 = vmatpush1.bf16.xpose.msra.mxu0 0
    %753 = vmatprep.subr.bf16.mxu0 0
    %754 = vmatpush1.bf16.xpose.msra.mxu0 0
    %755 = vmatprep.subr.bf16.mxu0 0
    %756 = vmatpush1.bf16.xpose.msra.mxu0 0
    %757 = vmatprep.subr.bf16.mxu0 0
    %758 = vmatpush1.bf16.xpose.msra.mxu0 0
    %759 = vmatprep.subr.bf16.mxu0 0
    %760 = vmatpush1.bf16.xpose.msra.mxu0 0
    %761 = vmatprep.subr.bf16.mxu0 0
    %762 = vmatpush1.bf16.xpose.msra.mxu0 0
    %763 = vmatprep.subr.bf16.mxu0 0
    %764 = vmatpush1.bf16.xpose.msra.mxu0 0
    %765 = vmatprep.subr.bf16.mxu0 0
    %766 = vmatpush1.bf16.xpose.msra.mxu0 0
    %767 = vmatprep.subr.bf16.mxu0 0
    %768 = vmatpush1.bf16.xpose.msra.mxu0 0
    %769 = vmatprep.subr.bf16.mxu0 0
    %770 = vmatpush1.bf16.xpose.msra.mxu0 0
    %771 = vmatprep.subr.bf16.mxu0 0
    %772 = vmatpush1.bf16.xpose.msra.mxu0 0
    %773 = vmatprep.subr.bf16.mxu0 0
    %774 = vmatpush1.bf16.xpose.msra.mxu0 0
    %775 = vmatprep.mubr.bf16.mxu0 0
    %776 = vmatmul.mubr.bf16.gmra.mrb[0].mxu0 %v738
    %v777 = vpop.f32.mrb[0].mxu0
    %v778 = vadd.f32 0.0, %v777
    %v779 = vpop.f32.mrb[0].mxu0
    %v780 = vpop.f32.mrb[0].mxu0
    %v781 = vpop.f32.mrb[0].mxu0
    %782 = vdwg.mxu0
    %783 = vrot.lane.b32.xlu0 %v685, 64
    %v784 = vpop.permute.xlu0 %783
    %785 = vrot.lane.b32.xlu0 %v686, 64
    %v786 = vpop.permute.xlu0 %785
    %v788 = vsel %vm102, %v784, 0
    %v791 = vsel %vm102, %v786, 0
    %793 = vmatprep.subr.bf16.mxu0 0
    %794 = vmatpush1.bf16.xpose.msra.mxu0 %v791
    %795 = vmatprep.subr.bf16.mxu0 0
    %796 = vmatpush1.bf16.xpose.msra.mxu0 0
    %797 = vmatprep.subr.bf16.mxu0 0
    %798 = vmatpush1.bf16.xpose.msra.mxu0 0
    %799 = vmatprep.subr.bf16.mxu0 0
    %800 = vmatpush1.bf16.xpose.msra.mxu0 0
    %801 = vmatprep.subr.bf16.mxu0 0
    %802 = vmatpush1.bf16.xpose.msra.mxu0 0
    %803 = vmatprep.subr.bf16.mxu0 0
    %804 = vmatpush1.bf16.xpose.msra.mxu0 0
    %805 = vmatprep.subr.bf16.mxu0 0
    %806 = vmatpush1.bf16.xpose.msra.mxu0 0
    %807 = vmatprep.subr.bf16.mxu0 0
    %808 = vmatpush1.bf16.xpose.msra.mxu0 0
    %809 = vmatprep.subr.bf16.mxu0 0
    %810 = vmatpush1.bf16.xpose.msra.mxu0 0
    %811 = vmatprep.subr.bf16.mxu0 0
    %812 = vmatpush1.bf16.xpose.msra.mxu0 0
    %813 = vmatprep.subr.bf16.mxu0 0
    %814 = vmatpush1.bf16.xpose.msra.mxu0 0
    %815 = vmatprep.subr.bf16.mxu0 0
    %816 = vmatpush1.bf16.xpose.msra.mxu0 0
    %817 = vmatprep.subr.bf16.mxu0 0
    %818 = vmatpush1.bf16.xpose.msra.mxu0 0
    %819 = vmatprep.subr.bf16.mxu0 0
    %820 = vmatpush1.bf16.xpose.msra.mxu0 0
    %821 = vmatprep.subr.bf16.mxu0 0
    %822 = vmatpush1.bf16.xpose.msra.mxu0 0
    %823 = vmatprep.subr.bf16.mxu0 0
    %824 = vmatpush1.bf16.xpose.msra.mxu0 0
    %825 = vmatprep.mubr.bf16.mxu0 0
    %826 = vmatmul.mubr.bf16.gmra.mrb[0].mxu0 %v788
    %v827 = vpop.f32.mrb[0].mxu0
    %v828 = vadd.f32 0.0, %v827
    %v829 = vpop.f32.mrb[0].mxu0
    %v830 = vpop.f32.mrb[0].mxu0
    %v831 = vpop.f32.mrb[0].mxu0
    %832 = vdwg.mxu0
    %833 = vrot.lane.b32.xlu0 %v685, 32
    %v834 = vpop.permute.xlu0 %833
    %835 = vrot.lane.b32.xlu0 %v686, 32
    %v836 = vpop.permute.xlu0 %835
    %v838 = vsel %vm102, %v834, 0
    %v841 = vsel %vm102, %v836, 0
    %843 = vmatprep.subr.bf16.mxu0 0
    %844 = vmatpush1.bf16.xpose.msra.mxu0 %v841
    %845 = vmatprep.subr.bf16.mxu0 0
    %846 = vmatpush1.bf16.xpose.msra.mxu0 0
    %847 = vmatprep.subr.bf16.mxu0 0
    %848 = vmatpush1.bf16.xpose.msra.mxu0 0
    %849 = vmatprep.subr.bf16.mxu0 0
    %850 = vmatpush1.bf16.xpose.msra.mxu0 0
    %851 = vmatprep.subr.bf16.mxu0 0
    %852 = vmatpush1.bf16.xpose.msra.mxu0 0
    %853 = vmatprep.subr.bf16.mxu0 0
    %854 = vmatpush1.bf16.xpose.msra.mxu0 0
    %855 = vmatprep.subr.bf16.mxu0 0
    %856 = vmatpush1.bf16.xpose.msra.mxu0 0
    %857 = vmatprep.subr.bf16.mxu0 0
    %858 = vmatpush1.bf16.xpose.msra.mxu0 0
    %859 = vmatprep.subr.bf16.mxu0 0
    %860 = vmatpush1.bf16.xpose.msra.mxu0 0
    %861 = vmatprep.subr.bf16.mxu0 0
    %862 = vmatpush1.bf16.xpose.msra.mxu0 0
    %863 = vmatprep.subr.bf16.mxu0 0
    %864 = vmatpush1.bf16.xpose.msra.mxu0 0
    %865 = vmatprep.subr.bf16.mxu0 0
    %866 = vmatpush1.bf16.xpose.msra.mxu0 0
    %867 = vmatprep.subr.bf16.mxu0 0
    %868 = vmatpush1.bf16.xpose.msra.mxu0 0
    %869 = vmatprep.subr.bf16.mxu0 0
    %870 = vmatpush1.bf16.xpose.msra.mxu0 0
    %871 = vmatprep.subr.bf16.mxu0 0
    %872 = vmatpush1.bf16.xpose.msra.mxu0 0
    %873 = vmatprep.subr.bf16.mxu0 0
    %874 = vmatpush1.bf16.xpose.msra.mxu0 0
    %875 = vmatprep.mubr.bf16.mxu0 0
    %876 = vmatmul.mubr.bf16.gmra.mrb[0].mxu0 %v838
    %v877 = vpop.f32.mrb[0].mxu0
    %v878 = vadd.f32 0.0, %v877
    %v879 = vpop.f32.mrb[0].mxu0
    %v880 = vpop.f32.mrb[0].mxu0
    %v881 = vpop.f32.mrb[0].mxu0
    %882 = vdwg.mxu0
    %v883 = vrot.slane %v150, 4
    %v884 = vrot.slane %v219, 4
    %v886 = vsel %vm102, %v883, 0
    %v889 = vsel %vm102, %v884, 0
    %891 = vmatprep.subr.bf16.mxu0 0
    %892 = vmatpush1.bf16.xpose.msra.mxu0 %v889
    %893 = vmatprep.subr.bf16.mxu0 0
    %894 = vmatpush1.bf16.xpose.msra.mxu0 0
    %895 = vmatprep.subr.bf16.mxu0 0
    %896 = vmatpush1.bf16.xpose.msra.mxu0 0
    %897 = vmatprep.subr.bf16.mxu0 0
    %898 = vmatpush1.bf16.xpose.msra.mxu0 0
    %899 = vmatprep.subr.bf16.mxu0 0
    %900 = vmatpush1.bf16.xpose.msra.mxu0 0
    %901 = vmatprep.subr.bf16.mxu0 0
    %902 = vmatpush1.bf16.xpose.msra.mxu0 0
    %903 = vmatprep.subr.bf16.mxu0 0
    %904 = vmatpush1.bf16.xpose.msra.mxu0 0
    %905 = vmatprep.subr.bf16.mxu0 0
    %906 = vmatpush1.bf16.xpose.msra.mxu0 0
    %907 = vmatprep.subr.bf16.mxu0 0
    %908 = vmatpush1.bf16.xpose.msra.mxu0 0
    %909 = vmatprep.subr.bf16.mxu0 0
    %910 = vmatpush1.bf16.xpose.msra.mxu0 0
    %911 = vmatprep.subr.bf16.mxu0 0
    %912 = vmatpush1.bf16.xpose.msra.mxu0 0
    %913 = vmatprep.subr.bf16.mxu0 0
    %914 = vmatpush1.bf16.xpose.msra.mxu0 0
    %915 = vmatprep.subr.bf16.mxu0 0
    %916 = vmatpush1.bf16.xpose.msra.mxu0 0
    %917 = vmatprep.subr.bf16.mxu0 0
    %918 = vmatpush1.bf16.xpose.msra.mxu0 0
    %919 = vmatprep.subr.bf16.mxu0 0
    %920 = vmatpush1.bf16.xpose.msra.mxu0 0
    %921 = vmatprep.subr.bf16.mxu0 0
    %922 = vmatpush1.bf16.xpose.msra.mxu0 0
    %923 = vmatprep.mubr.bf16.mxu0 0
    %924 = vmatmul.mubr.bf16.gmra.mrb[0].mxu0 %v886
    %v925 = vpop.f32.mrb[0].mxu0
    %v926 = vadd.f32 0.0, %v925
    %v927 = vpop.f32.mrb[0].mxu0
    %v928 = vpop.f32.mrb[0].mxu0
    %v929 = vpop.f32.mrb[0].mxu0
    %930 = vdwg.mxu0
    %931 = vrot.lane.b32.xlu0 %v883, 96
    %v932 = vpop.permute.xlu0 %931
    %933 = vrot.lane.b32.xlu0 %v884, 96
    %v934 = vpop.permute.xlu0 %933
    %v936 = vsel %vm102, %v932, 0
    %v939 = vsel %vm102, %v934, 0
    %941 = vmatprep.subr.bf16.mxu0 0
    %942 = vmatpush1.bf16.xpose.msra.mxu0 %v939
    %943 = vmatprep.subr.bf16.mxu0 0
    %944 = vmatpush1.bf16.xpose.msra.mxu0 0
    %945 = vmatprep.subr.bf16.mxu0 0
    %946 = vmatpush1.bf16.xpose.msra.mxu0 0
    %947 = vmatprep.subr.bf16.mxu0 0
    %948 = vmatpush1.bf16.xpose.msra.mxu0 0
    %949 = vmatprep.subr.bf16.mxu0 0
    %950 = vmatpush1.bf16.xpose.msra.mxu0 0
    %951 = vmatprep.subr.bf16.mxu0 0
    %952 = vmatpush1.bf16.xpose.msra.mxu0 0
    %953 = vmatprep.subr.bf16.mxu0 0
    %954 = vmatpush1.bf16.xpose.msra.mxu0 0
    %955 = vmatprep.subr.bf16.mxu0 0
    %956 = vmatpush1.bf16.xpose.msra.mxu0 0
    %957 = vmatprep.subr.bf16.mxu0 0
    %958 = vmatpush1.bf16.xpose.msra.mxu0 0
    %959 = vmatprep.subr.bf16.mxu0 0
    %960 = vmatpush1.bf16.xpose.msra.mxu0 0
    %961 = vmatprep.subr.bf16.mxu0 0
    %962 = vmatpush1.bf16.xpose.msra.mxu0 0
    %963 = vmatprep.subr.bf16.mxu0 0
    %964 = vmatpush1.bf16.xpose.msra.mxu0 0
    %965 = vmatprep.subr.bf16.mxu0 0
    %966 = vmatpush1.bf16.xpose.msra.mxu0 0
    %967 = vmatprep.subr.bf16.mxu0 0
    %968 = vmatpush1.bf16.xpose.msra.mxu0 0
    %969 = vmatprep.subr.bf16.mxu0 0
    %970 = vmatpush1.bf16.xpose.msra.mxu0 0
    %971 = vmatprep.subr.bf16.mxu0 0
    %972 = vmatpush1.bf16.xpose.msra.mxu0 0
    %973 = vmatprep.mubr.bf16.mxu0 0
    %974 = vmatmul.mubr.bf16.gmra.mrb[0].mxu0 %v936
    %v975 = vpop.f32.mrb[0].mxu0
    %v976 = vadd.f32 0.0, %v975
    %v977 = vpop.f32.mrb[0].mxu0
    %v978 = vpop.f32.mrb[0].mxu0
    %v979 = vpop.f32.mrb[0].mxu0
    %980 = vdwg.mxu0
    %981 = vrot.lane.b32.xlu0 %v883, 64
    %v982 = vpop.permute.xlu0 %981
    %983 = vrot.lane.b32.xlu0 %v884, 64
    %v984 = vpop.permute.xlu0 %983
    %v986 = vsel %vm102, %v982, 0
    %v989 = vsel %vm102, %v984, 0
    %991 = vmatprep.subr.bf16.mxu0 0
    %992 = vmatpush1.bf16.xpose.msra.mxu0 %v989
    %993 = vmatprep.subr.bf16.mxu0 0
    %994 = vmatpush1.bf16.xpose.msra.mxu0 0
    %995 = vmatprep.subr.bf16.mxu0 0
    %996 = vmatpush1.bf16.xpose.msra.mxu0 0
    %997 = vmatprep.subr.bf16.mxu0 0
    %998 = vmatpush1.bf16.xpose.msra.mxu0 0
    %999 = vmatprep.subr.bf16.mxu0 0
    %1000 = vmatpush1.bf16.xpose.msra.mxu0 0
    %1001 = vmatprep.subr.bf16.mxu0 0
    %1002 = vmatpush1.bf16.xpose.msra.mxu0 0
    %1003 = vmatprep.subr.bf16.mxu0 0
    %1004 = vmatpush1.bf16.xpose.msra.mxu0 0
    %1005 = vmatprep.subr.bf16.mxu0 0
    %1006 = vmatpush1.bf16.xpose.msra.mxu0 0
    %1007 = vmatprep.subr.bf16.mxu0 0
    %1008 = vmatpush1.bf16.xpose.msra.mxu0 0
    %1009 = vmatprep.subr.bf16.mxu0 0
    %1010 = vmatpush1.bf16.xpose.msra.mxu0 0
    %1011 = vmatprep.subr.bf16.mxu0 0
    %1012 = vmatpush1.bf16.xpose.msra.mxu0 0
    %1013 = vmatprep.subr.bf16.mxu0 0
    %1014 = vmatpush1.bf16.xpose.msra.mxu0 0
    %1015 = vmatprep.subr.bf16.mxu0 0
    %1016 = vmatpush1.bf16.xpose.msra.mxu0 0
    %1017 = vmatprep.subr.bf16.mxu0 0
    %1018 = vmatpush1.bf16.xpose.msra.mxu0 0
    %1019 = vmatprep.subr.bf16.mxu0 0
    %1020 = vmatpush1.bf16.xpose.msra.mxu0 0
    %1021 = vmatprep.subr.bf16.mxu0 0
    %1022 = vmatpush1.bf16.xpose.msra.mxu0 0
    %1023 = vmatprep.mubr.bf16.mxu0 0
    %1024 = vmatmul.mubr.bf16.gmra.mrb[0].mxu0 %v986
    %v1025 = vpop.f32.mrb[0].mxu0
    %v1026 = vadd.f32 0.0, %v1025
    %v1027 = vpop.f32.mrb[0].mxu0
    %v1028 = vpop.f32.mrb[0].mxu0
    %v1029 = vpop.f32.mrb[0].mxu0
    %1030 = vdwg.mxu0
    %1031 = vrot.lane.b32.xlu0 %v883, 32
    %v1032 = vpop.permute.xlu0 %1031
    %1033 = vrot.lane.b32.xlu0 %v884, 32
    %v1034 = vpop.permute.xlu0 %1033
    %v1036 = vsel %vm102, %v1032, 0
    %v1039 = vsel %vm102, %v1034, 0
    %1041 = vmatprep.subr.bf16.mxu0 0
    %1042 = vmatpush1.bf16.xpose.msra.mxu0 %v1039
    %1043 = vmatprep.subr.bf16.mxu0 0
    %1044 = vmatpush1.bf16.xpose.msra.mxu0 0
    %1045 = vmatprep.subr.bf16.mxu0 0
    %1046 = vmatpush1.bf16.xpose.msra.mxu0 0
    %1047 = vmatprep.subr.bf16.mxu0 0
    %1048 = vmatpush1.bf16.xpose.msra.mxu0 0
    %1049 = vmatprep.subr.bf16.mxu0 0
    %1050 = vmatpush1.bf16.xpose.msra.mxu0 0
    %1051 = vmatprep.subr.bf16.mxu0 0
    %1052 = vmatpush1.bf16.xpose.msra.mxu0 0
    %1053 = vmatprep.subr.bf16.mxu0 0
    %1054 = vmatpush1.bf16.xpose.msra.mxu0 0
    %1055 = vmatprep.subr.bf16.mxu0 0
    %1056 = vmatpush1.bf16.xpose.msra.mxu0 0
    %1057 = vmatprep.subr.bf16.mxu0 0
    %1058 = vmatpush1.bf16.xpose.msra.mxu0 0
    %1059 = vmatprep.subr.bf16.mxu0 0
    %1060 = vmatpush1.bf16.xpose.msra.mxu0 0
    %1061 = vmatprep.subr.bf16.mxu0 0
    %1062 = vmatpush1.bf16.xpose.msra.mxu0 0
    %1063 = vmatprep.subr.bf16.mxu0 0
    %1064 = vmatpush1.bf16.xpose.msra.mxu0 0
    %1065 = vmatprep.subr.bf16.mxu0 0
    %1066 = vmatpush1.bf16.xpose.msra.mxu0 0
    %1067 = vmatprep.subr.bf16.mxu0 0
    %1068 = vmatpush1.bf16.xpose.msra.mxu0 0
    %1069 = vmatprep.subr.bf16.mxu0 0
    %1070 = vmatpush1.bf16.xpose.msra.mxu0 0
    %1071 = vmatprep.subr.bf16.mxu0 0
    %1072 = vmatpush1.bf16.xpose.msra.mxu0 0
    %1073 = vmatprep.mubr.bf16.mxu0 0
    %1074 = vmatmul.mubr.bf16.gmra.mrb[0].mxu0 %v1036
    %v1075 = vpop.f32.mrb[0].mxu0
    %v1076 = vadd.f32 0.0, %v1075
    %v1077 = vpop.f32.mrb[0].mxu0
    %v1078 = vpop.f32.mrb[0].mxu0
    %v1079 = vpop.f32.mrb[0].mxu0
    %1080 = vdwg.mxu0
    %v1081 = vmul.f32 %v330, 0.17677669
    %v1082 = vmul.f32 %v382, 0.17677669
    %v1083 = vmul.f32 %v432, 0.17677669
    %v1084 = vmul.f32 %v482, 0.17677669
    %v1085 = vmul.f32 %v528, 0.17677669
    %v1086 = vmul.f32 %v580, 0.17677669
    %v1087 = vmul.f32 %v630, 0.17677669
    %v1088 = vmul.f32 %v680, 0.17677669
    %v1089 = vmul.f32 %v728, 0.17677669
    %v1090 = vmul.f32 %v778, 0.17677669
    %v1091 = vmul.f32 %v828, 0.17677669
    %v1092 = vmul.f32 %v878, 0.17677669
    %v1093 = vmul.f32 %v926, 0.17677669
    %v1094 = vmul.f32 %v976, 0.17677669
    %v1095 = vmul.f32 %v1026, 0.17677669
    %v1096 = vmul.f32 %v1076, 0.17677669
    %vm1097 = vcmask 64512
    %v1098 = vsel %vm1097, %v1081, -inf
    %1099 = vmax.xlane.f32.xlu0 %v1098
    %v1100 = vpop.xlane.xlu0 %1099
    %v1101 = vsel %vm1097, %v1082, -inf
    %1102 = vmax.xlane.f32.xlu0 %v1101
    %v1103 = vpop.xlane.xlu0 %1102
    %v1104 = vsel %vm1097, %v1083, -inf
    %1105 = vmax.xlane.f32.xlu0 %v1104
    %v1106 = vpop.xlane.xlu0 %1105
    %v1107 = vsel %vm1097, %v1084, -inf
    %1108 = vmax.xlane.f32.xlu0 %v1107
    %v1109 = vpop.xlane.xlu0 %1108
    %v1110 = vsel %vm1097, %v1085, -inf
    %1111 = vmax.xlane.f32.xlu0 %v1110
    %v1112 = vpop.xlane.xlu0 %1111
    %v1113 = vsel %vm1097, %v1086, -inf
    %1114 = vmax.xlane.f32.xlu0 %v1113
    %v1115 = vpop.xlane.xlu0 %1114
    %v1116 = vsel %vm1097, %v1087, -inf
    %1117 = vmax.xlane.f32.xlu0 %v1116
    %v1118 = vpop.xlane.xlu0 %1117
    %v1119 = vsel %vm1097, %v1088, -inf
    %1120 = vmax.xlane.f32.xlu0 %v1119
    %v1121 = vpop.xlane.xlu0 %1120
    %v1122 = vsel %vm1097, %v1089, -inf
    %1123 = vmax.xlane.f32.xlu0 %v1122
    %v1124 = vpop.xlane.xlu0 %1123
    %v1125 = vsel %vm1097, %v1090, -inf
    %1126 = vmax.xlane.f32.xlu0 %v1125
    %v1127 = vpop.xlane.xlu0 %1126
    %v1128 = vsel %vm1097, %v1091, -inf
    %1129 = vmax.xlane.f32.xlu0 %v1128
    %v1130 = vpop.xlane.xlu0 %1129
    %v1131 = vsel %vm1097, %v1092, -inf
    %1132 = vmax.xlane.f32.xlu0 %v1131
    %v1133 = vpop.xlane.xlu0 %1132
    %v1134 = vsel %vm1097, %v1093, -inf
    %1135 = vmax.xlane.f32.xlu0 %v1134
    %v1136 = vpop.xlane.xlu0 %1135
    %v1137 = vsel %vm1097, %v1094, -inf
    %1138 = vmax.xlane.f32.xlu0 %v1137
    %v1139 = vpop.xlane.xlu0 %1138
    %v1140 = vsel %vm1097, %v1095, -inf
    %1141 = vmax.xlane.f32.xlu0 %v1140
    %v1142 = vpop.xlane.xlu0 %1141
    %v1143 = vsel %vm1097, %v1096, -inf
    %1144 = vmax.xlane.f32.xlu0 %v1143
    %v1145 = vpop.xlane.xlu0 %1144
    %v1146 = vsub.f32 %v1081, %v1100
    %v1147 = vsub.f32 %v1082, %v1103
    %v1148 = vsub.f32 %v1083, %v1106
    %v1149 = vsub.f32 %v1084, %v1109
    %v1150 = vsub.f32 %v1085, %v1112
    %v1151 = vsub.f32 %v1086, %v1115
    %v1152 = vsub.f32 %v1087, %v1118
    %v1153 = vsub.f32 %v1088, %v1121
    %v1154 = vsub.f32 %v1089, %v1124
    %v1155 = vsub.f32 %v1090, %v1127
    %v1156 = vsub.f32 %v1091, %v1130
    %v1157 = vsub.f32 %v1092, %v1133
    %v1158 = vsub.f32 %v1093, %v1136
    %v1159 = vsub.f32 %v1094, %v1139
    %v1160 = vsub.f32 %v1095, %v1142
    %v1161 = vsub.f32 %v1096, %v1145
    %v1162 = vmul.f32 %v1146, 1.442695
    %v1163 = vpow.pop %v1162
    %v1164 = vmul.f32 %v1147, 1.442695
    %v1165 = vpow.pop %v1164
    %v1166 = vmul.f32 %v1148, 1.442695
    %v1167 = vpow.pop %v1166
    %v1168 = vmul.f32 %v1149, 1.442695
    %v1169 = vpow.pop %v1168
    %v1170 = vmul.f32 %v1150, 1.442695
    %v1171 = vpow.pop %v1170
    %v1172 = vmul.f32 %v1151, 1.442695
    %v1173 = vpow.pop %v1172
    %v1174 = vmul.f32 %v1152, 1.442695
    %v1175 = vpow.pop %v1174
    %v1176 = vmul.f32 %v1153, 1.442695
    %v1177 = vpow.pop %v1176
    %v1178 = vmul.f32 %v1154, 1.442695
    %v1179 = vpow.pop %v1178
    %v1180 = vmul.f32 %v1155, 1.442695
    %v1181 = vpow.pop %v1180
    %v1182 = vmul.f32 %v1156, 1.442695
    %v1183 = vpow.pop %v1182
    %v1184 = vmul.f32 %v1157, 1.442695
    %v1185 = vpow.pop %v1184
    %v1186 = vmul.f32 %v1158, 1.442695
    %v1187 = vpow.pop %v1186
    %v1188 = vmul.f32 %v1159, 1.442695
    %v1189 = vpow.pop %v1188
    %v1190 = vmul.f32 %v1160, 1.442695
    %v1191 = vpow.pop %v1190
    %v1192 = vmul.f32 %v1161, 1.442695
    %v1193 = vpow.pop %v1192
    %v1194 = vsel %vm1097, %v1163, 0.0
    %1195 = vadd.xlane.f32.xlu0 %v1194
    %v1196 = vpop.xlane.xlu0 %1195
    %v1197 = vsel %vm1097, %v1165, 0.0
    %1198 = vadd.xlane.f32.xlu0 %v1197
    %v1199 = vpop.xlane.xlu0 %1198
    %v1200 = vsel %vm1097, %v1167, 0.0
    %1201 = vadd.xlane.f32.xlu0 %v1200
    %v1202 = vpop.xlane.xlu0 %1201
    %v1203 = vsel %vm1097, %v1169, 0.0
    %1204 = vadd.xlane.f32.xlu0 %v1203
    %v1205 = vpop.xlane.xlu0 %1204
    %v1206 = vsel %vm1097, %v1171, 0.0
    %1207 = vadd.xlane.f32.xlu0 %v1206
    %v1208 = vpop.xlane.xlu0 %1207
    %v1209 = vsel %vm1097, %v1173, 0.0
    %1210 = vadd.xlane.f32.xlu0 %v1209
    %v1211 = vpop.xlane.xlu0 %1210
    %v1212 = vsel %vm1097, %v1175, 0.0
    %1213 = vadd.xlane.f32.xlu0 %v1212
    %v1214 = vpop.xlane.xlu0 %1213
    %v1215 = vsel %vm1097, %v1177, 0.0
    %1216 = vadd.xlane.f32.xlu0 %v1215
    %v1217 = vpop.xlane.xlu0 %1216
    %v1218 = vsel %vm1097, %v1179, 0.0
    %1219 = vadd.xlane.f32.xlu0 %v1218
    %v1220 = vpop.xlane.xlu0 %1219
    %v1221 = vsel %vm1097, %v1181, 0.0
    %1222 = vadd.xlane.f32.xlu0 %v1221
    %v1223 = vpop.xlane.xlu0 %1222
    %v1224 = vsel %vm1097, %v1183, 0.0
    %1225 = vadd.xlane.f32.xlu0 %v1224
    %v1226 = vpop.xlane.xlu0 %1225
    %v1227 = vsel %vm1097, %v1185, 0.0
    %1228 = vadd.xlane.f32.xlu0 %v1227
    %v1229 = vpop.xlane.xlu0 %1228
    %v1230 = vsel %vm1097, %v1187, 0.0
    %1231 = vadd.xlane.f32.xlu0 %v1230
    %v1232 = vpop.xlane.xlu0 %1231
    %v1233 = vsel %vm1097, %v1189, 0.0
    %1234 = vadd.xlane.f32.xlu0 %v1233
    %v1235 = vpop.xlane.xlu0 %1234
    %v1236 = vsel %vm1097, %v1191, 0.0
    %1237 = vadd.xlane.f32.xlu0 %v1236
    %v1238 = vpop.xlane.xlu0 %1237
    %v1239 = vsel %vm1097, %v1193, 0.0
    %1240 = vadd.xlane.f32.xlu0 %v1239
    %v1241 = vpop.xlane.xlu0 %1240
    %v1242 = vrcp.pop %v1196
    %v1243 = vrcp.pop %v1199
    %v1244 = vrcp.pop %v1202
    %v1245 = vrcp.pop %v1205
    %v1246 = vrcp.pop %v1208
    %v1247 = vrcp.pop %v1211
    %v1248 = vrcp.pop %v1214
    %v1249 = vrcp.pop %v1217
    %v1250 = vrcp.pop %v1220
    %v1251 = vrcp.pop %v1223
    %v1252 = vrcp.pop %v1226
    %v1253 = vrcp.pop %v1229
    %v1254 = vrcp.pop %v1232
    %v1255 = vrcp.pop %v1235
    %v1256 = vrcp.pop %v1238
    %v1257 = vrcp.pop %v1241
    %v1258 = vmul.f32 %v1163, %v1242
    %v1259 = vmul.f32 %v1165, %v1243
    %v1260 = vmul.f32 %v1167, %v1244
    %v1261 = vmul.f32 %v1169, %v1245
    %v1262 = vmul.f32 %v1171, %v1246
    %v1263 = vmul.f32 %v1173, %v1247
    %v1264 = vmul.f32 %v1175, %v1248
    %v1265 = vmul.f32 %v1177, %v1249
    %v1266 = vmul.f32 %v1179, %v1250
    %v1267 = vmul.f32 %v1181, %v1251
    %v1268 = vmul.f32 %v1183, %v1252
    %v1269 = vmul.f32 %v1185, %v1253
    %v1270 = vmul.f32 %v1187, %v1254
    %v1271 = vmul.f32 %v1189, %v1255
    %v1272 = vmul.f32 %v1191, %v1256
    %v1273 = vmul.f32 %v1193, %v1257
    %v1274 = vpack.c.bf16 %v1259, %v1258
    %v1275 = vpack.c.bf16 %v1261, %v1260
    %v1276 = vpack.c.bf16 %v1263, %v1262
    %v1277 = vpack.c.bf16 %v1265, %v1264
    %v1278 = vpack.c.bf16 %v1267, %v1266
    %v1279 = vpack.c.bf16 %v1269, %v1268
    %v1280 = vpack.c.bf16 %v1271, %v1270
    %v1281 = vpack.c.bf16 %v1273, %v1272
    %v1283 = vsel %vm1097, %v1274, 0
    %vm1285 = vcmask 1043456
    %v1287 = vsel %vm1285, %v287, 0
    %1289 = vmatprep.subr.bf16.mxu0 0
    %1290 = vmatpush1.bf16.msra.mxu0 %v1287
    %1291 = vmatprep.subr.bf16.mxu0 0
    %1292 = vmatpush1.bf16.msra.mxu0 0
    %1293 = vmatprep.subr.bf16.mxu0 0
    %1294 = vmatpush1.bf16.msra.mxu0 0
    %1295 = vmatprep.subr.bf16.mxu0 0
    %1296 = vmatpush1.bf16.msra.mxu0 0
    %1297 = vmatprep.subr.bf16.mxu0 0
    %1298 = vmatpush1.bf16.msra.mxu0 0
    %1299 = vmatprep.subr.bf16.mxu0 0
    %1300 = vmatpush1.bf16.msra.mxu0 0
    %1301 = vmatprep.subr.bf16.mxu0 0
    %1302 = vmatpush1.bf16.msra.mxu0 0
    %1303 = vmatprep.subr.bf16.mxu0 0
    %1304 = vmatpush1.bf16.msra.mxu0 0
    %1305 = vmatprep.subr.bf16.mxu0 0
    %1306 = vmatpush1.bf16.msra.mxu0 0
    %1307 = vmatprep.subr.bf16.mxu0 0
    %1308 = vmatpush1.bf16.msra.mxu0 0
    %1309 = vmatprep.subr.bf16.mxu0 0
    %1310 = vmatpush1.bf16.msra.mxu0 0
    %1311 = vmatprep.subr.bf16.mxu0 0
    %1312 = vmatpush1.bf16.msra.mxu0 0
    %1313 = vmatprep.subr.bf16.mxu0 0
    %1314 = vmatpush1.bf16.msra.mxu0 0
    %1315 = vmatprep.subr.bf16.mxu0 0
    %1316 = vmatpush1.bf16.msra.mxu0 0
    %1317 = vmatprep.subr.bf16.mxu0 0
    %1318 = vmatpush1.bf16.msra.mxu0 0
    %1319 = vmatprep.subr.bf16.mxu0 0
    %1320 = vmatpush1.bf16.msra.mxu0 0
    %1321 = vmatprep.mubr.bf16.mxu0 0
    %1322 = vmatmul.mubr.bf16.gmra.mrb[0].mxu0 %v1283
    %v1323 = vpop.f32.mrb[0].mxu0
    %v1324 = vadd.f32 0.0, %v1323
    %v1325 = vpop.f32.mrb[0].mxu0
    %v1326 = vpop.f32.mrb[0].mxu0
    %v1327 = vpop.f32.mrb[0].mxu0
    %1328 = vdwg.mxu0
    %v1330 = vrot.slane %v1274, 4
    %1332 = vrot.lane.b32.xlu0 %v287, 96
    %v1333 = vpop.permute.xlu0 %1332
    %v1335 = vsel %vm1097, %v1330, 0
    %v1338 = vsel %vm1285, %v1333, 0
    %1340 = vmatprep.subr.bf16.mxu0 0
    %1341 = vmatpush1.bf16.msra.mxu0 %v1338
    %1342 = vmatprep.subr.bf16.mxu0 0
    %1343 = vmatpush1.bf16.msra.mxu0 0
    %1344 = vmatprep.subr.bf16.mxu0 0
    %1345 = vmatpush1.bf16.msra.mxu0 0
    %1346 = vmatprep.subr.bf16.mxu0 0
    %1347 = vmatpush1.bf16.msra.mxu0 0
    %1348 = vmatprep.subr.bf16.mxu0 0
    %1349 = vmatpush1.bf16.msra.mxu0 0
    %1350 = vmatprep.subr.bf16.mxu0 0
    %1351 = vmatpush1.bf16.msra.mxu0 0
    %1352 = vmatprep.subr.bf16.mxu0 0
    %1353 = vmatpush1.bf16.msra.mxu0 0
    %1354 = vmatprep.subr.bf16.mxu0 0
    %1355 = vmatpush1.bf16.msra.mxu0 0
    %1356 = vmatprep.subr.bf16.mxu0 0
    %1357 = vmatpush1.bf16.msra.mxu0 0
    %1358 = vmatprep.subr.bf16.mxu0 0
    %1359 = vmatpush1.bf16.msra.mxu0 0
    %1360 = vmatprep.subr.bf16.mxu0 0
    %1361 = vmatpush1.bf16.msra.mxu0 0
    %1362 = vmatprep.subr.bf16.mxu0 0
    %1363 = vmatpush1.bf16.msra.mxu0 0
    %1364 = vmatprep.subr.bf16.mxu0 0
    %1365 = vmatpush1.bf16.msra.mxu0 0
    %1366 = vmatprep.subr.bf16.mxu0 0
    %1367 = vmatpush1.bf16.msra.mxu0 0
    %1368 = vmatprep.subr.bf16.mxu0 0
    %1369 = vmatpush1.bf16.msra.mxu0 0
    %1370 = vmatprep.subr.bf16.mxu0 0
    %1371 = vmatpush1.bf16.msra.mxu0 0
    %1372 = vmatprep.mubr.bf16.mxu0 0
    %1373 = vmatmul.mubr.bf16.gmra.mrb[0].mxu0 %v1335
    %v1374 = vpop.f32.mrb[0].mxu0
    %v1375 = vadd.f32 0.0, %v1374
    %v1376 = vpop.f32.mrb[0].mxu0
    %v1377 = vpop.f32.mrb[0].mxu0
    %v1378 = vpop.f32.mrb[0].mxu0
    %1379 = vdwg.mxu0
    %1380 = vrot.lane.b32.xlu0 %v287, 64
    %v1381 = vpop.permute.xlu0 %1380
    %v1383 = vsel %vm1097, %v1275, 0
    %v1386 = vsel %vm1285, %v1381, 0
    %1388 = vmatprep.subr.bf16.mxu0 0
    %1389 = vmatpush1.bf16.msra.mxu0 %v1386
    %1390 = vmatprep.subr.bf16.mxu0 0
    %1391 = vmatpush1.bf16.msra.mxu0 0
    %1392 = vmatprep.subr.bf16.mxu0 0
    %1393 = vmatpush1.bf16.msra.mxu0 0
    %1394 = vmatprep.subr.bf16.mxu0 0
    %1395 = vmatpush1.bf16.msra.mxu0 0
    %1396 = vmatprep.subr.bf16.mxu0 0
    %1397 = vmatpush1.bf16.msra.mxu0 0
    %1398 = vmatprep.subr.bf16.mxu0 0
    %1399 = vmatpush1.bf16.msra.mxu0 0
    %1400 = vmatprep.subr.bf16.mxu0 0
    %1401 = vmatpush1.bf16.msra.mxu0 0
    %1402 = vmatprep.subr.bf16.mxu0 0
    %1403 = vmatpush1.bf16.msra.mxu0 0
    %1404 = vmatprep.subr.bf16.mxu0 0
    %1405 = vmatpush1.bf16.msra.mxu0 0
    %1406 = vmatprep.subr.bf16.mxu0 0
    %1407 = vmatpush1.bf16.msra.mxu0 0
    %1408 = vmatprep.subr.bf16.mxu0 0
    %1409 = vmatpush1.bf16.msra.mxu0 0
    %1410 = vmatprep.subr.bf16.mxu0 0
    %1411 = vmatpush1.bf16.msra.mxu0 0
    %1412 = vmatprep.subr.bf16.mxu0 0
    %1413 = vmatpush1.bf16.msra.mxu0 0
    %1414 = vmatprep.subr.bf16.mxu0 0
    %1415 = vmatpush1.bf16.msra.mxu0 0
    %1416 = vmatprep.subr.bf16.mxu0 0
    %1417 = vmatpush1.bf16.msra.mxu0 0
    %1418 = vmatprep.subr.bf16.mxu0 0
    %1419 = vmatpush1.bf16.msra.mxu0 0
    %1420 = vmatprep.mubr.bf16.mxu0 0
    %1421 = vmatmul.mubr.bf16.gmra.mrb[0].mxu0 %v1383
    %v1422 = vpop.f32.mrb[0].mxu0
    %v1423 = vadd.f32 0.0, %v1422
    %v1424 = vpop.f32.mrb[0].mxu0
    %v1425 = vpop.f32.mrb[0].mxu0
    %v1426 = vpop.f32.mrb[0].mxu0
    %1427 = vdwg.mxu0
    %v1429 = vrot.slane %v1275, 4
    %1430 = vrot.lane.b32.xlu0 %v287, 32
    %v1431 = vpop.permute.xlu0 %1430
    %v1433 = vsel %vm1097, %v1429, 0
    %v1436 = vsel %vm1285, %v1431, 0
    %1438 = vmatprep.subr.bf16.mxu0 0
    %1439 = vmatpush1.bf16.msra.mxu0 %v1436
    %1440 = vmatprep.subr.bf16.mxu0 0
    %1441 = vmatpush1.bf16.msra.mxu0 0
    %1442 = vmatprep.subr.bf16.mxu0 0
    %1443 = vmatpush1.bf16.msra.mxu0 0
    %1444 = vmatprep.subr.bf16.mxu0 0
    %1445 = vmatpush1.bf16.msra.mxu0 0
    %1446 = vmatprep.subr.bf16.mxu0 0
    %1447 = vmatpush1.bf16.msra.mxu0 0
    %1448 = vmatprep.subr.bf16.mxu0 0
    %1449 = vmatpush1.bf16.msra.mxu0 0
    %1450 = vmatprep.subr.bf16.mxu0 0
    %1451 = vmatpush1.bf16.msra.mxu0 0
    %1452 = vmatprep.subr.bf16.mxu0 0
    %1453 = vmatpush1.bf16.msra.mxu0 0
    %1454 = vmatprep.subr.bf16.mxu0 0
    %1455 = vmatpush1.bf16.msra.mxu0 0
    %1456 = vmatprep.subr.bf16.mxu0 0
    %1457 = vmatpush1.bf16.msra.mxu0 0
    %1458 = vmatprep.subr.bf16.mxu0 0
    %1459 = vmatpush1.bf16.msra.mxu0 0
    %1460 = vmatprep.subr.bf16.mxu0 0
    %1461 = vmatpush1.bf16.msra.mxu0 0
    %1462 = vmatprep.subr.bf16.mxu0 0
    %1463 = vmatpush1.bf16.msra.mxu0 0
    %1464 = vmatprep.subr.bf16.mxu0 0
    %1465 = vmatpush1.bf16.msra.mxu0 0
    %1466 = vmatprep.subr.bf16.mxu0 0
    %1467 = vmatpush1.bf16.msra.mxu0 0
    %1468 = vmatprep.subr.bf16.mxu0 0
    %1469 = vmatpush1.bf16.msra.mxu0 0
    %1470 = vmatprep.mubr.bf16.mxu0 0
    %1471 = vmatmul.mubr.bf16.gmra.mrb[0].mxu0 %v1433
    %v1472 = vpop.f32.mrb[0].mxu0
    %v1473 = vadd.f32 0.0, %v1472
    %v1474 = vpop.f32.mrb[0].mxu0
    %v1475 = vpop.f32.mrb[0].mxu0
    %v1476 = vpop.f32.mrb[0].mxu0
    %1477 = vdwg.mxu0
    %v1479 = vsel %vm1097, %v1276, 0
    %v1482 = vsel %vm1285, %v288, 0
    %1484 = vmatprep.subr.bf16.mxu0 0
    %1485 = vmatpush1.bf16.msra.mxu0 %v1482
    %1486 = vmatprep.subr.bf16.mxu0 0
    %1487 = vmatpush1.bf16.msra.mxu0 0
    %1488 = vmatprep.subr.bf16.mxu0 0
    %1489 = vmatpush1.bf16.msra.mxu0 0
    %1490 = vmatprep.subr.bf16.mxu0 0
    %1491 = vmatpush1.bf16.msra.mxu0 0
    %1492 = vmatprep.subr.bf16.mxu0 0
    %1493 = vmatpush1.bf16.msra.mxu0 0
    %1494 = vmatprep.subr.bf16.mxu0 0
    %1495 = vmatpush1.bf16.msra.mxu0 0
    %1496 = vmatprep.subr.bf16.mxu0 0
    %1497 = vmatpush1.bf16.msra.mxu0 0
    %1498 = vmatprep.subr.bf16.mxu0 0
    %1499 = vmatpush1.bf16.msra.mxu0 0
    %1500 = vmatprep.subr.bf16.mxu0 0
    %1501 = vmatpush1.bf16.msra.mxu0 0
    %1502 = vmatprep.subr.bf16.mxu0 0
    %1503 = vmatpush1.bf16.msra.mxu0 0
    %1504 = vmatprep.subr.bf16.mxu0 0
    %1505 = vmatpush1.bf16.msra.mxu0 0
    %1506 = vmatprep.subr.bf16.mxu0 0
    %1507 = vmatpush1.bf16.msra.mxu0 0
    %1508 = vmatprep.subr.bf16.mxu0 0
    %1509 = vmatpush1.bf16.msra.mxu0 0
    %1510 = vmatprep.subr.bf16.mxu0 0
    %1511 = vmatpush1.bf16.msra.mxu0 0
    %1512 = vmatprep.subr.bf16.mxu0 0
    %1513 = vmatpush1.bf16.msra.mxu0 0
    %1514 = vmatprep.subr.bf16.mxu0 0
    %1515 = vmatpush1.bf16.msra.mxu0 0
    %1516 = vmatprep.mubr.bf16.mxu0 0
    %1517 = vmatmul.mubr.bf16.gmra.mrb[0].mxu0 %v1479
    %v1518 = vpop.f32.mrb[0].mxu0
    %v1519 = vadd.f32 0.0, %v1518
    %v1520 = vpop.f32.mrb[0].mxu0
    %v1521 = vpop.f32.mrb[0].mxu0
    %v1522 = vpop.f32.mrb[0].mxu0
    %1523 = vdwg.mxu0
    %v1525 = vrot.slane %v1276, 4
    %1527 = vrot.lane.b32.xlu0 %v288, 96
    %v1528 = vpop.permute.xlu0 %1527
    %v1530 = vsel %vm1097, %v1525, 0
    %v1533 = vsel %vm1285, %v1528, 0
    %1535 = vmatprep.subr.bf16.mxu0 0
    %1536 = vmatpush1.bf16.msra.mxu0 %v1533
    %1537 = vmatprep.subr.bf16.mxu0 0
    %1538 = vmatpush1.bf16.msra.mxu0 0
    %1539 = vmatprep.subr.bf16.mxu0 0
    %1540 = vmatpush1.bf16.msra.mxu0 0
    %1541 = vmatprep.subr.bf16.mxu0 0
    %1542 = vmatpush1.bf16.msra.mxu0 0
    %1543 = vmatprep.subr.bf16.mxu0 0
    %1544 = vmatpush1.bf16.msra.mxu0 0
    %1545 = vmatprep.subr.bf16.mxu0 0
    %1546 = vmatpush1.bf16.msra.mxu0 0
    %1547 = vmatprep.subr.bf16.mxu0 0
    %1548 = vmatpush1.bf16.msra.mxu0 0
    %1549 = vmatprep.subr.bf16.mxu0 0
    %1550 = vmatpush1.bf16.msra.mxu0 0
    %1551 = vmatprep.subr.bf16.mxu0 0
    %1552 = vmatpush1.bf16.msra.mxu0 0
    %1553 = vmatprep.subr.bf16.mxu0 0
    %1554 = vmatpush1.bf16.msra.mxu0 0
    %1555 = vmatprep.subr.bf16.mxu0 0
    %1556 = vmatpush1.bf16.msra.mxu0 0
    %1557 = vmatprep.subr.bf16.mxu0 0
    %1558 = vmatpush1.bf16.msra.mxu0 0
    %1559 = vmatprep.subr.bf16.mxu0 0
    %1560 = vmatpush1.bf16.msra.mxu0 0
    %1561 = vmatprep.subr.bf16.mxu0 0
    %1562 = vmatpush1.bf16.msra.mxu0 0
    %1563 = vmatprep.subr.bf16.mxu0 0
    %1564 = vmatpush1.bf16.msra.mxu0 0
    %1565 = vmatprep.subr.bf16.mxu0 0
    %1566 = vmatpush1.bf16.msra.mxu0 0
    %1567 = vmatprep.mubr.bf16.mxu0 0
    %1568 = vmatmul.mubr.bf16.gmra.mrb[0].mxu0 %v1530
    %v1569 = vpop.f32.mrb[0].mxu0
    %v1570 = vadd.f32 0.0, %v1569
    %v1571 = vpop.f32.mrb[0].mxu0
    %v1572 = vpop.f32.mrb[0].mxu0
    %v1573 = vpop.f32.mrb[0].mxu0
    %1574 = vdwg.mxu0
    %1575 = vrot.lane.b32.xlu0 %v288, 64
    %v1576 = vpop.permute.xlu0 %1575
    %v1578 = vsel %vm1097, %v1277, 0
    %v1581 = vsel %vm1285, %v1576, 0
    %1583 = vmatprep.subr.bf16.mxu0 0
    %1584 = vmatpush1.bf16.msra.mxu0 %v1581
    %1585 = vmatprep.subr.bf16.mxu0 0
    %1586 = vmatpush1.bf16.msra.mxu0 0
    %1587 = vmatprep.subr.bf16.mxu0 0
    %1588 = vmatpush1.bf16.msra.mxu0 0
    %1589 = vmatprep.subr.bf16.mxu0 0
    %1590 = vmatpush1.bf16.msra.mxu0 0
    %1591 = vmatprep.subr.bf16.mxu0 0
    %1592 = vmatpush1.bf16.msra.mxu0 0
    %1593 = vmatprep.subr.bf16.mxu0 0
    %1594 = vmatpush1.bf16.msra.mxu0 0
    %1595 = vmatprep.subr.bf16.mxu0 0
    %1596 = vmatpush1.bf16.msra.mxu0 0
    %1597 = vmatprep.subr.bf16.mxu0 0
    %1598 = vmatpush1.bf16.msra.mxu0 0
    %1599 = vmatprep.subr.bf16.mxu0 0
    %1600 = vmatpush1.bf16.msra.mxu0 0
    %1601 = vmatprep.subr.bf16.mxu0 0
    %1602 = vmatpush1.bf16.msra.mxu0 0
    %1603 = vmatprep.subr.bf16.mxu0 0
    %1604 = vmatpush1.bf16.msra.mxu0 0
    %1605 = vmatprep.subr.bf16.mxu0 0
    %1606 = vmatpush1.bf16.msra.mxu0 0
    %1607 = vmatprep.subr.bf16.mxu0 0
    %1608 = vmatpush1.bf16.msra.mxu0 0
    %1609 = vmatprep.subr.bf16.mxu0 0
    %1610 = vmatpush1.bf16.msra.mxu0 0
    %1611 = vmatprep.subr.bf16.mxu0 0
    %1612 = vmatpush1.bf16.msra.mxu0 0
    %1613 = vmatprep.subr.bf16.mxu0 0
    %1614 = vmatpush1.bf16.msra.mxu0 0
    %1615 = vmatprep.mubr.bf16.mxu0 0
    %1616 = vmatmul.mubr.bf16.gmra.mrb[0].mxu0 %v1578
    %v1617 = vpop.f32.mrb[0].mxu0
    %v1618 = vadd.f32 0.0, %v1617
    %v1619 = vpop.f32.mrb[0].mxu0
    %v1620 = vpop.f32.mrb[0].mxu0
    %v1621 = vpop.f32.mrb[0].mxu0
    %1622 = vdwg.mxu0
    %v1624 = vrot.slane %v1277, 4
    %1625 = vrot.lane.b32.xlu0 %v288, 32
    %v1626 = vpop.permute.xlu0 %1625
    %v1628 = vsel %vm1097, %v1624, 0
    %v1631 = vsel %vm1285, %v1626, 0
    %1633 = vmatprep.subr.bf16.mxu0 0
    %1634 = vmatpush1.bf16.msra.mxu0 %v1631
    %1635 = vmatprep.subr.bf16.mxu0 0
    %1636 = vmatpush1.bf16.msra.mxu0 0
    %1637 = vmatprep.subr.bf16.mxu0 0
    %1638 = vmatpush1.bf16.msra.mxu0 0
    %1639 = vmatprep.subr.bf16.mxu0 0
    %1640 = vmatpush1.bf16.msra.mxu0 0
    %1641 = vmatprep.subr.bf16.mxu0 0
    %1642 = vmatpush1.bf16.msra.mxu0 0
    %1643 = vmatprep.subr.bf16.mxu0 0
    %1644 = vmatpush1.bf16.msra.mxu0 0
    %1645 = vmatprep.subr.bf16.mxu0 0
    %1646 = vmatpush1.bf16.msra.mxu0 0
    %1647 = vmatprep.subr.bf16.mxu0 0
    %1648 = vmatpush1.bf16.msra.mxu0 0
    %1649 = vmatprep.subr.bf16.mxu0 0
    %1650 = vmatpush1.bf16.msra.mxu0 0
    %1651 = vmatprep.subr.bf16.mxu0 0
    %1652 = vmatpush1.bf16.msra.mxu0 0
    %1653 = vmatprep.subr.bf16.mxu0 0
    %1654 = vmatpush1.bf16.msra.mxu0 0
    %1655 = vmatprep.subr.bf16.mxu0 0
    %1656 = vmatpush1.bf16.msra.mxu0 0
    %1657 = vmatprep.subr.bf16.mxu0 0
    %1658 = vmatpush1.bf16.msra.mxu0 0
    %1659 = vmatprep.subr.bf16.mxu0 0
    %1660 = vmatpush1.bf16.msra.mxu0 0
    %1661 = vmatprep.subr.bf16.mxu0 0
    %1662 = vmatpush1.bf16.msra.mxu0 0
    %1663 = vmatprep.subr.bf16.mxu0 0
    %1664 = vmatpush1.bf16.msra.mxu0 0
    %1665 = vmatprep.mubr.bf16.mxu0 0
    %1666 = vmatmul.mubr.bf16.gmra.mrb[0].mxu0 %v1628
    %v1667 = vpop.f32.mrb[0].mxu0
    %v1668 = vadd.f32 0.0, %v1667
    %v1669 = vpop.f32.mrb[0].mxu0
    %v1670 = vpop.f32.mrb[0].mxu0
    %v1671 = vpop.f32.mrb[0].mxu0
    %1672 = vdwg.mxu0
    %1674 = vrot.lane.b32.xlu0 %v1375, 32
    %v1675 = vpop.permute.xlu0 %1674
    %1678 = vrot.lane.b32.xlu0 %v1423, 64
    %v1679 = vpop.permute.xlu0 %1678
    %1682 = vrot.lane.b32.xlu0 %v1473, 96
    %v1683 = vpop.permute.xlu0 %1682
    %1686 = vrot.lane.b32.xlu0 %v1570, 32
    %v1687 = vpop.permute.xlu0 %1686
    %1690 = vrot.lane.b32.xlu0 %v1618, 64
    %v1691 = vpop.permute.xlu0 %1690
    %1694 = vrot.lane.b32.xlu0 %v1668, 96
    %v1695 = vpop.permute.xlu0 %1694
    %v1697 = vsel %vm102, %v1324, %v1675
    %vm1698 = vcmask 523264
    %v1699 = vsel %vm1698, %v1697, %v1679
    %vm1700 = vcmask 785408
    %v1701 = vsel %vm1700, %v1699, %v1683
    %v1702 = vsel %vm102, %v1519, %v1687
    %v1703 = vsel %vm1698, %v1702, %v1691
    %v1704 = vsel %vm1700, %v1703, %v1695
    %v1705 = vrot.slane %v287, 4
    %v1707 = vsel %vm1097, %v1278, 0
    %v1710 = vsel %vm1285, %v1705, 0
    %1712 = vmatprep.subr.bf16.mxu0 0
    %1713 = vmatpush1.bf16.msra.mxu0 %v1710
    %1714 = vmatprep.subr.bf16.mxu0 0
    %1715 = vmatpush1.bf16.msra.mxu0 0
    %1716 = vmatprep.subr.bf16.mxu0 0
    %1717 = vmatpush1.bf16.msra.mxu0 0
    %1718 = vmatprep.subr.bf16.mxu0 0
    %1719 = vmatpush1.bf16.msra.mxu0 0
    %1720 = vmatprep.subr.bf16.mxu0 0
    %1721 = vmatpush1.bf16.msra.mxu0 0
    %1722 = vmatprep.subr.bf16.mxu0 0
    %1723 = vmatpush1.bf16.msra.mxu0 0
    %1724 = vmatprep.subr.bf16.mxu0 0
    %1725 = vmatpush1.bf16.msra.mxu0 0
    %1726 = vmatprep.subr.bf16.mxu0 0
    %1727 = vmatpush1.bf16.msra.mxu0 0
    %1728 = vmatprep.subr.bf16.mxu0 0
    %1729 = vmatpush1.bf16.msra.mxu0 0
    %1730 = vmatprep.subr.bf16.mxu0 0
    %1731 = vmatpush1.bf16.msra.mxu0 0
    %1732 = vmatprep.subr.bf16.mxu0 0
    %1733 = vmatpush1.bf16.msra.mxu0 0
    %1734 = vmatprep.subr.bf16.mxu0 0
    %1735 = vmatpush1.bf16.msra.mxu0 0
    %1736 = vmatprep.subr.bf16.mxu0 0
    %1737 = vmatpush1.bf16.msra.mxu0 0
    %1738 = vmatprep.subr.bf16.mxu0 0
    %1739 = vmatpush1.bf16.msra.mxu0 0
    %1740 = vmatprep.subr.bf16.mxu0 0
    %1741 = vmatpush1.bf16.msra.mxu0 0
    %1742 = vmatprep.subr.bf16.mxu0 0
    %1743 = vmatpush1.bf16.msra.mxu0 0
    %1744 = vmatprep.mubr.bf16.mxu0 0
    %1745 = vmatmul.mubr.bf16.gmra.mrb[0].mxu0 %v1707
    %v1746 = vpop.f32.mrb[0].mxu0
    %v1747 = vadd.f32 0.0, %v1746
    %v1748 = vpop.f32.mrb[0].mxu0
    %v1749 = vpop.f32.mrb[0].mxu0
    %v1750 = vpop.f32.mrb[0].mxu0
    %1751 = vdwg.mxu0
    %v1753 = vrot.slane %v1278, 4
    %1754 = vrot.lane.b32.xlu0 %v1705, 96
    %v1755 = vpop.permute.xlu0 %1754
    %v1757 = vsel %vm1097, %v1753, 0
    %v1760 = vsel %vm1285, %v1755, 0
    %1762 = vmatprep.subr.bf16.mxu0 0
    %1763 = vmatpush1.bf16.msra.mxu0 %v1760
    %1764 = vmatprep.subr.bf16.mxu0 0
    %1765 = vmatpush1.bf16.msra.mxu0 0
    %1766 = vmatprep.subr.bf16.mxu0 0
    %1767 = vmatpush1.bf16.msra.mxu0 0
    %1768 = vmatprep.subr.bf16.mxu0 0
    %1769 = vmatpush1.bf16.msra.mxu0 0
    %1770 = vmatprep.subr.bf16.mxu0 0
    %1771 = vmatpush1.bf16.msra.mxu0 0
    %1772 = vmatprep.subr.bf16.mxu0 0
    %1773 = vmatpush1.bf16.msra.mxu0 0
    %1774 = vmatprep.subr.bf16.mxu0 0
    %1775 = vmatpush1.bf16.msra.mxu0 0
    %1776 = vmatprep.subr.bf16.mxu0 0
    %1777 = vmatpush1.bf16.msra.mxu0 0
    %1778 = vmatprep.subr.bf16.mxu0 0
    %1779 = vmatpush1.bf16.msra.mxu0 0
    %1780 = vmatprep.subr.bf16.mxu0 0
    %1781 = vmatpush1.bf16.msra.mxu0 0
    %1782 = vmatprep.subr.bf16.mxu0 0
    %1783 = vmatpush1.bf16.msra.mxu0 0
    %1784 = vmatprep.subr.bf16.mxu0 0
    %1785 = vmatpush1.bf16.msra.mxu0 0
    %1786 = vmatprep.subr.bf16.mxu0 0
    %1787 = vmatpush1.bf16.msra.mxu0 0
    %1788 = vmatprep.subr.bf16.mxu0 0
    %1789 = vmatpush1.bf16.msra.mxu0 0
    %1790 = vmatprep.subr.bf16.mxu0 0
    %1791 = vmatpush1.bf16.msra.mxu0 0
    %1792 = vmatprep.subr.bf16.mxu0 0
    %1793 = vmatpush1.bf16.msra.mxu0 0
    %1794 = vmatprep.mubr.bf16.mxu0 0
    %1795 = vmatmul.mubr.bf16.gmra.mrb[0].mxu0 %v1757
    %v1796 = vpop.f32.mrb[0].mxu0
    %v1797 = vadd.f32 0.0, %v1796
    %v1798 = vpop.f32.mrb[0].mxu0
    %v1799 = vpop.f32.mrb[0].mxu0
    %v1800 = vpop.f32.mrb[0].mxu0
    %1801 = vdwg.mxu0
    %1802 = vrot.lane.b32.xlu0 %v1705, 64
    %v1803 = vpop.permute.xlu0 %1802
    %v1805 = vsel %vm1097, %v1279, 0
    %v1808 = vsel %vm1285, %v1803, 0
    %1810 = vmatprep.subr.bf16.mxu0 0
    %1811 = vmatpush1.bf16.msra.mxu0 %v1808
    %1812 = vmatprep.subr.bf16.mxu0 0
    %1813 = vmatpush1.bf16.msra.mxu0 0
    %1814 = vmatprep.subr.bf16.mxu0 0
    %1815 = vmatpush1.bf16.msra.mxu0 0
    %1816 = vmatprep.subr.bf16.mxu0 0
    %1817 = vmatpush1.bf16.msra.mxu0 0
    %1818 = vmatprep.subr.bf16.mxu0 0
    %1819 = vmatpush1.bf16.msra.mxu0 0
    %1820 = vmatprep.subr.bf16.mxu0 0
    %1821 = vmatpush1.bf16.msra.mxu0 0
    %1822 = vmatprep.subr.bf16.mxu0 0
    %1823 = vmatpush1.bf16.msra.mxu0 0
    %1824 = vmatprep.subr.bf16.mxu0 0
    %1825 = vmatpush1.bf16.msra.mxu0 0
    %1826 = vmatprep.subr.bf16.mxu0 0
    %1827 = vmatpush1.bf16.msra.mxu0 0
    %1828 = vmatprep.subr.bf16.mxu0 0
    %1829 = vmatpush1.bf16.msra.mxu0 0
    %1830 = vmatprep.subr.bf16.mxu0 0
    %1831 = vmatpush1.bf16.msra.mxu0 0
    %1832 = vmatprep.subr.bf16.mxu0 0
    %1833 = vmatpush1.bf16.msra.mxu0 0
    %1834 = vmatprep.subr.bf16.mxu0 0
    %1835 = vmatpush1.bf16.msra.mxu0 0
    %1836 = vmatprep.subr.bf16.mxu0 0
    %1837 = vmatpush1.bf16.msra.mxu0 0
    %1838 = vmatprep.subr.bf16.mxu0 0
    %1839 = vmatpush1.bf16.msra.mxu0 0
    %1840 = vmatprep.subr.bf16.mxu0 0
    %1841 = vmatpush1.bf16.msra.mxu0 0
    %1842 = vmatprep.mubr.bf16.mxu0 0
    %1843 = vmatmul.mubr.bf16.gmra.mrb[0].mxu0 %v1805
    %v1844 = vpop.f32.mrb[0].mxu0
    %v1845 = vadd.f32 0.0, %v1844
    %v1846 = vpop.f32.mrb[0].mxu0
    %v1847 = vpop.f32.mrb[0].mxu0
    %v1848 = vpop.f32.mrb[0].mxu0
    %1849 = vdwg.mxu0
    %v1851 = vrot.slane %v1279, 4
    %1852 = vrot.lane.b32.xlu0 %v1705, 32
    %v1853 = vpop.permute.xlu0 %1852
    %v1855 = vsel %vm1097, %v1851, 0
    %v1858 = vsel %vm1285, %v1853, 0
    %1860 = vmatprep.subr.bf16.mxu0 0
    %1861 = vmatpush1.bf16.msra.mxu0 %v1858
    %1862 = vmatprep.subr.bf16.mxu0 0
    %1863 = vmatpush1.bf16.msra.mxu0 0
    %1864 = vmatprep.subr.bf16.mxu0 0
    %1865 = vmatpush1.bf16.msra.mxu0 0
    %1866 = vmatprep.subr.bf16.mxu0 0
    %1867 = vmatpush1.bf16.msra.mxu0 0
    %1868 = vmatprep.subr.bf16.mxu0 0
    %1869 = vmatpush1.bf16.msra.mxu0 0
    %1870 = vmatprep.subr.bf16.mxu0 0
    %1871 = vmatpush1.bf16.msra.mxu0 0
    %1872 = vmatprep.subr.bf16.mxu0 0
    %1873 = vmatpush1.bf16.msra.mxu0 0
    %1874 = vmatprep.subr.bf16.mxu0 0
    %1875 = vmatpush1.bf16.msra.mxu0 0
    %1876 = vmatprep.subr.bf16.mxu0 0
    %1877 = vmatpush1.bf16.msra.mxu0 0
    %1878 = vmatprep.subr.bf16.mxu0 0
    %1879 = vmatpush1.bf16.msra.mxu0 0
    %1880 = vmatprep.subr.bf16.mxu0 0
    %1881 = vmatpush1.bf16.msra.mxu0 0
    %1882 = vmatprep.subr.bf16.mxu0 0
    %1883 = vmatpush1.bf16.msra.mxu0 0
    %1884 = vmatprep.subr.bf16.mxu0 0
    %1885 = vmatpush1.bf16.msra.mxu0 0
    %1886 = vmatprep.subr.bf16.mxu0 0
    %1887 = vmatpush1.bf16.msra.mxu0 0
    %1888 = vmatprep.subr.bf16.mxu0 0
    %1889 = vmatpush1.bf16.msra.mxu0 0
    %1890 = vmatprep.subr.bf16.mxu0 0
    %1891 = vmatpush1.bf16.msra.mxu0 0
    %1892 = vmatprep.mubr.bf16.mxu0 0
    %1893 = vmatmul.mubr.bf16.gmra.mrb[0].mxu0 %v1855
    %v1894 = vpop.f32.mrb[0].mxu0
    %v1895 = vadd.f32 0.0, %v1894
    %v1896 = vpop.f32.mrb[0].mxu0
    %v1897 = vpop.f32.mrb[0].mxu0
    %v1898 = vpop.f32.mrb[0].mxu0
    %1899 = vdwg.mxu0
    %v1900 = vrot.slane %v288, 4
    %v1902 = vsel %vm1097, %v1280, 0
    %v1905 = vsel %vm1285, %v1900, 0
    %1907 = vmatprep.subr.bf16.mxu0 0
    %1908 = vmatpush1.bf16.msra.mxu0 %v1905
    %1909 = vmatprep.subr.bf16.mxu0 0
    %1910 = vmatpush1.bf16.msra.mxu0 0
    %1911 = vmatprep.subr.bf16.mxu0 0
    %1912 = vmatpush1.bf16.msra.mxu0 0
    %1913 = vmatprep.subr.bf16.mxu0 0
    %1914 = vmatpush1.bf16.msra.mxu0 0
    %1915 = vmatprep.subr.bf16.mxu0 0
    %1916 = vmatpush1.bf16.msra.mxu0 0
    %1917 = vmatprep.subr.bf16.mxu0 0
    %1918 = vmatpush1.bf16.msra.mxu0 0
    %1919 = vmatprep.subr.bf16.mxu0 0
    %1920 = vmatpush1.bf16.msra.mxu0 0
    %1921 = vmatprep.subr.bf16.mxu0 0
    %1922 = vmatpush1.bf16.msra.mxu0 0
    %1923 = vmatprep.subr.bf16.mxu0 0
    %1924 = vmatpush1.bf16.msra.mxu0 0
    %1925 = vmatprep.subr.bf16.mxu0 0
    %1926 = vmatpush1.bf16.msra.mxu0 0
    %1927 = vmatprep.subr.bf16.mxu0 0
    %1928 = vmatpush1.bf16.msra.mxu0 0
    %1929 = vmatprep.subr.bf16.mxu0 0
    %1930 = vmatpush1.bf16.msra.mxu0 0
    %1931 = vmatprep.subr.bf16.mxu0 0
    %1932 = vmatpush1.bf16.msra.mxu0 0
    %1933 = vmatprep.subr.bf16.mxu0 0
    %1934 = vmatpush1.bf16.msra.mxu0 0
    %1935 = vmatprep.subr.bf16.mxu0 0
    %1936 = vmatpush1.bf16.msra.mxu0 0
    %1937 = vmatprep.subr.bf16.mxu0 0
    %1938 = vmatpush1.bf16.msra.mxu0 0
    %1939 = vmatprep.mubr.bf16.mxu0 0
    %1940 = vmatmul.mubr.bf16.gmra.mrb[0].mxu0 %v1902
    %v1941 = vpop.f32.mrb[0].mxu0
    %v1942 = vadd.f32 0.0, %v1941
    %v1943 = vpop.f32.mrb[0].mxu0
    %v1944 = vpop.f32.mrb[0].mxu0
    %v1945 = vpop.f32.mrb[0].mxu0
    %1946 = vdwg.mxu0
    %v1948 = vrot.slane %v1280, 4
    %1949 = vrot.lane.b32.xlu0 %v1900, 96
    %v1950 = vpop.permute.xlu0 %1949
    %v1952 = vsel %vm1097, %v1948, 0
    %v1955 = vsel %vm1285, %v1950, 0
    %1957 = vmatprep.subr.bf16.mxu0 0
    %1958 = vmatpush1.bf16.msra.mxu0 %v1955
    %1959 = vmatprep.subr.bf16.mxu0 0
    %1960 = vmatpush1.bf16.msra.mxu0 0
    %1961 = vmatprep.subr.bf16.mxu0 0
    %1962 = vmatpush1.bf16.msra.mxu0 0
    %1963 = vmatprep.subr.bf16.mxu0 0
    %1964 = vmatpush1.bf16.msra.mxu0 0
    %1965 = vmatprep.subr.bf16.mxu0 0
    %1966 = vmatpush1.bf16.msra.mxu0 0
    %1967 = vmatprep.subr.bf16.mxu0 0
    %1968 = vmatpush1.bf16.msra.mxu0 0
    %1969 = vmatprep.subr.bf16.mxu0 0
    %1970 = vmatpush1.bf16.msra.mxu0 0
    %1971 = vmatprep.subr.bf16.mxu0 0
    %1972 = vmatpush1.bf16.msra.mxu0 0
    %1973 = vmatprep.subr.bf16.mxu0 0
    %1974 = vmatpush1.bf16.msra.mxu0 0
    %1975 = vmatprep.subr.bf16.mxu0 0
    %1976 = vmatpush1.bf16.msra.mxu0 0
    %1977 = vmatprep.subr.bf16.mxu0 0
    %1978 = vmatpush1.bf16.msra.mxu0 0
    %1979 = vmatprep.subr.bf16.mxu0 0
    %1980 = vmatpush1.bf16.msra.mxu0 0
    %1981 = vmatprep.subr.bf16.mxu0 0
    %1982 = vmatpush1.bf16.msra.mxu0 0
    %1983 = vmatprep.subr.bf16.mxu0 0
    %1984 = vmatpush1.bf16.msra.mxu0 0
    %1985 = vmatprep.subr.bf16.mxu0 0
    %1986 = vmatpush1.bf16.msra.mxu0 0
    %1987 = vmatprep.subr.bf16.mxu0 0
    %1988 = vmatpush1.bf16.msra.mxu0 0
    %1989 = vmatprep.mubr.bf16.mxu0 0
    %1990 = vmatmul.mubr.bf16.gmra.mrb[0].mxu0 %v1952
    %v1991 = vpop.f32.mrb[0].mxu0
    %v1992 = vadd.f32 0.0, %v1991
    %v1993 = vpop.f32.mrb[0].mxu0
    %v1994 = vpop.f32.mrb[0].mxu0
    %v1995 = vpop.f32.mrb[0].mxu0
    %1996 = vdwg.mxu0
    %1997 = vrot.lane.b32.xlu0 %v1900, 64
    %v1998 = vpop.permute.xlu0 %1997
    %v2000 = vsel %vm1097, %v1281, 0
    %v2003 = vsel %vm1285, %v1998, 0
    %2005 = vmatprep.subr.bf16.mxu0 0
    %2006 = vmatpush1.bf16.msra.mxu0 %v2003
    %2007 = vmatprep.subr.bf16.mxu0 0
    %2008 = vmatpush1.bf16.msra.mxu0 0
    %2009 = vmatprep.subr.bf16.mxu0 0
    %2010 = vmatpush1.bf16.msra.mxu0 0
    %2011 = vmatprep.subr.bf16.mxu0 0
    %2012 = vmatpush1.bf16.msra.mxu0 0
    %2013 = vmatprep.subr.bf16.mxu0 0
    %2014 = vmatpush1.bf16.msra.mxu0 0
    %2015 = vmatprep.subr.bf16.mxu0 0
    %2016 = vmatpush1.bf16.msra.mxu0 0
    %2017 = vmatprep.subr.bf16.mxu0 0
    %2018 = vmatpush1.bf16.msra.mxu0 0
    %2019 = vmatprep.subr.bf16.mxu0 0
    %2020 = vmatpush1.bf16.msra.mxu0 0
    %2021 = vmatprep.subr.bf16.mxu0 0
    %2022 = vmatpush1.bf16.msra.mxu0 0
    %2023 = vmatprep.subr.bf16.mxu0 0
    %2024 = vmatpush1.bf16.msra.mxu0 0
    %2025 = vmatprep.subr.bf16.mxu0 0
    %2026 = vmatpush1.bf16.msra.mxu0 0
    %2027 = vmatprep.subr.bf16.mxu0 0
    %2028 = vmatpush1.bf16.msra.mxu0 0
    %2029 = vmatprep.subr.bf16.mxu0 0
    %2030 = vmatpush1.bf16.msra.mxu0 0
    %2031 = vmatprep.subr.bf16.mxu0 0
    %2032 = vmatpush1.bf16.msra.mxu0 0
    %2033 = vmatprep.subr.bf16.mxu0 0
    %2034 = vmatpush1.bf16.msra.mxu0 0
    %2035 = vmatprep.subr.bf16.mxu0 0
    %2036 = vmatpush1.bf16.msra.mxu0 0
    %2037 = vmatprep.mubr.bf16.mxu0 0
    %2038 = vmatmul.mubr.bf16.gmra.mrb[0].mxu0 %v2000
    %v2039 = vpop.f32.mrb[0].mxu0
    %v2040 = vadd.f32 0.0, %v2039
    %v2041 = vpop.f32.mrb[0].mxu0
    %v2042 = vpop.f32.mrb[0].mxu0
    %v2043 = vpop.f32.mrb[0].mxu0
    %2044 = vdwg.mxu0
    %v2046 = vrot.slane %v1281, 4
    %2047 = vrot.lane.b32.xlu0 %v1900, 32
    %v2048 = vpop.permute.xlu0 %2047
    %v2050 = vsel %vm1097, %v2046, 0
    %v2053 = vsel %vm1285, %v2048, 0
    %2055 = vmatprep.subr.bf16.mxu0 0
    %2056 = vmatpush1.bf16.msra.mxu0 %v2053
    %2057 = vmatprep.subr.bf16.mxu0 0
    %2058 = vmatpush1.bf16.msra.mxu0 0
    %2059 = vmatprep.subr.bf16.mxu0 0
    %2060 = vmatpush1.bf16.msra.mxu0 0
    %2061 = vmatprep.subr.bf16.mxu0 0
    %2062 = vmatpush1.bf16.msra.mxu0 0
    %2063 = vmatprep.subr.bf16.mxu0 0
    %2064 = vmatpush1.bf16.msra.mxu0 0
    %2065 = vmatprep.subr.bf16.mxu0 0
    %2066 = vmatpush1.bf16.msra.mxu0 0
    %2067 = vmatprep.subr.bf16.mxu0 0
    %2068 = vmatpush1.bf16.msra.mxu0 0
    %2069 = vmatprep.subr.bf16.mxu0 0
    %2070 = vmatpush1.bf16.msra.mxu0 0
    %2071 = vmatprep.subr.bf16.mxu0 0
    %2072 = vmatpush1.bf16.msra.mxu0 0
    %2073 = vmatprep.subr.bf16.mxu0 0
    %2074 = vmatpush1.bf16.msra.mxu0 0
    %2075 = vmatprep.subr.bf16.mxu0 0
    %2076 = vmatpush1.bf16.msra.mxu0 0
    %2077 = vmatprep.subr.bf16.mxu0 0
    %2078 = vmatpush1.bf16.msra.mxu0 0
    %2079 = vmatprep.subr.bf16.mxu0 0
    %2080 = vmatpush1.bf16.msra.mxu0 0
    %2081 = vmatprep.subr.bf16.mxu0 0
    %2082 = vmatpush1.bf16.msra.mxu0 0
    %2083 = vmatprep.subr.bf16.mxu0 0
    %2084 = vmatpush1.bf16.msra.mxu0 0
    %2085 = vmatprep.subr.bf16.mxu0 0
    %2086 = vmatpush1.bf16.msra.mxu0 0
    %2087 = vmatprep.mubr.bf16.mxu0 0
    %2088 = vmatmul.mubr.bf16.gmra.mrb[0].mxu0 %v2050
    %v2089 = vpop.f32.mrb[0].mxu0
    %v2090 = vadd.f32 0.0, %v2089
    %v2091 = vpop.f32.mrb[0].mxu0
    %v2092 = vpop.f32.mrb[0].mxu0
    %v2093 = vpop.f32.mrb[0].mxu0
    %2094 = vdwg.mxu0
    %2096 = vrot.lane.b32.xlu0 %v1797, 32
    %v2097 = vpop.permute.xlu0 %2096
    %2100 = vrot.lane.b32.xlu0 %v1845, 64
    %v2101 = vpop.permute.xlu0 %2100
    %2104 = vrot.lane.b32.xlu0 %v1895, 96
    %v2105 = vpop.permute.xlu0 %2104
    %2108 = vrot.lane.b32.xlu0 %v1992, 32
    %v2109 = vpop.permute.xlu0 %2108
    %2112 = vrot.lane.b32.xlu0 %v2040, 64
    %v2113 = vpop.permute.xlu0 %2112
    %2116 = vrot.lane.b32.xlu0 %v2090, 96
    %v2117 = vpop.permute.xlu0 %2116
    %v2119 = vsel %vm102, %v1747, %v2097
    %v2120 = vsel %vm1698, %v2119, %v2101
    %v2121 = vsel %vm1700, %v2120, %v2105
    %v2122 = vsel %vm102, %v1942, %v2109
    %v2123 = vsel %vm1698, %v2122, %v2113
    %v2124 = vsel %vm1700, %v2123, %v2117
    %v2125 = vpack.c.bf16 %v2121, %v1701
    %v2126 = vpack.c.bf16 %v2124, %v1704
    %v2127 = vld [vmem:[%s5] sm:$0xf]
    %v2128 = vld [vmem:[%s5 + $0x4] sm:$0xf]
    %v2129 = vld [vmem:[%s5 + $0x8] sm:$0xf]
    %v2130 = vld [vmem:[%s5 + $0xc] sm:$0xf]
    %v2131 = vld [vmem:[%s5 + $0x10] sm:$0xf]
    %v2132 = vld [vmem:[%s5 + $0x14] sm:$0xf]
    %v2133 = vld [vmem:[%s5 + $0x18] sm:$0xf]
    %v2134 = vld [vmem:[%s5 + $0x1c] sm:$0xf]
    %v2135 = vld [vmem:[%s5 + $0x20] sm:$0xf]
    %v2136 = vld [vmem:[%s5 + $0x24] sm:$0xf]
    %v2137 = vld [vmem:[%s5 + $0x28] sm:$0xf]
    %v2138 = vld [vmem:[%s5 + $0x2c] sm:$0xf]
    %v2139 = vld [vmem:[%s5 + $0x30] sm:$0xf]
    %v2140 = vld [vmem:[%s5 + $0x34] sm:$0xf]
    %v2141 = vld [vmem:[%s5 + $0x38] sm:$0xf]
    %v2142 = vld [vmem:[%s5 + $0x3c] sm:$0xf]
    %v2143 = vld [vmem:[%s5 + $0x40] sm:$0xf]
    %v2144 = vld [vmem:[%s5 + $0x44] sm:$0xf]
    %v2145 = vld [vmem:[%s5 + $0x48] sm:$0xf]
    %v2146 = vld [vmem:[%s5 + $0x4c] sm:$0xf]
    %v2147 = vld [vmem:[%s5 + $0x50] sm:$0xf]
    %v2148 = vld [vmem:[%s5 + $0x54] sm:$0xf]
    %v2149 = vld [vmem:[%s5 + $0x58] sm:$0xf]
    %v2150 = vld [vmem:[%s5 + $0x5c] sm:$0xf]
    %v2151 = vld [vmem:[%s5 + $0x60] sm:$0xf]
    %v2152 = vld [vmem:[%s5 + $0x64] sm:$0xf]
    %v2153 = vld [vmem:[%s5 + $0x68] sm:$0xf]
    %v2154 = vld [vmem:[%s5 + $0x6c] sm:$0xf]
    %v2155 = vld [vmem:[%s5 + $0x70] sm:$0xf]
    %v2156 = vld [vmem:[%s5 + $0x74] sm:$0xf]
    %v2157 = vld [vmem:[%s5 + $0x78] sm:$0xf]
    %v2158 = vld [vmem:[%s5 + $0x7c] sm:$0xf]
    %v2159 = vld [vmem:[%s6] sm:$0x1]
    %v2161 = vlaneseq
    %v2162 = vshrl.u32 %v2161, 7
    %v2163 = vsub.s32 0, %v2162
    %v2164 = vrot.slane %v2159, %v2163
    %v2198 = vunpack.c.l.b16 %v2127
    %v2199 = vunpack.c.l.b16 %v2128
    %v2200 = vunpack.c.l.b16 %v2129
    %v2201 = vunpack.c.l.b16 %v2130
    %v2202 = vunpack.c.l.b16 %v2131
    %v2203 = vunpack.c.l.b16 %v2132
    %v2204 = vunpack.c.l.b16 %v2133
    %v2205 = vunpack.c.l.b16 %v2134
    %v2206 = vunpack.c.l.b16 %v2135
    %v2207 = vunpack.c.l.b16 %v2136
    %v2208 = vunpack.c.l.b16 %v2137
    %v2209 = vunpack.c.l.b16 %v2138
    %v2210 = vunpack.c.l.b16 %v2139
    %v2211 = vunpack.c.l.b16 %v2140
    %v2212 = vunpack.c.l.b16 %v2141
    %v2213 = vunpack.c.l.b16 %v2142
    %v2214 = vunpack.c.l.b16 %v2143
    %v2215 = vunpack.c.l.b16 %v2144
    %v2216 = vunpack.c.l.b16 %v2145
    %v2217 = vunpack.c.l.b16 %v2146
    %v2218 = vunpack.c.l.b16 %v2147
    %v2219 = vunpack.c.l.b16 %v2148
    %v2220 = vunpack.c.l.b16 %v2149
    %v2221 = vunpack.c.l.b16 %v2150
    %v2222 = vunpack.c.l.b16 %v2151
    %v2223 = vunpack.c.l.b16 %v2152
    %v2224 = vunpack.c.l.b16 %v2153
    %v2225 = vunpack.c.l.b16 %v2154
    %v2226 = vunpack.c.l.b16 %v2155
    %v2227 = vunpack.c.l.b16 %v2156
    %v2228 = vunpack.c.l.b16 %v2157
    %v2229 = vunpack.c.l.b16 %v2158
    %v2230 = vpack.c.b16 %v2199, %v2198
    %v2231 = vpack.c.b16 %v2201, %v2200
    %v2232 = vpack.c.b16 %v2203, %v2202
    %v2233 = vpack.c.b16 %v2205, %v2204
    %v2234 = vpack.c.b16 %v2207, %v2206
    %v2235 = vpack.c.b16 %v2209, %v2208
    %v2236 = vpack.c.b16 %v2211, %v2210
    %v2237 = vpack.c.b16 %v2213, %v2212
    %v2238 = vpack.c.b16 %v2215, %v2214
    %v2239 = vpack.c.b16 %v2217, %v2216
    %v2240 = vpack.c.b16 %v2219, %v2218
    %v2241 = vpack.c.b16 %v2221, %v2220
    %v2242 = vpack.c.b16 %v2223, %v2222
    %v2243 = vpack.c.b16 %v2225, %v2224
    %v2244 = vpack.c.b16 %v2227, %v2226
    %v2245 = vpack.c.b16 %v2229, %v2228
    %2262 = vmatprep.subr.bf16.mxu0 0
    %2263 = vmatpush1.bf16.msra.mxu0 %v2230
    %2264 = vmatprep.subr.bf16.mxu0 0
    %2265 = vmatpush1.bf16.msra.mxu0 %v2231
    %2266 = vmatprep.subr.bf16.mxu0 0
    %2267 = vmatpush1.bf16.msra.mxu0 %v2232
    %2268 = vmatprep.subr.bf16.mxu0 0
    %2269 = vmatpush1.bf16.msra.mxu0 %v2233
    %2270 = vmatprep.subr.bf16.mxu0 0
    %2271 = vmatpush1.bf16.msra.mxu0 %v2234
    %2272 = vmatprep.subr.bf16.mxu0 0
    %2273 = vmatpush1.bf16.msra.mxu0 %v2235
    %2274 = vmatprep.subr.bf16.mxu0 0
    %2275 = vmatpush1.bf16.msra.mxu0 %v2236
    %2276 = vmatprep.subr.bf16.mxu0 0
    %2277 = vmatpush1.bf16.msra.mxu0 %v2237
    %2278 = vmatprep.subr.bf16.mxu0 0
    %2279 = vmatpush1.bf16.msra.mxu0 %v2238
    %2280 = vmatprep.subr.bf16.mxu0 0
    %2281 = vmatpush1.bf16.msra.mxu0 %v2239
    %2282 = vmatprep.subr.bf16.mxu0 0
    %2283 = vmatpush1.bf16.msra.mxu0 %v2240
    %2284 = vmatprep.subr.bf16.mxu0 0
    %2285 = vmatpush1.bf16.msra.mxu0 %v2241
    %2286 = vmatprep.subr.bf16.mxu0 0
    %2287 = vmatpush1.bf16.msra.mxu0 %v2242
    %2288 = vmatprep.subr.bf16.mxu0 0
    %2289 = vmatpush1.bf16.msra.mxu0 %v2243
    %2290 = vmatprep.subr.bf16.mxu0 0
    %2291 = vmatpush1.bf16.msra.mxu0 %v2244
    %2292 = vmatprep.subr.bf16.mxu0 0
    %2293 = vmatpush1.bf16.msra.mxu0 %v2245
    %2294 = vmatprep.mubr.bf16.mxu0 %v2126
    %2295 = vmatmul.mubr.bf16.gmra.mrb[0].mxu0 %v2125
    %v2296 = vpop.f32.mrb[0].mxu0
    %v2297 = vadd.f32 %v2164, %v2296
    %v2298 = vpop.f32.mrb[0].mxu0
    %v2299 = vpop.f32.mrb[0].mxu0
    %v2300 = vadd.f32 %v2164, %v2299
    %v2301 = vpop.f32.mrb[0].mxu0
    %2302 = vdwg.mxu0
    %v2303 = vadd.f32 %v2297, %v73
    %v2304 = vadd.f32 %v2300, %v74
    %v2305 = vld [vmem:[%s7] sm:$0x1]
    %v2306 = vld [vmem:[%s8] sm:$0x1]
    %v2307 = vsel %vm102, %v2303, 0.0
    %2308 = vadd.xlane.f32.xlu0 %v2307
    %v2309 = vpop.xlane.xlu0 %2308
    %v2310 = vsel %vm102, %v2304, 0.0
    %2311 = vadd.xlane.f32.xlu0 %v2310
    %v2312 = vpop.xlane.xlu0 %2311
    %v2313 = vrcp.pop 32.0
    %v2314 = vmul.f32 %v2309, %v2313
    %v2315 = vmul.f32 %v2312, %v2313
    %v2316 = vsub.f32 %v2303, %v2314
    %v2317 = vsub.f32 %v2304, %v2315
    %v2318 = vmul.f32 %v2316, %v2316
    %v2319 = vmul.f32 %v2317, %v2317
    %v2320 = vsel %vm102, %v2318, 0.0
    %2321 = vadd.xlane.f32.xlu0 %v2320
    %v2322 = vpop.xlane.xlu0 %2321
    %v2323 = vsel %vm102, %v2319, 0.0
    %2324 = vadd.xlane.f32.xlu0 %v2323
    %v2325 = vpop.xlane.xlu0 %2324
    %v2326 = vmul.f32 %v2322, 0.032258064
    %v2327 = vmul.f32 %v2325, 0.032258064
    %v2328 = vrsqrt.pop %v2326
    %v2329 = vmul.f32 %v2326, %v2328
    %vm2330 = vcmp.eq.f32.partialorder %v2326, inf
    %v2331 = vsel %vm2330, %v2326, %v2329
    %vm2332 = vcmp.eq.f32.partialorder %v2326, 0.0
    %v2333 = vand.u32 %v2326, 2147483648
    %v2334 = vsel %vm2332, %v2333, %v2331
    %v2335 = vrsqrt.pop %v2327
    %v2336 = vmul.f32 %v2327, %v2335
    %vm2337 = vcmp.eq.f32.partialorder %v2327, inf
    %v2338 = vsel %vm2337, %v2327, %v2336
    %vm2339 = vcmp.eq.f32.partialorder %v2327, 0.0
    %v2340 = vand.u32 %v2327, 2147483648
    %v2341 = vsel %vm2339, %v2340, %v2338
    %v2342 = vadd.f32 %v2334, 0.001
    %v2343 = vadd.f32 %v2341, 0.001
    %v2344 = vrcp.pop %v2342
    %v2345 = vmul.f32 %v2316, %v2344
    %v2346 = vrcp.pop %v2343
    %v2347 = vmul.f32 %v2317, %v2346
    %v2349 = vlaneseq
    %v2350 = vshrl.u32 %v2349, 7
    %v2351 = vsub.s32 0, %v2350
    %v2352 = vrot.slane %v2305, %v2351
    %v2354 = vmul.f32 %v2345, %v2352
    %v2355 = vmul.f32 %v2347, %v2352
    %v2357 = vlaneseq
    %v2358 = vshrl.u32 %v2357, 7
    %v2359 = vsub.s32 0, %v2358
    %v2360 = vrot.slane %v2306, %v2359
    %v2362 = vadd.f32 %v2354, %v2360
    %v2363 = vadd.f32 %v2355, %v2360
    %v2364 = vpack.c.bf16 %v2363, %v2362
    %v2365 = vpack.c.bf16 %v76, %v75
    %v2366 = vld [vmem:[%s9] sm:$0xff]
    %v2367 = vld [vmem:[%s9 + $0x8] sm:$0xff]
    %v2368 = vld [vmem:[%s9 + $0x10] sm:$0xff]
    %v2369 = vld [vmem:[%s9 + $0x18] sm:$0xff]
    %v2374 = vunpack.c.l.b16 %v2366
    %v2375 = vunpack.c.h.b16 %v2366
    %v2376 = vunpack.c.l.b16 %v2367
    %v2377 = vunpack.c.h.b16 %v2367
    %v2378 = vunpack.c.l.b16 %v2368
    %v2379 = vunpack.c.h.b16 %v2368
    %v2380 = vunpack.c.l.b16 %v2369
    %v2381 = vunpack.c.h.b16 %v2369
    %v2382 = vpack.c.b16 %v2376, %v2374
    %v2383 = vpack.c.b16 %v2377, %v2375
    %v2384 = vpack.c.b16 %v2380, %v2378
    %v2385 = vpack.c.b16 %v2381, %v2379
    %v2391 = vsel %vm102, %v2364, 0
    %2393 = vmatprep.subr.bf16.mxu0 %v2383
    %2394 = vmatpush1.bf16.msra.mxu0 %v2382
    %2395 = vmatprep.subr.bf16.mxu0 %v2385
    %2396 = vmatpush1.bf16.msra.mxu0 %v2384
    %2397 = vmatprep.subr.bf16.mxu0 0
    %2398 = vmatpush1.bf16.msra.mxu0 0
    %2399 = vmatprep.subr.bf16.mxu0 0
    %2400 = vmatpush1.bf16.msra.mxu0 0
    %2401 = vmatprep.subr.bf16.mxu0 0
    %2402 = vmatpush1.bf16.msra.mxu0 0
    %2403 = vmatprep.subr.bf16.mxu0 0
    %2404 = vmatpush1.bf16.msra.mxu0 0
    %2405 = vmatprep.subr.bf16.mxu0 0
    %2406 = vmatpush1.bf16.msra.mxu0 0
    %2407 = vmatprep.subr.bf16.mxu0 0
    %2408 = vmatpush1.bf16.msra.mxu0 0
    %2409 = vmatprep.subr.bf16.mxu0 0
    %2410 = vmatpush1.bf16.msra.mxu0 0
    %2411 = vmatprep.subr.bf16.mxu0 0
    %2412 = vmatpush1.bf16.msra.mxu0 0
    %2413 = vmatprep.subr.bf16.mxu0 0
    %2414 = vmatpush1.bf16.msra.mxu0 0
    %2415 = vmatprep.subr.bf16.mxu0 0
    %2416 = vmatpush1.bf16.msra.mxu0 0
    %2417 = vmatprep.subr.bf16.mxu0 0
    %2418 = vmatpush1.bf16.msra.mxu0 0
    %2419 = vmatprep.subr.bf16.mxu0 0
    %2420 = vmatpush1.bf16.msra.mxu0 0
    %2421 = vmatprep.subr.bf16.mxu0 0
    %2422 = vmatpush1.bf16.msra.mxu0 0
    %2423 = vmatprep.subr.bf16.mxu0 0
    %2424 = vmatpush1.bf16.msra.mxu0 0
    %2425 = vmatprep.mubr.bf16.mxu0 0
    %2426 = vmatmul.mubr.bf16.gmra.mrb[0].mxu0 %v2391
    %v2427 = vpop.f32.mrb[0].mxu0
    %v2428 = vadd.f32 0.0, %v2427
    %v2429 = vpop.f32.mrb[0].mxu0
    %v2430 = vadd.f32 0.0, %v2429
    %v2431 = vpop.f32.mrb[0].mxu0
    %v2432 = vadd.f32 0.0, %v2431
    %v2433 = vpop.f32.mrb[0].mxu0
    %v2434 = vadd.f32 0.0, %v2433
    %2435 = vdwg.mxu0
    %v2436 = vpack.c.bf16 %v2432, %v2428
    %v2437 = vpack.c.bf16 %v2434, %v2430
    %v2438 = vld [vmem:[%s10] sm:$0xff]
    %v2439 = vld [vmem:[%s10 + $0x8] sm:$0xff]
    %v2440 = vld [vmem:[%s10 + $0x10] sm:$0xff]
    %v2441 = vld [vmem:[%s10 + $0x18] sm:$0xff]
    %v2446 = vunpack.c.l.b16 %v2438
    %v2447 = vunpack.c.h.b16 %v2438
    %v2448 = vunpack.c.l.b16 %v2439
    %v2449 = vunpack.c.h.b16 %v2439
    %v2450 = vunpack.c.l.b16 %v2440
    %v2451 = vunpack.c.h.b16 %v2440
    %v2452 = vunpack.c.l.b16 %v2441
    %v2453 = vunpack.c.h.b16 %v2441
    %v2454 = vpack.c.b16 %v2448, %v2446
    %v2455 = vpack.c.b16 %v2449, %v2447
    %v2456 = vpack.c.b16 %v2452, %v2450
    %v2457 = vpack.c.b16 %v2453, %v2451
    %v2463 = vsel %vm102, %v2365, 0
    %2465 = vmatprep.subr.bf16.mxu0 %v2455
    %2466 = vmatpush1.bf16.msra.mxu0 %v2454
    %2467 = vmatprep.subr.bf16.mxu0 %v2457
    %2468 = vmatpush1.bf16.msra.mxu0 %v2456
    %2469 = vmatprep.subr.bf16.mxu0 0
    %2470 = vmatpush1.bf16.msra.mxu0 0
    %2471 = vmatprep.subr.bf16.mxu0 0
    %2472 = vmatpush1.bf16.msra.mxu0 0
    %2473 = vmatprep.subr.bf16.mxu0 0
    %2474 = vmatpush1.bf16.msra.mxu0 0
    %2475 = vmatprep.subr.bf16.mxu0 0
    %2476 = vmatpush1.bf16.msra.mxu0 0
    %2477 = vmatprep.subr.bf16.mxu0 0
    %2478 = vmatpush1.bf16.msra.mxu0 0
    %2479 = vmatprep.subr.bf16.mxu0 0
    %2480 = vmatpush1.bf16.msra.mxu0 0
    %2481 = vmatprep.subr.bf16.mxu0 0
    %2482 = vmatpush1.bf16.msra.mxu0 0
    %2483 = vmatprep.subr.bf16.mxu0 0
    %2484 = vmatpush1.bf16.msra.mxu0 0
    %2485 = vmatprep.subr.bf16.mxu0 0
    %2486 = vmatpush1.bf16.msra.mxu0 0
    %2487 = vmatprep.subr.bf16.mxu0 0
    %2488 = vmatpush1.bf16.msra.mxu0 0
    %2489 = vmatprep.subr.bf16.mxu0 0
    %2490 = vmatpush1.bf16.msra.mxu0 0
    %2491 = vmatprep.subr.bf16.mxu0 0
    %2492 = vmatpush1.bf16.msra.mxu0 0
    %2493 = vmatprep.subr.bf16.mxu0 0
    %2494 = vmatpush1.bf16.msra.mxu0 0
    %2495 = vmatprep.subr.bf16.mxu0 0
    %2496 = vmatpush1.bf16.msra.mxu0 0
    %2497 = vmatprep.mubr.bf16.mxu0 0
    %2498 = vmatmul.mubr.bf16.gmra.mrb[0].mxu0 %v2463
    %v2499 = vpop.f32.mrb[0].mxu0
    %v2500 = vadd.f32 0.0, %v2499
    %v2501 = vpop.f32.mrb[0].mxu0
    %v2502 = vadd.f32 0.0, %v2501
    %v2503 = vpop.f32.mrb[0].mxu0
    %v2504 = vadd.f32 0.0, %v2503
    %v2505 = vpop.f32.mrb[0].mxu0
    %v2506 = vadd.f32 0.0, %v2505
    %2507 = vdwg.mxu0
    %v2508 = vpack.c.bf16 %v2504, %v2500
    %v2509 = vpack.c.bf16 %v2506, %v2502
    %v2510 = vld [vmem:[%s11] sm:$0xff]
    %v2511 = vld [vmem:[%s11 + $0x8] sm:$0xff]
    %v2512 = vld [vmem:[%s11 + $0x10] sm:$0xff]
    %v2513 = vld [vmem:[%s11 + $0x18] sm:$0xff]
    %v2518 = vunpack.c.l.b16 %v2510
    %v2519 = vunpack.c.h.b16 %v2510
    %v2520 = vunpack.c.l.b16 %v2511
    %v2521 = vunpack.c.h.b16 %v2511
    %v2522 = vunpack.c.l.b16 %v2512
    %v2523 = vunpack.c.h.b16 %v2512
    %v2524 = vunpack.c.l.b16 %v2513
    %v2525 = vunpack.c.h.b16 %v2513
    %v2526 = vpack.c.b16 %v2520, %v2518
    %v2527 = vpack.c.b16 %v2521, %v2519
    %v2528 = vpack.c.b16 %v2524, %v2522
    %v2529 = vpack.c.b16 %v2525, %v2523
    %2534 = vmatprep.subr.bf16.mxu0 %v2527
    %2535 = vmatpush1.bf16.msra.mxu0 %v2526
    %2536 = vmatprep.subr.bf16.mxu0 %v2529
    %2537 = vmatpush1.bf16.msra.mxu0 %v2528
    %2538 = vmatprep.subr.bf16.mxu0 0
    %2539 = vmatpush1.bf16.msra.mxu0 0
    %2540 = vmatprep.subr.bf16.mxu0 0
    %2541 = vmatpush1.bf16.msra.mxu0 0
    %2542 = vmatprep.subr.bf16.mxu0 0
    %2543 = vmatpush1.bf16.msra.mxu0 0
    %2544 = vmatprep.subr.bf16.mxu0 0
    %2545 = vmatpush1.bf16.msra.mxu0 0
    %2546 = vmatprep.subr.bf16.mxu0 0
    %2547 = vmatpush1.bf16.msra.mxu0 0
    %2548 = vmatprep.subr.bf16.mxu0 0
    %2549 = vmatpush1.bf16.msra.mxu0 0
    %2550 = vmatprep.subr.bf16.mxu0 0
    %2551 = vmatpush1.bf16.msra.mxu0 0
    %2552 = vmatprep.subr.bf16.mxu0 0
    %2553 = vmatpush1.bf16.msra.mxu0 0
    %2554 = vmatprep.subr.bf16.mxu0 0
    %2555 = vmatpush1.bf16.msra.mxu0 0
    %2556 = vmatprep.subr.bf16.mxu0 0
    %2557 = vmatpush1.bf16.msra.mxu0 0
    %2558 = vmatprep.subr.bf16.mxu0 0
    %2559 = vmatpush1.bf16.msra.mxu0 0
    %2560 = vmatprep.subr.bf16.mxu0 0
    %2561 = vmatpush1.bf16.msra.mxu0 0
    %2562 = vmatprep.subr.bf16.mxu0 0
    %2563 = vmatpush1.bf16.msra.mxu0 0
    %2564 = vmatprep.subr.bf16.mxu0 0
    %2565 = vmatpush1.bf16.msra.mxu0 0
    %2566 = vmatprep.mubr.bf16.mxu0 0
    %2567 = vmatmul.mubr.bf16.gmra.mrb[0].mxu0 %v2463
    %v2568 = vpop.f32.mrb[0].mxu0
    %v2569 = vadd.f32 0.0, %v2568
    %v2570 = vpop.f32.mrb[0].mxu0
    %v2571 = vadd.f32 0.0, %v2570
    %v2572 = vpop.f32.mrb[0].mxu0
    %v2573 = vadd.f32 0.0, %v2572
    %v2574 = vpop.f32.mrb[0].mxu0
    %v2575 = vadd.f32 0.0, %v2574
    %2576 = vdwg.mxu0
    %v2577 = vpack.c.bf16 %v2573, %v2569
    %v2578 = vpack.c.bf16 %v2575, %v2571
    %v2580 = vsel %vm102, %v2436, 0
    %v2583 = vsel %vm102, %v2508, 0
    %2585 = vmatprep.subr.bf16.mxu0 0
    %2586 = vmatpush1.bf16.xpose.msra.mxu0 %v2583
    %2587 = vmatprep.subr.bf16.mxu0 0
    %2588 = vmatpush1.bf16.xpose.msra.mxu0 0
    %2589 = vmatprep.subr.bf16.mxu0 0
    %2590 = vmatpush1.bf16.xpose.msra.mxu0 0
    %2591 = vmatprep.subr.bf16.mxu0 0
    %2592 = vmatpush1.bf16.xpose.msra.mxu0 0
    %2593 = vmatprep.subr.bf16.mxu0 0
    %2594 = vmatpush1.bf16.xpose.msra.mxu0 0
    %2595 = vmatprep.subr.bf16.mxu0 0
    %2596 = vmatpush1.bf16.xpose.msra.mxu0 0
    %2597 = vmatprep.subr.bf16.mxu0 0
    %2598 = vmatpush1.bf16.xpose.msra.mxu0 0
    %2599 = vmatprep.subr.bf16.mxu0 0
    %2600 = vmatpush1.bf16.xpose.msra.mxu0 0
    %2601 = vmatprep.subr.bf16.mxu0 0
    %2602 = vmatpush1.bf16.xpose.msra.mxu0 0
    %2603 = vmatprep.subr.bf16.mxu0 0
    %2604 = vmatpush1.bf16.xpose.msra.mxu0 0
    %2605 = vmatprep.subr.bf16.mxu0 0
    %2606 = vmatpush1.bf16.xpose.msra.mxu0 0
    %2607 = vmatprep.subr.bf16.mxu0 0
    %2608 = vmatpush1.bf16.xpose.msra.mxu0 0
    %2609 = vmatprep.subr.bf16.mxu0 0
    %2610 = vmatpush1.bf16.xpose.msra.mxu0 0
    %2611 = vmatprep.subr.bf16.mxu0 0
    %2612 = vmatpush1.bf16.xpose.msra.mxu0 0
    %2613 = vmatprep.subr.bf16.mxu0 0
    %2614 = vmatpush1.bf16.xpose.msra.mxu0 0
    %2615 = vmatprep.subr.bf16.mxu0 0
    %2616 = vmatpush1.bf16.xpose.msra.mxu0 0
    %2617 = vmatprep.mubr.bf16.mxu0 0
    %2618 = vmatmul.mubr.bf16.gmra.mrb[0].mxu0 %v2580
    %v2619 = vpop.f32.mrb[0].mxu0
    %v2620 = vadd.f32 0.0, %v2619
    %v2621 = vpop.f32.mrb[0].mxu0
    %v2622 = vpop.f32.mrb[0].mxu0
    %v2623 = vpop.f32.mrb[0].mxu0
    %2624 = vdwg.mxu0
    %2626 = vrot.lane.b32.xlu0 %v2436, 96
    %v2627 = vpop.permute.xlu0 %2626
    %2629 = vrot.lane.b32.xlu0 %v2508, 96
    %v2630 = vpop.permute.xlu0 %2629
    %v2632 = vsel %vm102, %v2627, 0
    %v2635 = vsel %vm102, %v2630, 0
    %2637 = vmatprep.subr.bf16.mxu0 0
    %2638 = vmatpush1.bf16.xpose.msra.mxu0 %v2635
    %2639 = vmatprep.subr.bf16.mxu0 0
    %2640 = vmatpush1.bf16.xpose.msra.mxu0 0
    %2641 = vmatprep.subr.bf16.mxu0 0
    %2642 = vmatpush1.bf16.xpose.msra.mxu0 0
    %2643 = vmatprep.subr.bf16.mxu0 0
    %2644 = vmatpush1.bf16.xpose.msra.mxu0 0
    %2645 = vmatprep.subr.bf16.mxu0 0
    %2646 = vmatpush1.bf16.xpose.msra.mxu0 0
    %2647 = vmatprep.subr.bf16.mxu0 0
    %2648 = vmatpush1.bf16.xpose.msra.mxu0 0
    %2649 = vmatprep.subr.bf16.mxu0 0
    %2650 = vmatpush1.bf16.xpose.msra.mxu0 0
    %2651 = vmatprep.subr.bf16.mxu0 0
    %2652 = vmatpush1.bf16.xpose.msra.mxu0 0
    %2653 = vmatprep.subr.bf16.mxu0 0
    %2654 = vmatpush1.bf16.xpose.msra.mxu0 0
    %2655 = vmatprep.subr.bf16.mxu0 0
    %2656 = vmatpush1.bf16.xpose.msra.mxu0 0
    %2657 = vmatprep.subr.bf16.mxu0 0
    %2658 = vmatpush1.bf16.xpose.msra.mxu0 0
    %2659 = vmatprep.subr.bf16.mxu0 0
    %2660 = vmatpush1.bf16.xpose.msra.mxu0 0
    %2661 = vmatprep.subr.bf16.mxu0 0
    %2662 = vmatpush1.bf16.xpose.msra.mxu0 0
    %2663 = vmatprep.subr.bf16.mxu0 0
    %2664 = vmatpush1.bf16.xpose.msra.mxu0 0
    %2665 = vmatprep.subr.bf16.mxu0 0
    %2666 = vmatpush1.bf16.xpose.msra.mxu0 0
    %2667 = vmatprep.subr.bf16.mxu0 0
    %2668 = vmatpush1.bf16.xpose.msra.mxu0 0
    %2669 = vmatprep.mubr.bf16.mxu0 0
    %2670 = vmatmul.mubr.bf16.gmra.mrb[0].mxu0 %v2632
    %v2671 = vpop.f32.mrb[0].mxu0
    %v2672 = vadd.f32 0.0, %v2671
    %v2673 = vpop.f32.mrb[0].mxu0
    %v2674 = vpop.f32.mrb[0].mxu0
    %v2675 = vpop.f32.mrb[0].mxu0
    %2676 = vdwg.mxu0
    %2677 = vrot.lane.b32.xlu0 %v2436, 64
    %v2678 = vpop.permute.xlu0 %2677
    %2679 = vrot.lane.b32.xlu0 %v2508, 64
    %v2680 = vpop.permute.xlu0 %2679
    %v2682 = vsel %vm102, %v2678, 0
    %v2685 = vsel %vm102, %v2680, 0
    %2687 = vmatprep.subr.bf16.mxu0 0
    %2688 = vmatpush1.bf16.xpose.msra.mxu0 %v2685
    %2689 = vmatprep.subr.bf16.mxu0 0
    %2690 = vmatpush1.bf16.xpose.msra.mxu0 0
    %2691 = vmatprep.subr.bf16.mxu0 0
    %2692 = vmatpush1.bf16.xpose.msra.mxu0 0
    %2693 = vmatprep.subr.bf16.mxu0 0
    %2694 = vmatpush1.bf16.xpose.msra.mxu0 0
    %2695 = vmatprep.subr.bf16.mxu0 0
    %2696 = vmatpush1.bf16.xpose.msra.mxu0 0
    %2697 = vmatprep.subr.bf16.mxu0 0
    %2698 = vmatpush1.bf16.xpose.msra.mxu0 0
    %2699 = vmatprep.subr.bf16.mxu0 0
    %2700 = vmatpush1.bf16.xpose.msra.mxu0 0
    %2701 = vmatprep.subr.bf16.mxu0 0
    %2702 = vmatpush1.bf16.xpose.msra.mxu0 0
    %2703 = vmatprep.subr.bf16.mxu0 0
    %2704 = vmatpush1.bf16.xpose.msra.mxu0 0
    %2705 = vmatprep.subr.bf16.mxu0 0
    %2706 = vmatpush1.bf16.xpose.msra.mxu0 0
    %2707 = vmatprep.subr.bf16.mxu0 0
    %2708 = vmatpush1.bf16.xpose.msra.mxu0 0
    %2709 = vmatprep.subr.bf16.mxu0 0
    %2710 = vmatpush1.bf16.xpose.msra.mxu0 0
    %2711 = vmatprep.subr.bf16.mxu0 0
    %2712 = vmatpush1.bf16.xpose.msra.mxu0 0
    %2713 = vmatprep.subr.bf16.mxu0 0
    %2714 = vmatpush1.bf16.xpose.msra.mxu0 0
    %2715 = vmatprep.subr.bf16.mxu0 0
    %2716 = vmatpush1.bf16.xpose.msra.mxu0 0
    %2717 = vmatprep.subr.bf16.mxu0 0
    %2718 = vmatpush1.bf16.xpose.msra.mxu0 0
    %2719 = vmatprep.mubr.bf16.mxu0 0
    %2720 = vmatmul.mubr.bf16.gmra.mrb[0].mxu0 %v2682
    %v2721 = vpop.f32.mrb[0].mxu0
    %v2722 = vadd.f32 0.0, %v2721
    %v2723 = vpop.f32.mrb[0].mxu0
    %v2724 = vpop.f32.mrb[0].mxu0
    %v2725 = vpop.f32.mrb[0].mxu0
    %2726 = vdwg.mxu0
    %2727 = vrot.lane.b32.xlu0 %v2436, 32
    %v2728 = vpop.permute.xlu0 %2727
    %2729 = vrot.lane.b32.xlu0 %v2508, 32
    %v2730 = vpop.permute.xlu0 %2729
    %v2732 = vsel %vm102, %v2728, 0
    %v2735 = vsel %vm102, %v2730, 0
    %2737 = vmatprep.subr.bf16.mxu0 0
    %2738 = vmatpush1.bf16.xpose.msra.mxu0 %v2735
    %2739 = vmatprep.subr.bf16.mxu0 0
    %2740 = vmatpush1.bf16.xpose.msra.mxu0 0
    %2741 = vmatprep.subr.bf16.mxu0 0
    %2742 = vmatpush1.bf16.xpose.msra.mxu0 0
    %2743 = vmatprep.subr.bf16.mxu0 0
    %2744 = vmatpush1.bf16.xpose.msra.mxu0 0
    %2745 = vmatprep.subr.bf16.mxu0 0
    %2746 = vmatpush1.bf16.xpose.msra.mxu0 0
    %2747 = vmatprep.subr.bf16.mxu0 0
    %2748 = vmatpush1.bf16.xpose.msra.mxu0 0
    %2749 = vmatprep.subr.bf16.mxu0 0
    %2750 = vmatpush1.bf16.xpose.msra.mxu0 0
    %2751 = vmatprep.subr.bf16.mxu0 0
    %2752 = vmatpush1.bf16.xpose.msra.mxu0 0
    %2753 = vmatprep.subr.bf16.mxu0 0
    %2754 = vmatpush1.bf16.xpose.msra.mxu0 0
    %2755 = vmatprep.subr.bf16.mxu0 0
    %2756 = vmatpush1.bf16.xpose.msra.mxu0 0
    %2757 = vmatprep.subr.bf16.mxu0 0
    %2758 = vmatpush1.bf16.xpose.msra.mxu0 0
    %2759 = vmatprep.subr.bf16.mxu0 0
    %2760 = vmatpush1.bf16.xpose.msra.mxu0 0
    %2761 = vmatprep.subr.bf16.mxu0 0
    %2762 = vmatpush1.bf16.xpose.msra.mxu0 0
    %2763 = vmatprep.subr.bf16.mxu0 0
    %2764 = vmatpush1.bf16.xpose.msra.mxu0 0
    %2765 = vmatprep.subr.bf16.mxu0 0
    %2766 = vmatpush1.bf16.xpose.msra.mxu0 0
    %2767 = vmatprep.subr.bf16.mxu0 0
    %2768 = vmatpush1.bf16.xpose.msra.mxu0 0
    %2769 = vmatprep.mubr.bf16.mxu0 0
    %2770 = vmatmul.mubr.bf16.gmra.mrb[0].mxu0 %v2732
    %v2771 = vpop.f32.mrb[0].mxu0
    %v2772 = vadd.f32 0.0, %v2771
    %v2773 = vpop.f32.mrb[0].mxu0
    %v2774 = vpop.f32.mrb[0].mxu0
    %v2775 = vpop.f32.mrb[0].mxu0
    %2776 = vdwg.mxu0
    %v2778 = vsel %vm102, %v2437, 0
    %v2781 = vsel %vm102, %v2509, 0
    %2783 = vmatprep.subr.bf16.mxu0 0
    %2784 = vmatpush1.bf16.xpose.msra.mxu0 %v2781
    %2785 = vmatprep.subr.bf16.mxu0 0
    %2786 = vmatpush1.bf16.xpose.msra.mxu0 0
    %2787 = vmatprep.subr.bf16.mxu0 0
    %2788 = vmatpush1.bf16.xpose.msra.mxu0 0
    %2789 = vmatprep.subr.bf16.mxu0 0
    %2790 = vmatpush1.bf16.xpose.msra.mxu0 0
    %2791 = vmatprep.subr.bf16.mxu0 0
    %2792 = vmatpush1.bf16.xpose.msra.mxu0 0
    %2793 = vmatprep.subr.bf16.mxu0 0
    %2794 = vmatpush1.bf16.xpose.msra.mxu0 0
    %2795 = vmatprep.subr.bf16.mxu0 0
    %2796 = vmatpush1.bf16.xpose.msra.mxu0 0
    %2797 = vmatprep.subr.bf16.mxu0 0
    %2798 = vmatpush1.bf16.xpose.msra.mxu0 0
    %2799 = vmatprep.subr.bf16.mxu0 0
    %2800 = vmatpush1.bf16.xpose.msra.mxu0 0
    %2801 = vmatprep.subr.bf16.mxu0 0
    %2802 = vmatpush1.bf16.xpose.msra.mxu0 0
    %2803 = vmatprep.subr.bf16.mxu0 0
    %2804 = vmatpush1.bf16.xpose.msra.mxu0 0
    %2805 = vmatprep.subr.bf16.mxu0 0
    %2806 = vmatpush1.bf16.xpose.msra.mxu0 0
    %2807 = vmatprep.subr.bf16.mxu0 0
    %2808 = vmatpush1.bf16.xpose.msra.mxu0 0
    %2809 = vmatprep.subr.bf16.mxu0 0
    %2810 = vmatpush1.bf16.xpose.msra.mxu0 0
    %2811 = vmatprep.subr.bf16.mxu0 0
    %2812 = vmatpush1.bf16.xpose.msra.mxu0 0
    %2813 = vmatprep.subr.bf16.mxu0 0
    %2814 = vmatpush1.bf16.xpose.msra.mxu0 0
    %2815 = vmatprep.mubr.bf16.mxu0 0
    %2816 = vmatmul.mubr.bf16.gmra.mrb[0].mxu0 %v2778
    %v2817 = vpop.f32.mrb[0].mxu0
    %v2818 = vadd.f32 0.0, %v2817
    %v2819 = vpop.f32.mrb[0].mxu0
    %v2820 = vpop.f32.mrb[0].mxu0
    %v2821 = vpop.f32.mrb[0].mxu0
    %2822 = vdwg.mxu0
    %2824 = vrot.lane.b32.xlu0 %v2437, 96
    %v2825 = vpop.permute.xlu0 %2824
    %2827 = vrot.lane.b32.xlu0 %v2509, 96
    %v2828 = vpop.permute.xlu0 %2827
    %v2830 = vsel %vm102, %v2825, 0
    %v2833 = vsel %vm102, %v2828, 0
    %2835 = vmatprep.subr.bf16.mxu0 0
    %2836 = vmatpush1.bf16.xpose.msra.mxu0 %v2833
    %2837 = vmatprep.subr.bf16.mxu0 0
    %2838 = vmatpush1.bf16.xpose.msra.mxu0 0
    %2839 = vmatprep.subr.bf16.mxu0 0
    %2840 = vmatpush1.bf16.xpose.msra.mxu0 0
    %2841 = vmatprep.subr.bf16.mxu0 0
    %2842 = vmatpush1.bf16.xpose.msra.mxu0 0
    %2843 = vmatprep.subr.bf16.mxu0 0
    %2844 = vmatpush1.bf16.xpose.msra.mxu0 0
    %2845 = vmatprep.subr.bf16.mxu0 0
    %2846 = vmatpush1.bf16.xpose.msra.mxu0 0
    %2847 = vmatprep.subr.bf16.mxu0 0
    %2848 = vmatpush1.bf16.xpose.msra.mxu0 0
    %2849 = vmatprep.subr.bf16.mxu0 0
    %2850 = vmatpush1.bf16.xpose.msra.mxu0 0
    %2851 = vmatprep.subr.bf16.mxu0 0
    %2852 = vmatpush1.bf16.xpose.msra.mxu0 0
    %2853 = vmatprep.subr.bf16.mxu0 0
    %2854 = vmatpush1.bf16.xpose.msra.mxu0 0
    %2855 = vmatprep.subr.bf16.mxu0 0
    %2856 = vmatpush1.bf16.xpose.msra.mxu0 0
    %2857 = vmatprep.subr.bf16.mxu0 0
    %2858 = vmatpush1.bf16.xpose.msra.mxu0 0
    %2859 = vmatprep.subr.bf16.mxu0 0
    %2860 = vmatpush1.bf16.xpose.msra.mxu0 0
    %2861 = vmatprep.subr.bf16.mxu0 0
    %2862 = vmatpush1.bf16.xpose.msra.mxu0 0
    %2863 = vmatprep.subr.bf16.mxu0 0
    %2864 = vmatpush1.bf16.xpose.msra.mxu0 0
    %2865 = vmatprep.subr.bf16.mxu0 0
    %2866 = vmatpush1.bf16.xpose.msra.mxu0 0
    %2867 = vmatprep.mubr.bf16.mxu0 0
    %2868 = vmatmul.mubr.bf16.gmra.mrb[0].mxu0 %v2830
    %v2869 = vpop.f32.mrb[0].mxu0
    %v2870 = vadd.f32 0.0, %v2869
    %v2871 = vpop.f32.mrb[0].mxu0
    %v2872 = vpop.f32.mrb[0].mxu0
    %v2873 = vpop.f32.mrb[0].mxu0
    %2874 = vdwg.mxu0
    %2875 = vrot.lane.b32.xlu0 %v2437, 64
    %v2876 = vpop.permute.xlu0 %2875
    %2877 = vrot.lane.b32.xlu0 %v2509, 64
    %v2878 = vpop.permute.xlu0 %2877
    %v2880 = vsel %vm102, %v2876, 0
    %v2883 = vsel %vm102, %v2878, 0
    %2885 = vmatprep.subr.bf16.mxu0 0
    %2886 = vmatpush1.bf16.xpose.msra.mxu0 %v2883
    %2887 = vmatprep.subr.bf16.mxu0 0
    %2888 = vmatpush1.bf16.xpose.msra.mxu0 0
    %2889 = vmatprep.subr.bf16.mxu0 0
    %2890 = vmatpush1.bf16.xpose.msra.mxu0 0
    %2891 = vmatprep.subr.bf16.mxu0 0
    %2892 = vmatpush1.bf16.xpose.msra.mxu0 0
    %2893 = vmatprep.subr.bf16.mxu0 0
    %2894 = vmatpush1.bf16.xpose.msra.mxu0 0
    %2895 = vmatprep.subr.bf16.mxu0 0
    %2896 = vmatpush1.bf16.xpose.msra.mxu0 0
    %2897 = vmatprep.subr.bf16.mxu0 0
    %2898 = vmatpush1.bf16.xpose.msra.mxu0 0
    %2899 = vmatprep.subr.bf16.mxu0 0
    %2900 = vmatpush1.bf16.xpose.msra.mxu0 0
    %2901 = vmatprep.subr.bf16.mxu0 0
    %2902 = vmatpush1.bf16.xpose.msra.mxu0 0
    %2903 = vmatprep.subr.bf16.mxu0 0
    %2904 = vmatpush1.bf16.xpose.msra.mxu0 0
    %2905 = vmatprep.subr.bf16.mxu0 0
    %2906 = vmatpush1.bf16.xpose.msra.mxu0 0
    %2907 = vmatprep.subr.bf16.mxu0 0
    %2908 = vmatpush1.bf16.xpose.msra.mxu0 0
    %2909 = vmatprep.subr.bf16.mxu0 0
    %2910 = vmatpush1.bf16.xpose.msra.mxu0 0
    %2911 = vmatprep.subr.bf16.mxu0 0
    %2912 = vmatpush1.bf16.xpose.msra.mxu0 0
    %2913 = vmatprep.subr.bf16.mxu0 0
    %2914 = vmatpush1.bf16.xpose.msra.mxu0 0
    %2915 = vmatprep.subr.bf16.mxu0 0
    %2916 = vmatpush1.bf16.xpose.msra.mxu0 0
    %2917 = vmatprep.mubr.bf16.mxu0 0
    %2918 = vmatmul.mubr.bf16.gmra.mrb[0].mxu0 %v2880
    %v2919 = vpop.f32.mrb[0].mxu0
    %v2920 = vadd.f32 0.0, %v2919
    %v2921 = vpop.f32.mrb[0].mxu0
    %v2922 = vpop.f32.mrb[0].mxu0
    %v2923 = vpop.f32.mrb[0].mxu0
    %2924 = vdwg.mxu0
    %2925 = vrot.lane.b32.xlu0 %v2437, 32
    %v2926 = vpop.permute.xlu0 %2925
    %2927 = vrot.lane.b32.xlu0 %v2509, 32
    %v2928 = vpop.permute.xlu0 %2927
    %v2930 = vsel %vm102, %v2926, 0
    %v2933 = vsel %vm102, %v2928, 0
    %2935 = vmatprep.subr.bf16.mxu0 0
    %2936 = vmatpush1.bf16.xpose.msra.mxu0 %v2933
    %2937 = vmatprep.subr.bf16.mxu0 0
    %2938 = vmatpush1.bf16.xpose.msra.mxu0 0
    %2939 = vmatprep.subr.bf16.mxu0 0
    %2940 = vmatpush1.bf16.xpose.msra.mxu0 0
    %2941 = vmatprep.subr.bf16.mxu0 0
    %2942 = vmatpush1.bf16.xpose.msra.mxu0 0
    %2943 = vmatprep.subr.bf16.mxu0 0
    %2944 = vmatpush1.bf16.xpose.msra.mxu0 0
    %2945 = vmatprep.subr.bf16.mxu0 0
    %2946 = vmatpush1.bf16.xpose.msra.mxu0 0
    %2947 = vmatprep.subr.bf16.mxu0 0
    %2948 = vmatpush1.bf16.xpose.msra.mxu0 0
    %2949 = vmatprep.subr.bf16.mxu0 0
    %2950 = vmatpush1.bf16.xpose.msra.mxu0 0
    %2951 = vmatprep.subr.bf16.mxu0 0
    %2952 = vmatpush1.bf16.xpose.msra.mxu0 0
    %2953 = vmatprep.subr.bf16.mxu0 0
    %2954 = vmatpush1.bf16.xpose.msra.mxu0 0
    %2955 = vmatprep.subr.bf16.mxu0 0
    %2956 = vmatpush1.bf16.xpose.msra.mxu0 0
    %2957 = vmatprep.subr.bf16.mxu0 0
    %2958 = vmatpush1.bf16.xpose.msra.mxu0 0
    %2959 = vmatprep.subr.bf16.mxu0 0
    %2960 = vmatpush1.bf16.xpose.msra.mxu0 0
    %2961 = vmatprep.subr.bf16.mxu0 0
    %2962 = vmatpush1.bf16.xpose.msra.mxu0 0
    %2963 = vmatprep.subr.bf16.mxu0 0
    %2964 = vmatpush1.bf16.xpose.msra.mxu0 0
    %2965 = vmatprep.subr.bf16.mxu0 0
    %2966 = vmatpush1.bf16.xpose.msra.mxu0 0
    %2967 = vmatprep.mubr.bf16.mxu0 0
    %2968 = vmatmul.mubr.bf16.gmra.mrb[0].mxu0 %v2930
    %v2969 = vpop.f32.mrb[0].mxu0
    %v2970 = vadd.f32 0.0, %v2969
    %v2971 = vpop.f32.mrb[0].mxu0
    %v2972 = vpop.f32.mrb[0].mxu0
    %v2973 = vpop.f32.mrb[0].mxu0
    %2974 = vdwg.mxu0
    %v2975 = vrot.slane %v2436, 4
    %v2976 = vrot.slane %v2508, 4
    %v2978 = vsel %vm102, %v2975, 0
    %v2981 = vsel %vm102, %v2976, 0
    %2983 = vmatprep.subr.bf16.mxu0 0
    %2984 = vmatpush1.bf16.xpose.msra.mxu0 %v2981
    %2985 = vmatprep.subr.bf16.mxu0 0
    %2986 = vmatpush1.bf16.xpose.msra.mxu0 0
    %2987 = vmatprep.subr.bf16.mxu0 0
    %2988 = vmatpush1.bf16.xpose.msra.mxu0 0
    %2989 = vmatprep.subr.bf16.mxu0 0
    %2990 = vmatpush1.bf16.xpose.msra.mxu0 0
    %2991 = vmatprep.subr.bf16.mxu0 0
    %2992 = vmatpush1.bf16.xpose.msra.mxu0 0
    %2993 = vmatprep.subr.bf16.mxu0 0
    %2994 = vmatpush1.bf16.xpose.msra.mxu0 0
    %2995 = vmatprep.subr.bf16.mxu0 0
    %2996 = vmatpush1.bf16.xpose.msra.mxu0 0
    %2997 = vmatprep.subr.bf16.mxu0 0
    %2998 = vmatpush1.bf16.xpose.msra.mxu0 0
    %2999 = vmatprep.subr.bf16.mxu0 0
    %3000 = vmatpush1.bf16.xpose.msra.mxu0 0
    %3001 = vmatprep.subr.bf16.mxu0 0
    %3002 = vmatpush1.bf16.xpose.msra.mxu0 0
    %3003 = vmatprep.subr.bf16.mxu0 0
    %3004 = vmatpush1.bf16.xpose.msra.mxu0 0
    %3005 = vmatprep.subr.bf16.mxu0 0
    %3006 = vmatpush1.bf16.xpose.msra.mxu0 0
    %3007 = vmatprep.subr.bf16.mxu0 0
    %3008 = vmatpush1.bf16.xpose.msra.mxu0 0
    %3009 = vmatprep.subr.bf16.mxu0 0
    %3010 = vmatpush1.bf16.xpose.msra.mxu0 0
    %3011 = vmatprep.subr.bf16.mxu0 0
    %3012 = vmatpush1.bf16.xpose.msra.mxu0 0
    %3013 = vmatprep.subr.bf16.mxu0 0
    %3014 = vmatpush1.bf16.xpose.msra.mxu0 0
    %3015 = vmatprep.mubr.bf16.mxu0 0
    %3016 = vmatmul.mubr.bf16.gmra.mrb[0].mxu0 %v2978
    %v3017 = vpop.f32.mrb[0].mxu0
    %v3018 = vadd.f32 0.0, %v3017
    %v3019 = vpop.f32.mrb[0].mxu0
    %v3020 = vpop.f32.mrb[0].mxu0
    %v3021 = vpop.f32.mrb[0].mxu0
    %3022 = vdwg.mxu0
    %3023 = vrot.lane.b32.xlu0 %v2975, 96
    %v3024 = vpop.permute.xlu0 %3023
    %3025 = vrot.lane.b32.xlu0 %v2976, 96
    %v3026 = vpop.permute.xlu0 %3025
    %v3028 = vsel %vm102, %v3024, 0
    %v3031 = vsel %vm102, %v3026, 0
    %3033 = vmatprep.subr.bf16.mxu0 0
    %3034 = vmatpush1.bf16.xpose.msra.mxu0 %v3031
    %3035 = vmatprep.subr.bf16.mxu0 0
    %3036 = vmatpush1.bf16.xpose.msra.mxu0 0
    %3037 = vmatprep.subr.bf16.mxu0 0
    %3038 = vmatpush1.bf16.xpose.msra.mxu0 0
    %3039 = vmatprep.subr.bf16.mxu0 0
    %3040 = vmatpush1.bf16.xpose.msra.mxu0 0
    %3041 = vmatprep.subr.bf16.mxu0 0
    %3042 = vmatpush1.bf16.xpose.msra.mxu0 0
    %3043 = vmatprep.subr.bf16.mxu0 0
    %3044 = vmatpush1.bf16.xpose.msra.mxu0 0
    %3045 = vmatprep.subr.bf16.mxu0 0
    %3046 = vmatpush1.bf16.xpose.msra.mxu0 0
    %3047 = vmatprep.subr.bf16.mxu0 0
    %3048 = vmatpush1.bf16.xpose.msra.mxu0 0
    %3049 = vmatprep.subr.bf16.mxu0 0
    %3050 = vmatpush1.bf16.xpose.msra.mxu0 0
    %3051 = vmatprep.subr.bf16.mxu0 0
    %3052 = vmatpush1.bf16.xpose.msra.mxu0 0
    %3053 = vmatprep.subr.bf16.mxu0 0
    %3054 = vmatpush1.bf16.xpose.msra.mxu0 0
    %3055 = vmatprep.subr.bf16.mxu0 0
    %3056 = vmatpush1.bf16.xpose.msra.mxu0 0
    %3057 = vmatprep.subr.bf16.mxu0 0
    %3058 = vmatpush1.bf16.xpose.msra.mxu0 0
    %3059 = vmatprep.subr.bf16.mxu0 0
    %3060 = vmatpush1.bf16.xpose.msra.mxu0 0
    %3061 = vmatprep.subr.bf16.mxu0 0
    %3062 = vmatpush1.bf16.xpose.msra.mxu0 0
    %3063 = vmatprep.subr.bf16.mxu0 0
    %3064 = vmatpush1.bf16.xpose.msra.mxu0 0
    %3065 = vmatprep.mubr.bf16.mxu0 0
    %3066 = vmatmul.mubr.bf16.gmra.mrb[0].mxu0 %v3028
    %v3067 = vpop.f32.mrb[0].mxu0
    %v3068 = vadd.f32 0.0, %v3067
    %v3069 = vpop.f32.mrb[0].mxu0
    %v3070 = vpop.f32.mrb[0].mxu0
    %v3071 = vpop.f32.mrb[0].mxu0
    %3072 = vdwg.mxu0
    %3073 = vrot.lane.b32.xlu0 %v2975, 64
    %v3074 = vpop.permute.xlu0 %3073
    %3075 = vrot.lane.b32.xlu0 %v2976, 64
    %v3076 = vpop.permute.xlu0 %3075
    %v3078 = vsel %vm102, %v3074, 0
    %v3081 = vsel %vm102, %v3076, 0
    %3083 = vmatprep.subr.bf16.mxu0 0
    %3084 = vmatpush1.bf16.xpose.msra.mxu0 %v3081
    %3085 = vmatprep.subr.bf16.mxu0 0
    %3086 = vmatpush1.bf16.xpose.msra.mxu0 0
    %3087 = vmatprep.subr.bf16.mxu0 0
    %3088 = vmatpush1.bf16.xpose.msra.mxu0 0
    %3089 = vmatprep.subr.bf16.mxu0 0
    %3090 = vmatpush1.bf16.xpose.msra.mxu0 0
    %3091 = vmatprep.subr.bf16.mxu0 0
    %3092 = vmatpush1.bf16.xpose.msra.mxu0 0
    %3093 = vmatprep.subr.bf16.mxu0 0
    %3094 = vmatpush1.bf16.xpose.msra.mxu0 0
    %3095 = vmatprep.subr.bf16.mxu0 0
    %3096 = vmatpush1.bf16.xpose.msra.mxu0 0
    %3097 = vmatprep.subr.bf16.mxu0 0
    %3098 = vmatpush1.bf16.xpose.msra.mxu0 0
    %3099 = vmatprep.subr.bf16.mxu0 0
    %3100 = vmatpush1.bf16.xpose.msra.mxu0 0
    %3101 = vmatprep.subr.bf16.mxu0 0
    %3102 = vmatpush1.bf16.xpose.msra.mxu0 0
    %3103 = vmatprep.subr.bf16.mxu0 0
    %3104 = vmatpush1.bf16.xpose.msra.mxu0 0
    %3105 = vmatprep.subr.bf16.mxu0 0
    %3106 = vmatpush1.bf16.xpose.msra.mxu0 0
    %3107 = vmatprep.subr.bf16.mxu0 0
    %3108 = vmatpush1.bf16.xpose.msra.mxu0 0
    %3109 = vmatprep.subr.bf16.mxu0 0
    %3110 = vmatpush1.bf16.xpose.msra.mxu0 0
    %3111 = vmatprep.subr.bf16.mxu0 0
    %3112 = vmatpush1.bf16.xpose.msra.mxu0 0
    %3113 = vmatprep.subr.bf16.mxu0 0
    %3114 = vmatpush1.bf16.xpose.msra.mxu0 0
    %3115 = vmatprep.mubr.bf16.mxu0 0
    %3116 = vmatmul.mubr.bf16.gmra.mrb[0].mxu0 %v3078
    %v3117 = vpop.f32.mrb[0].mxu0
    %v3118 = vadd.f32 0.0, %v3117
    %v3119 = vpop.f32.mrb[0].mxu0
    %v3120 = vpop.f32.mrb[0].mxu0
    %v3121 = vpop.f32.mrb[0].mxu0
    %3122 = vdwg.mxu0
    %3123 = vrot.lane.b32.xlu0 %v2975, 32
    %v3124 = vpop.permute.xlu0 %3123
    %3125 = vrot.lane.b32.xlu0 %v2976, 32
    %v3126 = vpop.permute.xlu0 %3125
    %v3128 = vsel %vm102, %v3124, 0
    %v3131 = vsel %vm102, %v3126, 0
    %3133 = vmatprep.subr.bf16.mxu0 0
    %3134 = vmatpush1.bf16.xpose.msra.mxu0 %v3131
    %3135 = vmatprep.subr.bf16.mxu0 0
    %3136 = vmatpush1.bf16.xpose.msra.mxu0 0
    %3137 = vmatprep.subr.bf16.mxu0 0
    %3138 = vmatpush1.bf16.xpose.msra.mxu0 0
    %3139 = vmatprep.subr.bf16.mxu0 0
    %3140 = vmatpush1.bf16.xpose.msra.mxu0 0
    %3141 = vmatprep.subr.bf16.mxu0 0
    %3142 = vmatpush1.bf16.xpose.msra.mxu0 0
    %3143 = vmatprep.subr.bf16.mxu0 0
    %3144 = vmatpush1.bf16.xpose.msra.mxu0 0
    %3145 = vmatprep.subr.bf16.mxu0 0
    %3146 = vmatpush1.bf16.xpose.msra.mxu0 0
    %3147 = vmatprep.subr.bf16.mxu0 0
    %3148 = vmatpush1.bf16.xpose.msra.mxu0 0
    %3149 = vmatprep.subr.bf16.mxu0 0
    %3150 = vmatpush1.bf16.xpose.msra.mxu0 0
    %3151 = vmatprep.subr.bf16.mxu0 0
    %3152 = vmatpush1.bf16.xpose.msra.mxu0 0
    %3153 = vmatprep.subr.bf16.mxu0 0
    %3154 = vmatpush1.bf16.xpose.msra.mxu0 0
    %3155 = vmatprep.subr.bf16.mxu0 0
    %3156 = vmatpush1.bf16.xpose.msra.mxu0 0
    %3157 = vmatprep.subr.bf16.mxu0 0
    %3158 = vmatpush1.bf16.xpose.msra.mxu0 0
    %3159 = vmatprep.subr.bf16.mxu0 0
    %3160 = vmatpush1.bf16.xpose.msra.mxu0 0
    %3161 = vmatprep.subr.bf16.mxu0 0
    %3162 = vmatpush1.bf16.xpose.msra.mxu0 0
    %3163 = vmatprep.subr.bf16.mxu0 0
    %3164 = vmatpush1.bf16.xpose.msra.mxu0 0
    %3165 = vmatprep.mubr.bf16.mxu0 0
    %3166 = vmatmul.mubr.bf16.gmra.mrb[0].mxu0 %v3128
    %v3167 = vpop.f32.mrb[0].mxu0
    %v3168 = vadd.f32 0.0, %v3167
    %v3169 = vpop.f32.mrb[0].mxu0
    %v3170 = vpop.f32.mrb[0].mxu0
    %v3171 = vpop.f32.mrb[0].mxu0
    %3172 = vdwg.mxu0
    %v3173 = vrot.slane %v2437, 4
    %v3174 = vrot.slane %v2509, 4
    %v3176 = vsel %vm102, %v3173, 0
    %v3179 = vsel %vm102, %v3174, 0
    %3181 = vmatprep.subr.bf16.mxu0 0
    %3182 = vmatpush1.bf16.xpose.msra.mxu0 %v3179
    %3183 = vmatprep.subr.bf16.mxu0 0
    %3184 = vmatpush1.bf16.xpose.msra.mxu0 0
    %3185 = vmatprep.subr.bf16.mxu0 0
    %3186 = vmatpush1.bf16.xpose.msra.mxu0 0
    %3187 = vmatprep.subr.bf16.mxu0 0
    %3188 = vmatpush1.bf16.xpose.msra.mxu0 0
    %3189 = vmatprep.subr.bf16.mxu0 0
    %3190 = vmatpush1.bf16.xpose.msra.mxu0 0
    %3191 = vmatprep.subr.bf16.mxu0 0
    %3192 = vmatpush1.bf16.xpose.msra.mxu0 0
    %3193 = vmatprep.subr.bf16.mxu0 0
    %3194 = vmatpush1.bf16.xpose.msra.mxu0 0
    %3195 = vmatprep.subr.bf16.mxu0 0
    %3196 = vmatpush1.bf16.xpose.msra.mxu0 0
    %3197 = vmatprep.subr.bf16.mxu0 0
    %3198 = vmatpush1.bf16.xpose.msra.mxu0 0
    %3199 = vmatprep.subr.bf16.mxu0 0
    %3200 = vmatpush1.bf16.xpose.msra.mxu0 0
    %3201 = vmatprep.subr.bf16.mxu0 0
    %3202 = vmatpush1.bf16.xpose.msra.mxu0 0
    %3203 = vmatprep.subr.bf16.mxu0 0
    %3204 = vmatpush1.bf16.xpose.msra.mxu0 0
    %3205 = vmatprep.subr.bf16.mxu0 0
    %3206 = vmatpush1.bf16.xpose.msra.mxu0 0
    %3207 = vmatprep.subr.bf16.mxu0 0
    %3208 = vmatpush1.bf16.xpose.msra.mxu0 0
    %3209 = vmatprep.subr.bf16.mxu0 0
    %3210 = vmatpush1.bf16.xpose.msra.mxu0 0
    %3211 = vmatprep.subr.bf16.mxu0 0
    %3212 = vmatpush1.bf16.xpose.msra.mxu0 0
    %3213 = vmatprep.mubr.bf16.mxu0 0
    %3214 = vmatmul.mubr.bf16.gmra.mrb[0].mxu0 %v3176
    %v3215 = vpop.f32.mrb[0].mxu0
    %v3216 = vadd.f32 0.0, %v3215
    %v3217 = vpop.f32.mrb[0].mxu0
    %v3218 = vpop.f32.mrb[0].mxu0
    %v3219 = vpop.f32.mrb[0].mxu0
    %3220 = vdwg.mxu0
    %3221 = vrot.lane.b32.xlu0 %v3173, 96
    %v3222 = vpop.permute.xlu0 %3221
    %3223 = vrot.lane.b32.xlu0 %v3174, 96
    %v3224 = vpop.permute.xlu0 %3223
    %v3226 = vsel %vm102, %v3222, 0
    %v3229 = vsel %vm102, %v3224, 0
    %3231 = vmatprep.subr.bf16.mxu0 0
    %3232 = vmatpush1.bf16.xpose.msra.mxu0 %v3229
    %3233 = vmatprep.subr.bf16.mxu0 0
    %3234 = vmatpush1.bf16.xpose.msra.mxu0 0
    %3235 = vmatprep.subr.bf16.mxu0 0
    %3236 = vmatpush1.bf16.xpose.msra.mxu0 0
    %3237 = vmatprep.subr.bf16.mxu0 0
    %3238 = vmatpush1.bf16.xpose.msra.mxu0 0
    %3239 = vmatprep.subr.bf16.mxu0 0
    %3240 = vmatpush1.bf16.xpose.msra.mxu0 0
    %3241 = vmatprep.subr.bf16.mxu0 0
    %3242 = vmatpush1.bf16.xpose.msra.mxu0 0
    %3243 = vmatprep.subr.bf16.mxu0 0
    %3244 = vmatpush1.bf16.xpose.msra.mxu0 0
    %3245 = vmatprep.subr.bf16.mxu0 0
    %3246 = vmatpush1.bf16.xpose.msra.mxu0 0
    %3247 = vmatprep.subr.bf16.mxu0 0
    %3248 = vmatpush1.bf16.xpose.msra.mxu0 0
    %3249 = vmatprep.subr.bf16.mxu0 0
    %3250 = vmatpush1.bf16.xpose.msra.mxu0 0
    %3251 = vmatprep.subr.bf16.mxu0 0
    %3252 = vmatpush1.bf16.xpose.msra.mxu0 0
    %3253 = vmatprep.subr.bf16.mxu0 0
    %3254 = vmatpush1.bf16.xpose.msra.mxu0 0
    %3255 = vmatprep.subr.bf16.mxu0 0
    %3256 = vmatpush1.bf16.xpose.msra.mxu0 0
    %3257 = vmatprep.subr.bf16.mxu0 0
    %3258 = vmatpush1.bf16.xpose.msra.mxu0 0
    %3259 = vmatprep.subr.bf16.mxu0 0
    %3260 = vmatpush1.bf16.xpose.msra.mxu0 0
    %3261 = vmatprep.subr.bf16.mxu0 0
    %3262 = vmatpush1.bf16.xpose.msra.mxu0 0
    %3263 = vmatprep.mubr.bf16.mxu0 0
    %3264 = vmatmul.mubr.bf16.gmra.mrb[0].mxu0 %v3226
    %v3265 = vpop.f32.mrb[0].mxu0
    %v3266 = vadd.f32 0.0, %v3265
    %v3267 = vpop.f32.mrb[0].mxu0
    %v3268 = vpop.f32.mrb[0].mxu0
    %v3269 = vpop.f32.mrb[0].mxu0
    %3270 = vdwg.mxu0
    %3271 = vrot.lane.b32.xlu0 %v3173, 64
    %v3272 = vpop.permute.xlu0 %3271
    %3273 = vrot.lane.b32.xlu0 %v3174, 64
    %v3274 = vpop.permute.xlu0 %3273
    %v3276 = vsel %vm102, %v3272, 0
    %v3279 = vsel %vm102, %v3274, 0
    %3281 = vmatprep.subr.bf16.mxu0 0
    %3282 = vmatpush1.bf16.xpose.msra.mxu0 %v3279
    %3283 = vmatprep.subr.bf16.mxu0 0
    %3284 = vmatpush1.bf16.xpose.msra.mxu0 0
    %3285 = vmatprep.subr.bf16.mxu0 0
    %3286 = vmatpush1.bf16.xpose.msra.mxu0 0
    %3287 = vmatprep.subr.bf16.mxu0 0
    %3288 = vmatpush1.bf16.xpose.msra.mxu0 0
    %3289 = vmatprep.subr.bf16.mxu0 0
    %3290 = vmatpush1.bf16.xpose.msra.mxu0 0
    %3291 = vmatprep.subr.bf16.mxu0 0
    %3292 = vmatpush1.bf16.xpose.msra.mxu0 0
    %3293 = vmatprep.subr.bf16.mxu0 0
    %3294 = vmatpush1.bf16.xpose.msra.mxu0 0
    %3295 = vmatprep.subr.bf16.mxu0 0
    %3296 = vmatpush1.bf16.xpose.msra.mxu0 0
    %3297 = vmatprep.subr.bf16.mxu0 0
    %3298 = vmatpush1.bf16.xpose.msra.mxu0 0
    %3299 = vmatprep.subr.bf16.mxu0 0
    %3300 = vmatpush1.bf16.xpose.msra.mxu0 0
    %3301 = vmatprep.subr.bf16.mxu0 0
    %3302 = vmatpush1.bf16.xpose.msra.mxu0 0
    %3303 = vmatprep.subr.bf16.mxu0 0
    %3304 = vmatpush1.bf16.xpose.msra.mxu0 0
    %3305 = vmatprep.subr.bf16.mxu0 0
    %3306 = vmatpush1.bf16.xpose.msra.mxu0 0
    %3307 = vmatprep.subr.bf16.mxu0 0
    %3308 = vmatpush1.bf16.xpose.msra.mxu0 0
    %3309 = vmatprep.subr.bf16.mxu0 0
    %3310 = vmatpush1.bf16.xpose.msra.mxu0 0
    %3311 = vmatprep.subr.bf16.mxu0 0
    %3312 = vmatpush1.bf16.xpose.msra.mxu0 0
    %3313 = vmatprep.mubr.bf16.mxu0 0
    %3314 = vmatmul.mubr.bf16.gmra.mrb[0].mxu0 %v3276
    %v3315 = vpop.f32.mrb[0].mxu0
    %v3316 = vadd.f32 0.0, %v3315
    %v3317 = vpop.f32.mrb[0].mxu0
    %v3318 = vpop.f32.mrb[0].mxu0
    %v3319 = vpop.f32.mrb[0].mxu0
    %3320 = vdwg.mxu0
    %3321 = vrot.lane.b32.xlu0 %v3173, 32
    %v3322 = vpop.permute.xlu0 %3321
    %3323 = vrot.lane.b32.xlu0 %v3174, 32
    %v3324 = vpop.permute.xlu0 %3323
    %v3326 = vsel %vm102, %v3322, 0
    %v3329 = vsel %vm102, %v3324, 0
    %3331 = vmatprep.subr.bf16.mxu0 0
    %3332 = vmatpush1.bf16.xpose.msra.mxu0 %v3329
    %3333 = vmatprep.subr.bf16.mxu0 0
    %3334 = vmatpush1.bf16.xpose.msra.mxu0 0
    %3335 = vmatprep.subr.bf16.mxu0 0
    %3336 = vmatpush1.bf16.xpose.msra.mxu0 0
    %3337 = vmatprep.subr.bf16.mxu0 0
    %3338 = vmatpush1.bf16.xpose.msra.mxu0 0
    %3339 = vmatprep.subr.bf16.mxu0 0
    %3340 = vmatpush1.bf16.xpose.msra.mxu0 0
    %3341 = vmatprep.subr.bf16.mxu0 0
    %3342 = vmatpush1.bf16.xpose.msra.mxu0 0
    %3343 = vmatprep.subr.bf16.mxu0 0
    %3344 = vmatpush1.bf16.xpose.msra.mxu0 0
    %3345 = vmatprep.subr.bf16.mxu0 0
    %3346 = vmatpush1.bf16.xpose.msra.mxu0 0
    %3347 = vmatprep.subr.bf16.mxu0 0
    %3348 = vmatpush1.bf16.xpose.msra.mxu0 0
    %3349 = vmatprep.subr.bf16.mxu0 0
    %3350 = vmatpush1.bf16.xpose.msra.mxu0 0
    %3351 = vmatprep.subr.bf16.mxu0 0
    %3352 = vmatpush1.bf16.xpose.msra.mxu0 0
    %3353 = vmatprep.subr.bf16.mxu0 0
    %3354 = vmatpush1.bf16.xpose.msra.mxu0 0
    %3355 = vmatprep.subr.bf16.mxu0 0
    %3356 = vmatpush1.bf16.xpose.msra.mxu0 0
    %3357 = vmatprep.subr.bf16.mxu0 0
    %3358 = vmatpush1.bf16.xpose.msra.mxu0 0
    %3359 = vmatprep.subr.bf16.mxu0 0
    %3360 = vmatpush1.bf16.xpose.msra.mxu0 0
    %3361 = vmatprep.subr.bf16.mxu0 0
    %3362 = vmatpush1.bf16.xpose.msra.mxu0 0
    %3363 = vmatprep.mubr.bf16.mxu0 0
    %3364 = vmatmul.mubr.bf16.gmra.mrb[0].mxu0 %v3326
    %v3365 = vpop.f32.mrb[0].mxu0
    %v3366 = vadd.f32 0.0, %v3365
    %v3367 = vpop.f32.mrb[0].mxu0
    %v3368 = vpop.f32.mrb[0].mxu0
    %v3369 = vpop.f32.mrb[0].mxu0
    %3370 = vdwg.mxu0
    %v3371 = vmul.f32 %v2620, 0.17677669
    %v3372 = vmul.f32 %v2672, 0.17677669
    %v3373 = vmul.f32 %v2722, 0.17677669
    %v3374 = vmul.f32 %v2772, 0.17677669
    %v3375 = vmul.f32 %v2818, 0.17677669
    %v3376 = vmul.f32 %v2870, 0.17677669
    %v3377 = vmul.f32 %v2920, 0.17677669
    %v3378 = vmul.f32 %v2970, 0.17677669
    %v3379 = vmul.f32 %v3018, 0.17677669
    %v3380 = vmul.f32 %v3068, 0.17677669
    %v3381 = vmul.f32 %v3118, 0.17677669
    %v3382 = vmul.f32 %v3168, 0.17677669
    %v3383 = vmul.f32 %v3216, 0.17677669
    %v3384 = vmul.f32 %v3266, 0.17677669
    %v3385 = vmul.f32 %v3316, 0.17677669
    %v3386 = vmul.f32 %v3366, 0.17677669
    %v3387 = vsel %vm1097, %v3371, -inf
    %3388 = vmax.xlane.f32.xlu0 %v3387
    %v3389 = vpop.xlane.xlu0 %3388
    %v3390 = vsel %vm1097, %v3372, -inf
    %3391 = vmax.xlane.f32.xlu0 %v3390
    %v3392 = vpop.xlane.xlu0 %3391
    %v3393 = vsel %vm1097, %v3373, -inf
    %3394 = vmax.xlane.f32.xlu0 %v3393
    %v3395 = vpop.xlane.xlu0 %3394
    %v3396 = vsel %vm1097, %v3374, -inf
    %3397 = vmax.xlane.f32.xlu0 %v3396
    %v3398 = vpop.xlane.xlu0 %3397
    %v3399 = vsel %vm1097, %v3375, -inf
    %3400 = vmax.xlane.f32.xlu0 %v3399
    %v3401 = vpop.xlane.xlu0 %3400
    %v3402 = vsel %vm1097, %v3376, -inf
    %3403 = vmax.xlane.f32.xlu0 %v3402
    %v3404 = vpop.xlane.xlu0 %3403
    %v3405 = vsel %vm1097, %v3377, -inf
    %3406 = vmax.xlane.f32.xlu0 %v3405
    %v3407 = vpop.xlane.xlu0 %3406
    %v3408 = vsel %vm1097, %v3378, -inf
    %3409 = vmax.xlane.f32.xlu0 %v3408
    %v3410 = vpop.xlane.xlu0 %3409
    %v3411 = vsel %vm1097, %v3379, -inf
    %3412 = vmax.xlane.f32.xlu0 %v3411
    %v3413 = vpop.xlane.xlu0 %3412
    %v3414 = vsel %vm1097, %v3380, -inf
    %3415 = vmax.xlane.f32.xlu0 %v3414
    %v3416 = vpop.xlane.xlu0 %3415
    %v3417 = vsel %vm1097, %v3381, -inf
    %3418 = vmax.xlane.f32.xlu0 %v3417
    %v3419 = vpop.xlane.xlu0 %3418
    %v3420 = vsel %vm1097, %v3382, -inf
    %3421 = vmax.xlane.f32.xlu0 %v3420
    %v3422 = vpop.xlane.xlu0 %3421
    %v3423 = vsel %vm1097, %v3383, -inf
    %3424 = vmax.xlane.f32.xlu0 %v3423
    %v3425 = vpop.xlane.xlu0 %3424
    %v3426 = vsel %vm1097, %v3384, -inf
    %3427 = vmax.xlane.f32.xlu0 %v3426
    %v3428 = vpop.xlane.xlu0 %3427
    %v3429 = vsel %vm1097, %v3385, -inf
    %3430 = vmax.xlane.f32.xlu0 %v3429
    %v3431 = vpop.xlane.xlu0 %3430
    %v3432 = vsel %vm1097, %v3386, -inf
    %3433 = vmax.xlane.f32.xlu0 %v3432
    %v3434 = vpop.xlane.xlu0 %3433
    %v3435 = vsub.f32 %v3371, %v3389
    %v3436 = vsub.f32 %v3372, %v3392
    %v3437 = vsub.f32 %v3373, %v3395
    %v3438 = vsub.f32 %v3374, %v3398
    %v3439 = vsub.f32 %v3375, %v3401
    %v3440 = vsub.f32 %v3376, %v3404
    %v3441 = vsub.f32 %v3377, %v3407
    %v3442 = vsub.f32 %v3378, %v3410
    %v3443 = vsub.f32 %v3379, %v3413
    %v3444 = vsub.f32 %v3380, %v3416
    %v3445 = vsub.f32 %v3381, %v3419
    %v3446 = vsub.f32 %v3382, %v3422
    %v3447 = vsub.f32 %v3383, %v3425
    %v3448 = vsub.f32 %v3384, %v3428
    %v3449 = vsub.f32 %v3385, %v3431
    %v3450 = vsub.f32 %v3386, %v3434
    %v3451 = vmul.f32 %v3435, 1.442695
    %v3452 = vpow.pop %v3451
    %v3453 = vmul.f32 %v3436, 1.442695
    %v3454 = vpow.pop %v3453
    %v3455 = vmul.f32 %v3437, 1.442695
    %v3456 = vpow.pop %v3455
    %v3457 = vmul.f32 %v3438, 1.442695
    %v3458 = vpow.pop %v3457
    %v3459 = vmul.f32 %v3439, 1.442695
    %v3460 = vpow.pop %v3459
    %v3461 = vmul.f32 %v3440, 1.442695
    %v3462 = vpow.pop %v3461
    %v3463 = vmul.f32 %v3441, 1.442695
    %v3464 = vpow.pop %v3463
    %v3465 = vmul.f32 %v3442, 1.442695
    %v3466 = vpow.pop %v3465
    %v3467 = vmul.f32 %v3443, 1.442695
    %v3468 = vpow.pop %v3467
    %v3469 = vmul.f32 %v3444, 1.442695
    %v3470 = vpow.pop %v3469
    %v3471 = vmul.f32 %v3445, 1.442695
    %v3472 = vpow.pop %v3471
    %v3473 = vmul.f32 %v3446, 1.442695
    %v3474 = vpow.pop %v3473
    %v3475 = vmul.f32 %v3447, 1.442695
    %v3476 = vpow.pop %v3475
    %v3477 = vmul.f32 %v3448, 1.442695
    %v3478 = vpow.pop %v3477
    %v3479 = vmul.f32 %v3449, 1.442695
    %v3480 = vpow.pop %v3479
    %v3481 = vmul.f32 %v3450, 1.442695
    %v3482 = vpow.pop %v3481
    %v3483 = vsel %vm1097, %v3452, 0.0
    %3484 = vadd.xlane.f32.xlu0 %v3483
    %v3485 = vpop.xlane.xlu0 %3484
    %v3486 = vsel %vm1097, %v3454, 0.0
    %3487 = vadd.xlane.f32.xlu0 %v3486
    %v3488 = vpop.xlane.xlu0 %3487
    %v3489 = vsel %vm1097, %v3456, 0.0
    %3490 = vadd.xlane.f32.xlu0 %v3489
    %v3491 = vpop.xlane.xlu0 %3490
    %v3492 = vsel %vm1097, %v3458, 0.0
    %3493 = vadd.xlane.f32.xlu0 %v3492
    %v3494 = vpop.xlane.xlu0 %3493
    %v3495 = vsel %vm1097, %v3460, 0.0
    %3496 = vadd.xlane.f32.xlu0 %v3495
    %v3497 = vpop.xlane.xlu0 %3496
    %v3498 = vsel %vm1097, %v3462, 0.0
    %3499 = vadd.xlane.f32.xlu0 %v3498
    %v3500 = vpop.xlane.xlu0 %3499
    %v3501 = vsel %vm1097, %v3464, 0.0
    %3502 = vadd.xlane.f32.xlu0 %v3501
    %v3503 = vpop.xlane.xlu0 %3502
    %v3504 = vsel %vm1097, %v3466, 0.0
    %3505 = vadd.xlane.f32.xlu0 %v3504
    %v3506 = vpop.xlane.xlu0 %3505
    %v3507 = vsel %vm1097, %v3468, 0.0
    %3508 = vadd.xlane.f32.xlu0 %v3507
    %v3509 = vpop.xlane.xlu0 %3508
    %v3510 = vsel %vm1097, %v3470, 0.0
    %3511 = vadd.xlane.f32.xlu0 %v3510
    %v3512 = vpop.xlane.xlu0 %3511
    %v3513 = vsel %vm1097, %v3472, 0.0
    %3514 = vadd.xlane.f32.xlu0 %v3513
    %v3515 = vpop.xlane.xlu0 %3514
    %v3516 = vsel %vm1097, %v3474, 0.0
    %3517 = vadd.xlane.f32.xlu0 %v3516
    %v3518 = vpop.xlane.xlu0 %3517
    %v3519 = vsel %vm1097, %v3476, 0.0
    %3520 = vadd.xlane.f32.xlu0 %v3519
    %v3521 = vpop.xlane.xlu0 %3520
    %v3522 = vsel %vm1097, %v3478, 0.0
    %3523 = vadd.xlane.f32.xlu0 %v3522
    %v3524 = vpop.xlane.xlu0 %3523
    %v3525 = vsel %vm1097, %v3480, 0.0
    %3526 = vadd.xlane.f32.xlu0 %v3525
    %v3527 = vpop.xlane.xlu0 %3526
    %v3528 = vsel %vm1097, %v3482, 0.0
    %3529 = vadd.xlane.f32.xlu0 %v3528
    %v3530 = vpop.xlane.xlu0 %3529
    %v3531 = vrcp.pop %v3485
    %v3532 = vrcp.pop %v3488
    %v3533 = vrcp.pop %v3491
    %v3534 = vrcp.pop %v3494
    %v3535 = vrcp.pop %v3497
    %v3536 = vrcp.pop %v3500
    %v3537 = vrcp.pop %v3503
    %v3538 = vrcp.pop %v3506
    %v3539 = vrcp.pop %v3509
    %v3540 = vrcp.pop %v3512
    %v3541 = vrcp.pop %v3515
    %v3542 = vrcp.pop %v3518
    %v3543 = vrcp.pop %v3521
    %v3544 = vrcp.pop %v3524
    %v3545 = vrcp.pop %v3527
    %v3546 = vrcp.pop %v3530
    %v3547 = vmul.f32 %v3452, %v3531
    %v3548 = vmul.f32 %v3454, %v3532
    %v3549 = vmul.f32 %v3456, %v3533
    %v3550 = vmul.f32 %v3458, %v3534
    %v3551 = vmul.f32 %v3460, %v3535
    %v3552 = vmul.f32 %v3462, %v3536
    %v3553 = vmul.f32 %v3464, %v3537
    %v3554 = vmul.f32 %v3466, %v3538
    %v3555 = vmul.f32 %v3468, %v3539
    %v3556 = vmul.f32 %v3470, %v3540
    %v3557 = vmul.f32 %v3472, %v3541
    %v3558 = vmul.f32 %v3474, %v3542
    %v3559 = vmul.f32 %v3476, %v3543
    %v3560 = vmul.f32 %v3478, %v3544
    %v3561 = vmul.f32 %v3480, %v3545
    %v3562 = vmul.f32 %v3482, %v3546
    %v3563 = vpack.c.bf16 %v3548, %v3547
    %v3564 = vpack.c.bf16 %v3550, %v3549
    %v3565 = vpack.c.bf16 %v3552, %v3551
    %v3566 = vpack.c.bf16 %v3554, %v3553
    %v3567 = vpack.c.bf16 %v3556, %v3555
    %v3568 = vpack.c.bf16 %v3558, %v3557
    %v3569 = vpack.c.bf16 %v3560, %v3559
    %v3570 = vpack.c.bf16 %v3562, %v3561
    %v3572 = vsel %vm1097, %v3563, 0
    %v3575 = vsel %vm1285, %v2577, 0
    %3577 = vmatprep.subr.bf16.mxu0 0
    %3578 = vmatpush1.bf16.msra.mxu0 %v3575
    %3579 = vmatprep.subr.bf16.mxu0 0
    %3580 = vmatpush1.bf16.msra.mxu0 0
    %3581 = vmatprep.subr.bf16.mxu0 0
    %3582 = vmatpush1.bf16.msra.mxu0 0
    %3583 = vmatprep.subr.bf16.mxu0 0
    %3584 = vmatpush1.bf16.msra.mxu0 0
    %3585 = vmatprep.subr.bf16.mxu0 0
    %3586 = vmatpush1.bf16.msra.mxu0 0
    %3587 = vmatprep.subr.bf16.mxu0 0
    %3588 = vmatpush1.bf16.msra.mxu0 0
    %3589 = vmatprep.subr.bf16.mxu0 0
    %3590 = vmatpush1.bf16.msra.mxu0 0
    %3591 = vmatprep.subr.bf16.mxu0 0
    %3592 = vmatpush1.bf16.msra.mxu0 0
    %3593 = vmatprep.subr.bf16.mxu0 0
    %3594 = vmatpush1.bf16.msra.mxu0 0
    %3595 = vmatprep.subr.bf16.mxu0 0
    %3596 = vmatpush1.bf16.msra.mxu0 0
    %3597 = vmatprep.subr.bf16.mxu0 0
    %3598 = vmatpush1.bf16.msra.mxu0 0
    %3599 = vmatprep.subr.bf16.mxu0 0
    %3600 = vmatpush1.bf16.msra.mxu0 0
    %3601 = vmatprep.subr.bf16.mxu0 0
    %3602 = vmatpush1.bf16.msra.mxu0 0
    %3603 = vmatprep.subr.bf16.mxu0 0
    %3604 = vmatpush1.bf16.msra.mxu0 0
    %3605 = vmatprep.subr.bf16.mxu0 0
    %3606 = vmatpush1.bf16.msra.mxu0 0
    %3607 = vmatprep.subr.bf16.mxu0 0
    %3608 = vmatpush1.bf16.msra.mxu0 0
    %3609 = vmatprep.mubr.bf16.mxu0 0
    %3610 = vmatmul.mubr.bf16.gmra.mrb[0].mxu0 %v3572
    %v3611 = vpop.f32.mrb[0].mxu0
    %v3612 = vadd.f32 0.0, %v3611
    %v3613 = vpop.f32.mrb[0].mxu0
    %v3614 = vpop.f32.mrb[0].mxu0
    %v3615 = vpop.f32.mrb[0].mxu0
    %3616 = vdwg.mxu0
    %v3618 = vrot.slane %v3563, 4
    %3620 = vrot.lane.b32.xlu0 %v2577, 96
    %v3621 = vpop.permute.xlu0 %3620
    %v3623 = vsel %vm1097, %v3618, 0
    %v3626 = vsel %vm1285, %v3621, 0
    %3628 = vmatprep.subr.bf16.mxu0 0
    %3629 = vmatpush1.bf16.msra.mxu0 %v3626
    %3630 = vmatprep.subr.bf16.mxu0 0
    %3631 = vmatpush1.bf16.msra.mxu0 0
    %3632 = vmatprep.subr.bf16.mxu0 0
    %3633 = vmatpush1.bf16.msra.mxu0 0
    %3634 = vmatprep.subr.bf16.mxu0 0
    %3635 = vmatpush1.bf16.msra.mxu0 0
    %3636 = vmatprep.subr.bf16.mxu0 0
    %3637 = vmatpush1.bf16.msra.mxu0 0
    %3638 = vmatprep.subr.bf16.mxu0 0
    %3639 = vmatpush1.bf16.msra.mxu0 0
    %3640 = vmatprep.subr.bf16.mxu0 0
    %3641 = vmatpush1.bf16.msra.mxu0 0
    %3642 = vmatprep.subr.bf16.mxu0 0
    %3643 = vmatpush1.bf16.msra.mxu0 0
    %3644 = vmatprep.subr.bf16.mxu0 0
    %3645 = vmatpush1.bf16.msra.mxu0 0
    %3646 = vmatprep.subr.bf16.mxu0 0
    %3647 = vmatpush1.bf16.msra.mxu0 0
    %3648 = vmatprep.subr.bf16.mxu0 0
    %3649 = vmatpush1.bf16.msra.mxu0 0
    %3650 = vmatprep.subr.bf16.mxu0 0
    %3651 = vmatpush1.bf16.msra.mxu0 0
    %3652 = vmatprep.subr.bf16.mxu0 0
    %3653 = vmatpush1.bf16.msra.mxu0 0
    %3654 = vmatprep.subr.bf16.mxu0 0
    %3655 = vmatpush1.bf16.msra.mxu0 0
    %3656 = vmatprep.subr.bf16.mxu0 0
    %3657 = vmatpush1.bf16.msra.mxu0 0
    %3658 = vmatprep.subr.bf16.mxu0 0
    %3659 = vmatpush1.bf16.msra.mxu0 0
    %3660 = vmatprep.mubr.bf16.mxu0 0
    %3661 = vmatmul.mubr.bf16.gmra.mrb[0].mxu0 %v3623
    %v3662 = vpop.f32.mrb[0].mxu0
    %v3663 = vadd.f32 0.0, %v3662
    %v3664 = vpop.f32.mrb[0].mxu0
    %v3665 = vpop.f32.mrb[0].mxu0
    %v3666 = vpop.f32.mrb[0].mxu0
    %3667 = vdwg.mxu0
    %3668 = vrot.lane.b32.xlu0 %v2577, 64
    %v3669 = vpop.permute.xlu0 %3668
    %v3671 = vsel %vm1097, %v3564, 0
    %v3674 = vsel %vm1285, %v3669, 0
    %3676 = vmatprep.subr.bf16.mxu0 0
    %3677 = vmatpush1.bf16.msra.mxu0 %v3674
    %3678 = vmatprep.subr.bf16.mxu0 0
    %3679 = vmatpush1.bf16.msra.mxu0 0
    %3680 = vmatprep.subr.bf16.mxu0 0
    %3681 = vmatpush1.bf16.msra.mxu0 0
    %3682 = vmatprep.subr.bf16.mxu0 0
    %3683 = vmatpush1.bf16.msra.mxu0 0
    %3684 = vmatprep.subr.bf16.mxu0 0
    %3685 = vmatpush1.bf16.msra.mxu0 0
    %3686 = vmatprep.subr.bf16.mxu0 0
    %3687 = vmatpush1.bf16.msra.mxu0 0
    %3688 = vmatprep.subr.bf16.mxu0 0
    %3689 = vmatpush1.bf16.msra.mxu0 0
    %3690 = vmatprep.subr.bf16.mxu0 0
    %3691 = vmatpush1.bf16.msra.mxu0 0
    %3692 = vmatprep.subr.bf16.mxu0 0
    %3693 = vmatpush1.bf16.msra.mxu0 0
    %3694 = vmatprep.subr.bf16.mxu0 0
    %3695 = vmatpush1.bf16.msra.mxu0 0
    %3696 = vmatprep.subr.bf16.mxu0 0
    %3697 = vmatpush1.bf16.msra.mxu0 0
    %3698 = vmatprep.subr.bf16.mxu0 0
    %3699 = vmatpush1.bf16.msra.mxu0 0
    %3700 = vmatprep.subr.bf16.mxu0 0
    %3701 = vmatpush1.bf16.msra.mxu0 0
    %3702 = vmatprep.subr.bf16.mxu0 0
    %3703 = vmatpush1.bf16.msra.mxu0 0
    %3704 = vmatprep.subr.bf16.mxu0 0
    %3705 = vmatpush1.bf16.msra.mxu0 0
    %3706 = vmatprep.subr.bf16.mxu0 0
    %3707 = vmatpush1.bf16.msra.mxu0 0
    %3708 = vmatprep.mubr.bf16.mxu0 0
    %3709 = vmatmul.mubr.bf16.gmra.mrb[0].mxu0 %v3671
    %v3710 = vpop.f32.mrb[0].mxu0
    %v3711 = vadd.f32 0.0, %v3710
    %v3712 = vpop.f32.mrb[0].mxu0
    %v3713 = vpop.f32.mrb[0].mxu0
    %v3714 = vpop.f32.mrb[0].mxu0
    %3715 = vdwg.mxu0
    %v3717 = vrot.slane %v3564, 4
    %3718 = vrot.lane.b32.xlu0 %v2577, 32
    %v3719 = vpop.permute.xlu0 %3718
    %v3721 = vsel %vm1097, %v3717, 0
    %v3724 = vsel %vm1285, %v3719, 0
    %3726 = vmatprep.subr.bf16.mxu0 0
    %3727 = vmatpush1.bf16.msra.mxu0 %v3724
    %3728 = vmatprep.subr.bf16.mxu0 0
    %3729 = vmatpush1.bf16.msra.mxu0 0
    %3730 = vmatprep.subr.bf16.mxu0 0
    %3731 = vmatpush1.bf16.msra.mxu0 0
    %3732 = vmatprep.subr.bf16.mxu0 0
    %3733 = vmatpush1.bf16.msra.mxu0 0
    %3734 = vmatprep.subr.bf16.mxu0 0
    %3735 = vmatpush1.bf16.msra.mxu0 0
    %3736 = vmatprep.subr.bf16.mxu0 0
    %3737 = vmatpush1.bf16.msra.mxu0 0
    %3738 = vmatprep.subr.bf16.mxu0 0
    %3739 = vmatpush1.bf16.msra.mxu0 0
    %3740 = vmatprep.subr.bf16.mxu0 0
    %3741 = vmatpush1.bf16.msra.mxu0 0
    %3742 = vmatprep.subr.bf16.mxu0 0
    %3743 = vmatpush1.bf16.msra.mxu0 0
    %3744 = vmatprep.subr.bf16.mxu0 0
    %3745 = vmatpush1.bf16.msra.mxu0 0
    %3746 = vmatprep.subr.bf16.mxu0 0
    %3747 = vmatpush1.bf16.msra.mxu0 0
    %3748 = vmatprep.subr.bf16.mxu0 0
    %3749 = vmatpush1.bf16.msra.mxu0 0
    %3750 = vmatprep.subr.bf16.mxu0 0
    %3751 = vmatpush1.bf16.msra.mxu0 0
    %3752 = vmatprep.subr.bf16.mxu0 0
    %3753 = vmatpush1.bf16.msra.mxu0 0
    %3754 = vmatprep.subr.bf16.mxu0 0
    %3755 = vmatpush1.bf16.msra.mxu0 0
    %3756 = vmatprep.subr.bf16.mxu0 0
    %3757 = vmatpush1.bf16.msra.mxu0 0
    %3758 = vmatprep.mubr.bf16.mxu0 0
    %3759 = vmatmul.mubr.bf16.gmra.mrb[0].mxu0 %v3721
    %v3760 = vpop.f32.mrb[0].mxu0
    %v3761 = vadd.f32 0.0, %v3760
    %v3762 = vpop.f32.mrb[0].mxu0
    %v3763 = vpop.f32.mrb[0].mxu0
    %v3764 = vpop.f32.mrb[0].mxu0
    %3765 = vdwg.mxu0
    %v3767 = vsel %vm1097, %v3565, 0
    %v3770 = vsel %vm1285, %v2578, 0
    %3772 = vmatprep.subr.bf16.mxu0 0
    %3773 = vmatpush1.bf16.msra.mxu0 %v3770
    %3774 = vmatprep.subr.bf16.mxu0 0
    %3775 = vmatpush1.bf16.msra.mxu0 0
    %3776 = vmatprep.subr.bf16.mxu0 0
    %3777 = vmatpush1.bf16.msra.mxu0 0
    %3778 = vmatprep.subr.bf16.mxu0 0
    %3779 = vmatpush1.bf16.msra.mxu0 0
    %3780 = vmatprep.subr.bf16.mxu0 0
    %3781 = vmatpush1.bf16.msra.mxu0 0
    %3782 = vmatprep.subr.bf16.mxu0 0
    %3783 = vmatpush1.bf16.msra.mxu0 0
    %3784 = vmatprep.subr.bf16.mxu0 0
    %3785 = vmatpush1.bf16.msra.mxu0 0
    %3786 = vmatprep.subr.bf16.mxu0 0
    %3787 = vmatpush1.bf16.msra.mxu0 0
    %3788 = vmatprep.subr.bf16.mxu0 0
    %3789 = vmatpush1.bf16.msra.mxu0 0
    %3790 = vmatprep.subr.bf16.mxu0 0
    %3791 = vmatpush1.bf16.msra.mxu0 0
    %3792 = vmatprep.subr.bf16.mxu0 0
    %3793 = vmatpush1.bf16.msra.mxu0 0
    %3794 = vmatprep.subr.bf16.mxu0 0
    %3795 = vmatpush1.bf16.msra.mxu0 0
    %3796 = vmatprep.subr.bf16.mxu0 0
    %3797 = vmatpush1.bf16.msra.mxu0 0
    %3798 = vmatprep.subr.bf16.mxu0 0
    %3799 = vmatpush1.bf16.msra.mxu0 0
    %3800 = vmatprep.subr.bf16.mxu0 0
    %3801 = vmatpush1.bf16.msra.mxu0 0
    %3802 = vmatprep.subr.bf16.mxu0 0
    %3803 = vmatpush1.bf16.msra.mxu0 0
    %3804 = vmatprep.mubr.bf16.mxu0 0
    %3805 = vmatmul.mubr.bf16.gmra.mrb[0].mxu0 %v3767
    %v3806 = vpop.f32.mrb[0].mxu0
    %v3807 = vadd.f32 0.0, %v3806
    %v3808 = vpop.f32.mrb[0].mxu0
    %v3809 = vpop.f32.mrb[0].mxu0
    %v3810 = vpop.f32.mrb[0].mxu0
    %3811 = vdwg.mxu0
    %v3813 = vrot.slane %v3565, 4
    %3815 = vrot.lane.b32.xlu0 %v2578, 96
    %v3816 = vpop.permute.xlu0 %3815
    %v3818 = vsel %vm1097, %v3813, 0
    %v3821 = vsel %vm1285, %v3816, 0
    %3823 = vmatprep.subr.bf16.mxu0 0
    %3824 = vmatpush1.bf16.msra.mxu0 %v3821
    %3825 = vmatprep.subr.bf16.mxu0 0
    %3826 = vmatpush1.bf16.msra.mxu0 0
    %3827 = vmatprep.subr.bf16.mxu0 0
    %3828 = vmatpush1.bf16.msra.mxu0 0
    %3829 = vmatprep.subr.bf16.mxu0 0
    %3830 = vmatpush1.bf16.msra.mxu0 0
    %3831 = vmatprep.subr.bf16.mxu0 0
    %3832 = vmatpush1.bf16.msra.mxu0 0
    %3833 = vmatprep.subr.bf16.mxu0 0
    %3834 = vmatpush1.bf16.msra.mxu0 0
    %3835 = vmatprep.subr.bf16.mxu0 0
    %3836 = vmatpush1.bf16.msra.mxu0 0
    %3837 = vmatprep.subr.bf16.mxu0 0
    %3838 = vmatpush1.bf16.msra.mxu0 0
    %3839 = vmatprep.subr.bf16.mxu0 0
    %3840 = vmatpush1.bf16.msra.mxu0 0
    %3841 = vmatprep.subr.bf16.mxu0 0
    %3842 = vmatpush1.bf16.msra.mxu0 0
    %3843 = vmatprep.subr.bf16.mxu0 0
    %3844 = vmatpush1.bf16.msra.mxu0 0
    %3845 = vmatprep.subr.bf16.mxu0 0
    %3846 = vmatpush1.bf16.msra.mxu0 0
    %3847 = vmatprep.subr.bf16.mxu0 0
    %3848 = vmatpush1.bf16.msra.mxu0 0
    %3849 = vmatprep.subr.bf16.mxu0 0
    %3850 = vmatpush1.bf16.msra.mxu0 0
    %3851 = vmatprep.subr.bf16.mxu0 0
    %3852 = vmatpush1.bf16.msra.mxu0 0
    %3853 = vmatprep.subr.bf16.mxu0 0
    %3854 = vmatpush1.bf16.msra.mxu0 0
    %3855 = vmatprep.mubr.bf16.mxu0 0
    %3856 = vmatmul.mubr.bf16.gmra.mrb[0].mxu0 %v3818
    %v3857 = vpop.f32.mrb[0].mxu0
    %v3858 = vadd.f32 0.0, %v3857
    %v3859 = vpop.f32.mrb[0].mxu0
    %v3860 = vpop.f32.mrb[0].mxu0
    %v3861 = vpop.f32.mrb[0].mxu0
    %3862 = vdwg.mxu0
    %3863 = vrot.lane.b32.xlu0 %v2578, 64
    %v3864 = vpop.permute.xlu0 %3863
    %v3866 = vsel %vm1097, %v3566, 0
    %v3869 = vsel %vm1285, %v3864, 0
    %3871 = vmatprep.subr.bf16.mxu0 0
    %3872 = vmatpush1.bf16.msra.mxu0 %v3869
    %3873 = vmatprep.subr.bf16.mxu0 0
    %3874 = vmatpush1.bf16.msra.mxu0 0
    %3875 = vmatprep.subr.bf16.mxu0 0
    %3876 = vmatpush1.bf16.msra.mxu0 0
    %3877 = vmatprep.subr.bf16.mxu0 0
    %3878 = vmatpush1.bf16.msra.mxu0 0
    %3879 = vmatprep.subr.bf16.mxu0 0
    %3880 = vmatpush1.bf16.msra.mxu0 0
    %3881 = vmatprep.subr.bf16.mxu0 0
    %3882 = vmatpush1.bf16.msra.mxu0 0
    %3883 = vmatprep.subr.bf16.mxu0 0
    %3884 = vmatpush1.bf16.msra.mxu0 0
    %3885 = vmatprep.subr.bf16.mxu0 0
    %3886 = vmatpush1.bf16.msra.mxu0 0
    %3887 = vmatprep.subr.bf16.mxu0 0
    %3888 = vmatpush1.bf16.msra.mxu0 0
    %3889 = vmatprep.subr.bf16.mxu0 0
    %3890 = vmatpush1.bf16.msra.mxu0 0
    %3891 = vmatprep.subr.bf16.mxu0 0
    %3892 = vmatpush1.bf16.msra.mxu0 0
    %3893 = vmatprep.subr.bf16.mxu0 0
    %3894 = vmatpush1.bf16.msra.mxu0 0
    %3895 = vmatprep.subr.bf16.mxu0 0
    %3896 = vmatpush1.bf16.msra.mxu0 0
    %3897 = vmatprep.subr.bf16.mxu0 0
    %3898 = vmatpush1.bf16.msra.mxu0 0
    %3899 = vmatprep.subr.bf16.mxu0 0
    %3900 = vmatpush1.bf16.msra.mxu0 0
    %3901 = vmatprep.subr.bf16.mxu0 0
    %3902 = vmatpush1.bf16.msra.mxu0 0
    %3903 = vmatprep.mubr.bf16.mxu0 0
    %3904 = vmatmul.mubr.bf16.gmra.mrb[0].mxu0 %v3866
    %v3905 = vpop.f32.mrb[0].mxu0
    %v3906 = vadd.f32 0.0, %v3905
    %v3907 = vpop.f32.mrb[0].mxu0
    %v3908 = vpop.f32.mrb[0].mxu0
    %v3909 = vpop.f32.mrb[0].mxu0
    %3910 = vdwg.mxu0
    %v3912 = vrot.slane %v3566, 4
    %3913 = vrot.lane.b32.xlu0 %v2578, 32
    %v3914 = vpop.permute.xlu0 %3913
    %v3916 = vsel %vm1097, %v3912, 0
    %v3919 = vsel %vm1285, %v3914, 0
    %3921 = vmatprep.subr.bf16.mxu0 0
    %3922 = vmatpush1.bf16.msra.mxu0 %v3919
    %3923 = vmatprep.subr.bf16.mxu0 0
    %3924 = vmatpush1.bf16.msra.mxu0 0
    %3925 = vmatprep.subr.bf16.mxu0 0
    %3926 = vmatpush1.bf16.msra.mxu0 0
    %3927 = vmatprep.subr.bf16.mxu0 0
    %3928 = vmatpush1.bf16.msra.mxu0 0
    %3929 = vmatprep.subr.bf16.mxu0 0
    %3930 = vmatpush1.bf16.msra.mxu0 0
    %3931 = vmatprep.subr.bf16.mxu0 0
    %3932 = vmatpush1.bf16.msra.mxu0 0
    %3933 = vmatprep.subr.bf16.mxu0 0
    %3934 = vmatpush1.bf16.msra.mxu0 0
    %3935 = vmatprep.subr.bf16.mxu0 0
    %3936 = vmatpush1.bf16.msra.mxu0 0
    %3937 = vmatprep.subr.bf16.mxu0 0
    %3938 = vmatpush1.bf16.msra.mxu0 0
    %3939 = vmatprep.subr.bf16.mxu0 0
    %3940 = vmatpush1.bf16.msra.mxu0 0
    %3941 = vmatprep.subr.bf16.mxu0 0
    %3942 = vmatpush1.bf16.msra.mxu0 0
    %3943 = vmatprep.subr.bf16.mxu0 0
    %3944 = vmatpush1.bf16.msra.mxu0 0
    %3945 = vmatprep.subr.bf16.mxu0 0
    %3946 = vmatpush1.bf16.msra.mxu0 0
    %3947 = vmatprep.subr.bf16.mxu0 0
    %3948 = vmatpush1.bf16.msra.mxu0 0
    %3949 = vmatprep.subr.bf16.mxu0 0
    %3950 = vmatpush1.bf16.msra.mxu0 0
    %3951 = vmatprep.subr.bf16.mxu0 0
    %3952 = vmatpush1.bf16.msra.mxu0 0
    %3953 = vmatprep.mubr.bf16.mxu0 0
    %3954 = vmatmul.mubr.bf16.gmra.mrb[0].mxu0 %v3916
    %v3955 = vpop.f32.mrb[0].mxu0
    %v3956 = vadd.f32 0.0, %v3955
    %v3957 = vpop.f32.mrb[0].mxu0
    %v3958 = vpop.f32.mrb[0].mxu0
    %v3959 = vpop.f32.mrb[0].mxu0
    %3960 = vdwg.mxu0
    %3962 = vrot.lane.b32.xlu0 %v3663, 32
    %v3963 = vpop.permute.xlu0 %3962
    %3966 = vrot.lane.b32.xlu0 %v3711, 64
    %v3967 = vpop.permute.xlu0 %3966
    %3970 = vrot.lane.b32.xlu0 %v3761, 96
    %v3971 = vpop.permute.xlu0 %3970
    %3974 = vrot.lane.b32.xlu0 %v3858, 32
    %v3975 = vpop.permute.xlu0 %3974
    %3978 = vrot.lane.b32.xlu0 %v3906, 64
    %v3979 = vpop.permute.xlu0 %3978
    %3982 = vrot.lane.b32.xlu0 %v3956, 96
    %v3983 = vpop.permute.xlu0 %3982
    %v3985 = vsel %vm102, %v3612, %v3963
    %v3986 = vsel %vm1698, %v3985, %v3967
    %v3987 = vsel %vm1700, %v3986, %v3971
    %v3988 = vsel %vm102, %v3807, %v3975
    %v3989 = vsel %vm1698, %v3988, %v3979
    %v3990 = vsel %vm1700, %v3989, %v3983
    %v3991 = vrot.slane %v2577, 4
    %v3993 = vsel %vm1097, %v3567, 0
    %v3996 = vsel %vm1285, %v3991, 0
    %3998 = vmatprep.subr.bf16.mxu0 0
    %3999 = vmatpush1.bf16.msra.mxu0 %v3996
    %4000 = vmatprep.subr.bf16.mxu0 0
    %4001 = vmatpush1.bf16.msra.mxu0 0
    %4002 = vmatprep.subr.bf16.mxu0 0
    %4003 = vmatpush1.bf16.msra.mxu0 0
    %4004 = vmatprep.subr.bf16.mxu0 0
    %4005 = vmatpush1.bf16.msra.mxu0 0
    %4006 = vmatprep.subr.bf16.mxu0 0
    %4007 = vmatpush1.bf16.msra.mxu0 0
    %4008 = vmatprep.subr.bf16.mxu0 0
    %4009 = vmatpush1.bf16.msra.mxu0 0
    %4010 = vmatprep.subr.bf16.mxu0 0
    %4011 = vmatpush1.bf16.msra.mxu0 0
    %4012 = vmatprep.subr.bf16.mxu0 0
    %4013 = vmatpush1.bf16.msra.mxu0 0
    %4014 = vmatprep.subr.bf16.mxu0 0
    %4015 = vmatpush1.bf16.msra.mxu0 0
    %4016 = vmatprep.subr.bf16.mxu0 0
    %4017 = vmatpush1.bf16.msra.mxu0 0
    %4018 = vmatprep.subr.bf16.mxu0 0
    %4019 = vmatpush1.bf16.msra.mxu0 0
    %4020 = vmatprep.subr.bf16.mxu0 0
    %4021 = vmatpush1.bf16.msra.mxu0 0
    %4022 = vmatprep.subr.bf16.mxu0 0
    %4023 = vmatpush1.bf16.msra.mxu0 0
    %4024 = vmatprep.subr.bf16.mxu0 0
    %4025 = vmatpush1.bf16.msra.mxu0 0
    %4026 = vmatprep.subr.bf16.mxu0 0
    %4027 = vmatpush1.bf16.msra.mxu0 0
    %4028 = vmatprep.subr.bf16.mxu0 0
    %4029 = vmatpush1.bf16.msra.mxu0 0
    %4030 = vmatprep.mubr.bf16.mxu0 0
    %4031 = vmatmul.mubr.bf16.gmra.mrb[0].mxu0 %v3993
    %v4032 = vpop.f32.mrb[0].mxu0
    %v4033 = vadd.f32 0.0, %v4032
    %v4034 = vpop.f32.mrb[0].mxu0
    %v4035 = vpop.f32.mrb[0].mxu0
    %v4036 = vpop.f32.mrb[0].mxu0
    %4037 = vdwg.mxu0
    %v4039 = vrot.slane %v3567, 4
    %4040 = vrot.lane.b32.xlu0 %v3991, 96
    %v4041 = vpop.permute.xlu0 %4040
    %v4043 = vsel %vm1097, %v4039, 0
    %v4046 = vsel %vm1285, %v4041, 0
    %4048 = vmatprep.subr.bf16.mxu0 0
    %4049 = vmatpush1.bf16.msra.mxu0 %v4046
    %4050 = vmatprep.subr.bf16.mxu0 0
    %4051 = vmatpush1.bf16.msra.mxu0 0
    %4052 = vmatprep.subr.bf16.mxu0 0
    %4053 = vmatpush1.bf16.msra.mxu0 0
    %4054 = vmatprep.subr.bf16.mxu0 0
    %4055 = vmatpush1.bf16.msra.mxu0 0
    %4056 = vmatprep.subr.bf16.mxu0 0
    %4057 = vmatpush1.bf16.msra.mxu0 0
    %4058 = vmatprep.subr.bf16.mxu0 0
    %4059 = vmatpush1.bf16.msra.mxu0 0
    %4060 = vmatprep.subr.bf16.mxu0 0
    %4061 = vmatpush1.bf16.msra.mxu0 0
    %4062 = vmatprep.subr.bf16.mxu0 0
    %4063 = vmatpush1.bf16.msra.mxu0 0
    %4064 = vmatprep.subr.bf16.mxu0 0
    %4065 = vmatpush1.bf16.msra.mxu0 0
    %4066 = vmatprep.subr.bf16.mxu0 0
    %4067 = vmatpush1.bf16.msra.mxu0 0
    %4068 = vmatprep.subr.bf16.mxu0 0
    %4069 = vmatpush1.bf16.msra.mxu0 0
    %4070 = vmatprep.subr.bf16.mxu0 0
    %4071 = vmatpush1.bf16.msra.mxu0 0
    %4072 = vmatprep.subr.bf16.mxu0 0
    %4073 = vmatpush1.bf16.msra.mxu0 0
    %4074 = vmatprep.subr.bf16.mxu0 0
    %4075 = vmatpush1.bf16.msra.mxu0 0
    %4076 = vmatprep.subr.bf16.mxu0 0
    %4077 = vmatpush1.bf16.msra.mxu0 0
    %4078 = vmatprep.subr.bf16.mxu0 0
    %4079 = vmatpush1.bf16.msra.mxu0 0
    %4080 = vmatprep.mubr.bf16.mxu0 0
    %4081 = vmatmul.mubr.bf16.gmra.mrb[0].mxu0 %v4043
    %v4082 = vpop.f32.mrb[0].mxu0
    %v4083 = vadd.f32 0.0, %v4082
    %v4084 = vpop.f32.mrb[0].mxu0
    %v4085 = vpop.f32.mrb[0].mxu0
    %v4086 = vpop.f32.mrb[0].mxu0
    %4087 = vdwg.mxu0
    %4088 = vrot.lane.b32.xlu0 %v3991, 64
    %v4089 = vpop.permute.xlu0 %4088
    %v4091 = vsel %vm1097, %v3568, 0
    %v4094 = vsel %vm1285, %v4089, 0
    %4096 = vmatprep.subr.bf16.mxu0 0
    %4097 = vmatpush1.bf16.msra.mxu0 %v4094
    %4098 = vmatprep.subr.bf16.mxu0 0
    %4099 = vmatpush1.bf16.msra.mxu0 0
    %4100 = vmatprep.subr.bf16.mxu0 0
    %4101 = vmatpush1.bf16.msra.mxu0 0
    %4102 = vmatprep.subr.bf16.mxu0 0
    %4103 = vmatpush1.bf16.msra.mxu0 0
    %4104 = vmatprep.subr.bf16.mxu0 0
    %4105 = vmatpush1.bf16.msra.mxu0 0
    %4106 = vmatprep.subr.bf16.mxu0 0
    %4107 = vmatpush1.bf16.msra.mxu0 0
    %4108 = vmatprep.subr.bf16.mxu0 0
    %4109 = vmatpush1.bf16.msra.mxu0 0
    %4110 = vmatprep.subr.bf16.mxu0 0
    %4111 = vmatpush1.bf16.msra.mxu0 0
    %4112 = vmatprep.subr.bf16.mxu0 0
    %4113 = vmatpush1.bf16.msra.mxu0 0
    %4114 = vmatprep.subr.bf16.mxu0 0
    %4115 = vmatpush1.bf16.msra.mxu0 0
    %4116 = vmatprep.subr.bf16.mxu0 0
    %4117 = vmatpush1.bf16.msra.mxu0 0
    %4118 = vmatprep.subr.bf16.mxu0 0
    %4119 = vmatpush1.bf16.msra.mxu0 0
    %4120 = vmatprep.subr.bf16.mxu0 0
    %4121 = vmatpush1.bf16.msra.mxu0 0
    %4122 = vmatprep.subr.bf16.mxu0 0
    %4123 = vmatpush1.bf16.msra.mxu0 0
    %4124 = vmatprep.subr.bf16.mxu0 0
    %4125 = vmatpush1.bf16.msra.mxu0 0
    %4126 = vmatprep.subr.bf16.mxu0 0
    %4127 = vmatpush1.bf16.msra.mxu0 0
    %4128 = vmatprep.mubr.bf16.mxu0 0
    %4129 = vmatmul.mubr.bf16.gmra.mrb[0].mxu0 %v4091
    %v4130 = vpop.f32.mrb[0].mxu0
    %v4131 = vadd.f32 0.0, %v4130
    %v4132 = vpop.f32.mrb[0].mxu0
    %v4133 = vpop.f32.mrb[0].mxu0
    %v4134 = vpop.f32.mrb[0].mxu0
    %4135 = vdwg.mxu0
    %v4137 = vrot.slane %v3568, 4
    %4138 = vrot.lane.b32.xlu0 %v3991, 32
    %v4139 = vpop.permute.xlu0 %4138
    %v4141 = vsel %vm1097, %v4137, 0
    %v4144 = vsel %vm1285, %v4139, 0
    %4146 = vmatprep.subr.bf16.mxu0 0
    %4147 = vmatpush1.bf16.msra.mxu0 %v4144
    %4148 = vmatprep.subr.bf16.mxu0 0
    %4149 = vmatpush1.bf16.msra.mxu0 0
    %4150 = vmatprep.subr.bf16.mxu0 0
    %4151 = vmatpush1.bf16.msra.mxu0 0
    %4152 = vmatprep.subr.bf16.mxu0 0
    %4153 = vmatpush1.bf16.msra.mxu0 0
    %4154 = vmatprep.subr.bf16.mxu0 0
    %4155 = vmatpush1.bf16.msra.mxu0 0
    %4156 = vmatprep.subr.bf16.mxu0 0
    %4157 = vmatpush1.bf16.msra.mxu0 0
    %4158 = vmatprep.subr.bf16.mxu0 0
    %4159 = vmatpush1.bf16.msra.mxu0 0
    %4160 = vmatprep.subr.bf16.mxu0 0
    %4161 = vmatpush1.bf16.msra.mxu0 0
    %4162 = vmatprep.subr.bf16.mxu0 0
    %4163 = vmatpush1.bf16.msra.mxu0 0
    %4164 = vmatprep.subr.bf16.mxu0 0
    %4165 = vmatpush1.bf16.msra.mxu0 0
    %4166 = vmatprep.subr.bf16.mxu0 0
    %4167 = vmatpush1.bf16.msra.mxu0 0
    %4168 = vmatprep.subr.bf16.mxu0 0
    %4169 = vmatpush1.bf16.msra.mxu0 0
    %4170 = vmatprep.subr.bf16.mxu0 0
    %4171 = vmatpush1.bf16.msra.mxu0 0
    %4172 = vmatprep.subr.bf16.mxu0 0
    %4173 = vmatpush1.bf16.msra.mxu0 0
    %4174 = vmatprep.subr.bf16.mxu0 0
    %4175 = vmatpush1.bf16.msra.mxu0 0
    %4176 = vmatprep.subr.bf16.mxu0 0
    %4177 = vmatpush1.bf16.msra.mxu0 0
    %4178 = vmatprep.mubr.bf16.mxu0 0
    %4179 = vmatmul.mubr.bf16.gmra.mrb[0].mxu0 %v4141
    %v4180 = vpop.f32.mrb[0].mxu0
    %v4181 = vadd.f32 0.0, %v4180
    %v4182 = vpop.f32.mrb[0].mxu0
    %v4183 = vpop.f32.mrb[0].mxu0
    %v4184 = vpop.f32.mrb[0].mxu0
    %4185 = vdwg.mxu0
    %v4186 = vrot.slane %v2578, 4
    %v4188 = vsel %vm1097, %v3569, 0
    %v4191 = vsel %vm1285, %v4186, 0
    %4193 = vmatprep.subr.bf16.mxu0 0
    %4194 = vmatpush1.bf16.msra.mxu0 %v4191
    %4195 = vmatprep.subr.bf16.mxu0 0
    %4196 = vmatpush1.bf16.msra.mxu0 0
    %4197 = vmatprep.subr.bf16.mxu0 0
    %4198 = vmatpush1.bf16.msra.mxu0 0
    %4199 = vmatprep.subr.bf16.mxu0 0
    %4200 = vmatpush1.bf16.msra.mxu0 0
    %4201 = vmatprep.subr.bf16.mxu0 0
    %4202 = vmatpush1.bf16.msra.mxu0 0
    %4203 = vmatprep.subr.bf16.mxu0 0
    %4204 = vmatpush1.bf16.msra.mxu0 0
    %4205 = vmatprep.subr.bf16.mxu0 0
    %4206 = vmatpush1.bf16.msra.mxu0 0
    %4207 = vmatprep.subr.bf16.mxu0 0
    %4208 = vmatpush1.bf16.msra.mxu0 0
    %4209 = vmatprep.subr.bf16.mxu0 0
    %4210 = vmatpush1.bf16.msra.mxu0 0
    %4211 = vmatprep.subr.bf16.mxu0 0
    %4212 = vmatpush1.bf16.msra.mxu0 0
    %4213 = vmatprep.subr.bf16.mxu0 0
    %4214 = vmatpush1.bf16.msra.mxu0 0
    %4215 = vmatprep.subr.bf16.mxu0 0
    %4216 = vmatpush1.bf16.msra.mxu0 0
    %4217 = vmatprep.subr.bf16.mxu0 0
    %4218 = vmatpush1.bf16.msra.mxu0 0
    %4219 = vmatprep.subr.bf16.mxu0 0
    %4220 = vmatpush1.bf16.msra.mxu0 0
    %4221 = vmatprep.subr.bf16.mxu0 0
    %4222 = vmatpush1.bf16.msra.mxu0 0
    %4223 = vmatprep.subr.bf16.mxu0 0
    %4224 = vmatpush1.bf16.msra.mxu0 0
    %4225 = vmatprep.mubr.bf16.mxu0 0
    %4226 = vmatmul.mubr.bf16.gmra.mrb[0].mxu0 %v4188
    %v4227 = vpop.f32.mrb[0].mxu0
    %v4228 = vadd.f32 0.0, %v4227
    %v4229 = vpop.f32.mrb[0].mxu0
    %v4230 = vpop.f32.mrb[0].mxu0
    %v4231 = vpop.f32.mrb[0].mxu0
    %4232 = vdwg.mxu0
    %v4234 = vrot.slane %v3569, 4
    %4235 = vrot.lane.b32.xlu0 %v4186, 96
    %v4236 = vpop.permute.xlu0 %4235
    %v4238 = vsel %vm1097, %v4234, 0
    %v4241 = vsel %vm1285, %v4236, 0
    %4243 = vmatprep.subr.bf16.mxu0 0
    %4244 = vmatpush1.bf16.msra.mxu0 %v4241
    %4245 = vmatprep.subr.bf16.mxu0 0
    %4246 = vmatpush1.bf16.msra.mxu0 0
    %4247 = vmatprep.subr.bf16.mxu0 0
    %4248 = vmatpush1.bf16.msra.mxu0 0
    %4249 = vmatprep.subr.bf16.mxu0 0
    %4250 = vmatpush1.bf16.msra.mxu0 0
    %4251 = vmatprep.subr.bf16.mxu0 0
    %4252 = vmatpush1.bf16.msra.mxu0 0
    %4253 = vmatprep.subr.bf16.mxu0 0
    %4254 = vmatpush1.bf16.msra.mxu0 0
    %4255 = vmatprep.subr.bf16.mxu0 0
    %4256 = vmatpush1.bf16.msra.mxu0 0
    %4257 = vmatprep.subr.bf16.mxu0 0
    %4258 = vmatpush1.bf16.msra.mxu0 0
    %4259 = vmatprep.subr.bf16.mxu0 0
    %4260 = vmatpush1.bf16.msra.mxu0 0
    %4261 = vmatprep.subr.bf16.mxu0 0
    %4262 = vmatpush1.bf16.msra.mxu0 0
    %4263 = vmatprep.subr.bf16.mxu0 0
    %4264 = vmatpush1.bf16.msra.mxu0 0
    %4265 = vmatprep.subr.bf16.mxu0 0
    %4266 = vmatpush1.bf16.msra.mxu0 0
    %4267 = vmatprep.subr.bf16.mxu0 0
    %4268 = vmatpush1.bf16.msra.mxu0 0
    %4269 = vmatprep.subr.bf16.mxu0 0
    %4270 = vmatpush1.bf16.msra.mxu0 0
    %4271 = vmatprep.subr.bf16.mxu0 0
    %4272 = vmatpush1.bf16.msra.mxu0 0
    %4273 = vmatprep.subr.bf16.mxu0 0
    %4274 = vmatpush1.bf16.msra.mxu0 0
    %4275 = vmatprep.mubr.bf16.mxu0 0
    %4276 = vmatmul.mubr.bf16.gmra.mrb[0].mxu0 %v4238
    %v4277 = vpop.f32.mrb[0].mxu0
    %v4278 = vadd.f32 0.0, %v4277
    %v4279 = vpop.f32.mrb[0].mxu0
    %v4280 = vpop.f32.mrb[0].mxu0
    %v4281 = vpop.f32.mrb[0].mxu0
    %4282 = vdwg.mxu0
    %4283 = vrot.lane.b32.xlu0 %v4186, 64
    %v4284 = vpop.permute.xlu0 %4283
    %v4286 = vsel %vm1097, %v3570, 0
    %v4289 = vsel %vm1285, %v4284, 0
    %4291 = vmatprep.subr.bf16.mxu0 0
    %4292 = vmatpush1.bf16.msra.mxu0 %v4289
    %4293 = vmatprep.subr.bf16.mxu0 0
    %4294 = vmatpush1.bf16.msra.mxu0 0
    %4295 = vmatprep.subr.bf16.mxu0 0
    %4296 = vmatpush1.bf16.msra.mxu0 0
    %4297 = vmatprep.subr.bf16.mxu0 0
    %4298 = vmatpush1.bf16.msra.mxu0 0
    %4299 = vmatprep.subr.bf16.mxu0 0
    %4300 = vmatpush1.bf16.msra.mxu0 0
    %4301 = vmatprep.subr.bf16.mxu0 0
    %4302 = vmatpush1.bf16.msra.mxu0 0
    %4303 = vmatprep.subr.bf16.mxu0 0
    %4304 = vmatpush1.bf16.msra.mxu0 0
    %4305 = vmatprep.subr.bf16.mxu0 0
    %4306 = vmatpush1.bf16.msra.mxu0 0
    %4307 = vmatprep.subr.bf16.mxu0 0
    %4308 = vmatpush1.bf16.msra.mxu0 0
    %4309 = vmatprep.subr.bf16.mxu0 0
    %4310 = vmatpush1.bf16.msra.mxu0 0
    %4311 = vmatprep.subr.bf16.mxu0 0
    %4312 = vmatpush1.bf16.msra.mxu0 0
    %4313 = vmatprep.subr.bf16.mxu0 0
    %4314 = vmatpush1.bf16.msra.mxu0 0
    %4315 = vmatprep.subr.bf16.mxu0 0
    %4316 = vmatpush1.bf16.msra.mxu0 0
    %4317 = vmatprep.subr.bf16.mxu0 0
    %4318 = vmatpush1.bf16.msra.mxu0 0
    %4319 = vmatprep.subr.bf16.mxu0 0
    %4320 = vmatpush1.bf16.msra.mxu0 0
    %4321 = vmatprep.subr.bf16.mxu0 0
    %4322 = vmatpush1.bf16.msra.mxu0 0
    %4323 = vmatprep.mubr.bf16.mxu0 0
    %4324 = vmatmul.mubr.bf16.gmra.mrb[0].mxu0 %v4286
    %v4325 = vpop.f32.mrb[0].mxu0
    %v4326 = vadd.f32 0.0, %v4325
    %v4327 = vpop.f32.mrb[0].mxu0
    %v4328 = vpop.f32.mrb[0].mxu0
    %v4329 = vpop.f32.mrb[0].mxu0
    %4330 = vdwg.mxu0
    %v4332 = vrot.slane %v3570, 4
    %4333 = vrot.lane.b32.xlu0 %v4186, 32
    %v4334 = vpop.permute.xlu0 %4333
    %v4336 = vsel %vm1097, %v4332, 0
    %v4339 = vsel %vm1285, %v4334, 0
    %4341 = vmatprep.subr.bf16.mxu0 0
    %4342 = vmatpush1.bf16.msra.mxu0 %v4339
    %4343 = vmatprep.subr.bf16.mxu0 0
    %4344 = vmatpush1.bf16.msra.mxu0 0
    %4345 = vmatprep.subr.bf16.mxu0 0
    %4346 = vmatpush1.bf16.msra.mxu0 0
    %4347 = vmatprep.subr.bf16.mxu0 0
    %4348 = vmatpush1.bf16.msra.mxu0 0
    %4349 = vmatprep.subr.bf16.mxu0 0
    %4350 = vmatpush1.bf16.msra.mxu0 0
    %4351 = vmatprep.subr.bf16.mxu0 0
    %4352 = vmatpush1.bf16.msra.mxu0 0
    %4353 = vmatprep.subr.bf16.mxu0 0
    %4354 = vmatpush1.bf16.msra.mxu0 0
    %4355 = vmatprep.subr.bf16.mxu0 0
    %4356 = vmatpush1.bf16.msra.mxu0 0
    %4357 = vmatprep.subr.bf16.mxu0 0
    %4358 = vmatpush1.bf16.msra.mxu0 0
    %4359 = vmatprep.subr.bf16.mxu0 0
    %4360 = vmatpush1.bf16.msra.mxu0 0
    %4361 = vmatprep.subr.bf16.mxu0 0
    %4362 = vmatpush1.bf16.msra.mxu0 0
    %4363 = vmatprep.subr.bf16.mxu0 0
    %4364 = vmatpush1.bf16.msra.mxu0 0
    %4365 = vmatprep.subr.bf16.mxu0 0
    %4366 = vmatpush1.bf16.msra.mxu0 0
    %4367 = vmatprep.subr.bf16.mxu0 0
    %4368 = vmatpush1.bf16.msra.mxu0 0
    %4369 = vmatprep.subr.bf16.mxu0 0
    %4370 = vmatpush1.bf16.msra.mxu0 0
    %4371 = vmatprep.subr.bf16.mxu0 0
    %4372 = vmatpush1.bf16.msra.mxu0 0
    %4373 = vmatprep.mubr.bf16.mxu0 0
    %4374 = vmatmul.mubr.bf16.gmra.mrb[0].mxu0 %v4336
    %v4375 = vpop.f32.mrb[0].mxu0
    %v4376 = vadd.f32 0.0, %v4375
    %v4377 = vpop.f32.mrb[0].mxu0
    %v4378 = vpop.f32.mrb[0].mxu0
    %v4379 = vpop.f32.mrb[0].mxu0
    %4380 = vdwg.mxu0
    %4382 = vrot.lane.b32.xlu0 %v4083, 32
    %v4383 = vpop.permute.xlu0 %4382
    %4386 = vrot.lane.b32.xlu0 %v4131, 64
    %v4387 = vpop.permute.xlu0 %4386
    %4390 = vrot.lane.b32.xlu0 %v4181, 96
    %v4391 = vpop.permute.xlu0 %4390
    %4394 = vrot.lane.b32.xlu0 %v4278, 32
    %v4395 = vpop.permute.xlu0 %4394
    %4398 = vrot.lane.b32.xlu0 %v4326, 64
    %v4399 = vpop.permute.xlu0 %4398
    %4402 = vrot.lane.b32.xlu0 %v4376, 96
    %v4403 = vpop.permute.xlu0 %4402
    %v4405 = vsel %vm102, %v4033, %v4383
    %v4406 = vsel %vm1698, %v4405, %v4387
    %v4407 = vsel %vm1700, %v4406, %v4391
    %v4408 = vsel %vm102, %v4228, %v4395
    %v4409 = vsel %vm1698, %v4408, %v4399
    %v4410 = vsel %vm1700, %v4409, %v4403
    %v4411 = vpack.c.bf16 %v4407, %v3987
    %v4412 = vpack.c.bf16 %v4410, %v3990
    %v4413 = vld [vmem:[%s12] sm:$0xf]
    %v4414 = vld [vmem:[%s12 + $0x4] sm:$0xf]
    %v4415 = vld [vmem:[%s12 + $0x8] sm:$0xf]
    %v4416 = vld [vmem:[%s12 + $0xc] sm:$0xf]
    %v4417 = vld [vmem:[%s12 + $0x10] sm:$0xf]
    %v4418 = vld [vmem:[%s12 + $0x14] sm:$0xf]
    %v4419 = vld [vmem:[%s12 + $0x18] sm:$0xf]
    %v4420 = vld [vmem:[%s12 + $0x1c] sm:$0xf]
    %v4421 = vld [vmem:[%s12 + $0x20] sm:$0xf]
    %v4422 = vld [vmem:[%s12 + $0x24] sm:$0xf]
    %v4423 = vld [vmem:[%s12 + $0x28] sm:$0xf]
    %v4424 = vld [vmem:[%s12 + $0x2c] sm:$0xf]
    %v4425 = vld [vmem:[%s12 + $0x30] sm:$0xf]
    %v4426 = vld [vmem:[%s12 + $0x34] sm:$0xf]
    %v4427 = vld [vmem:[%s12 + $0x38] sm:$0xf]
    %v4428 = vld [vmem:[%s12 + $0x3c] sm:$0xf]
    %v4429 = vld [vmem:[%s12 + $0x40] sm:$0xf]
    %v4430 = vld [vmem:[%s12 + $0x44] sm:$0xf]
    %v4431 = vld [vmem:[%s12 + $0x48] sm:$0xf]
    %v4432 = vld [vmem:[%s12 + $0x4c] sm:$0xf]
    %v4433 = vld [vmem:[%s12 + $0x50] sm:$0xf]
    %v4434 = vld [vmem:[%s12 + $0x54] sm:$0xf]
    %v4435 = vld [vmem:[%s12 + $0x58] sm:$0xf]
    %v4436 = vld [vmem:[%s12 + $0x5c] sm:$0xf]
    %v4437 = vld [vmem:[%s12 + $0x60] sm:$0xf]
    %v4438 = vld [vmem:[%s12 + $0x64] sm:$0xf]
    %v4439 = vld [vmem:[%s12 + $0x68] sm:$0xf]
    %v4440 = vld [vmem:[%s12 + $0x6c] sm:$0xf]
    %v4441 = vld [vmem:[%s12 + $0x70] sm:$0xf]
    %v4442 = vld [vmem:[%s12 + $0x74] sm:$0xf]
    %v4443 = vld [vmem:[%s12 + $0x78] sm:$0xf]
    %v4444 = vld [vmem:[%s12 + $0x7c] sm:$0xf]
    %v4445 = vld [vmem:[%s13] sm:$0x1]
    %v4447 = vlaneseq
    %v4448 = vshrl.u32 %v4447, 7
    %v4449 = vsub.s32 0, %v4448
    %v4450 = vrot.slane %v4445, %v4449
    %v4484 = vunpack.c.l.b16 %v4413
    %v4485 = vunpack.c.l.b16 %v4414
    %v4486 = vunpack.c.l.b16 %v4415
    %v4487 = vunpack.c.l.b16 %v4416
    %v4488 = vunpack.c.l.b16 %v4417
    %v4489 = vunpack.c.l.b16 %v4418
    %v4490 = vunpack.c.l.b16 %v4419
    %v4491 = vunpack.c.l.b16 %v4420
    %v4492 = vunpack.c.l.b16 %v4421
    %v4493 = vunpack.c.l.b16 %v4422
    %v4494 = vunpack.c.l.b16 %v4423
    %v4495 = vunpack.c.l.b16 %v4424
    %v4496 = vunpack.c.l.b16 %v4425
    %v4497 = vunpack.c.l.b16 %v4426
    %v4498 = vunpack.c.l.b16 %v4427
    %v4499 = vunpack.c.l.b16 %v4428
    %v4500 = vunpack.c.l.b16 %v4429
    %v4501 = vunpack.c.l.b16 %v4430
    %v4502 = vunpack.c.l.b16 %v4431
    %v4503 = vunpack.c.l.b16 %v4432
    %v4504 = vunpack.c.l.b16 %v4433
    %v4505 = vunpack.c.l.b16 %v4434
    %v4506 = vunpack.c.l.b16 %v4435
    %v4507 = vunpack.c.l.b16 %v4436
    %v4508 = vunpack.c.l.b16 %v4437
    %v4509 = vunpack.c.l.b16 %v4438
    %v4510 = vunpack.c.l.b16 %v4439
    %v4511 = vunpack.c.l.b16 %v4440
    %v4512 = vunpack.c.l.b16 %v4441
    %v4513 = vunpack.c.l.b16 %v4442
    %v4514 = vunpack.c.l.b16 %v4443
    %v4515 = vunpack.c.l.b16 %v4444
    %v4516 = vpack.c.b16 %v4485, %v4484
    %v4517 = vpack.c.b16 %v4487, %v4486
    %v4518 = vpack.c.b16 %v4489, %v4488
    %v4519 = vpack.c.b16 %v4491, %v4490
    %v4520 = vpack.c.b16 %v4493, %v4492
    %v4521 = vpack.c.b16 %v4495, %v4494
    %v4522 = vpack.c.b16 %v4497, %v4496
    %v4523 = vpack.c.b16 %v4499, %v4498
    %v4524 = vpack.c.b16 %v4501, %v4500
    %v4525 = vpack.c.b16 %v4503, %v4502
    %v4526 = vpack.c.b16 %v4505, %v4504
    %v4527 = vpack.c.b16 %v4507, %v4506
    %v4528 = vpack.c.b16 %v4509, %v4508
    %v4529 = vpack.c.b16 %v4511, %v4510
    %v4530 = vpack.c.b16 %v4513, %v4512
    %v4531 = vpack.c.b16 %v4515, %v4514
    %4548 = vmatprep.subr.bf16.mxu0 0
    %4549 = vmatpush1.bf16.msra.mxu0 %v4516
    %4550 = vmatprep.subr.bf16.mxu0 0
    %4551 = vmatpush1.bf16.msra.mxu0 %v4517
    %4552 = vmatprep.subr.bf16.mxu0 0
    %4553 = vmatpush1.bf16.msra.mxu0 %v4518
    %4554 = vmatprep.subr.bf16.mxu0 0
    %4555 = vmatpush1.bf16.msra.mxu0 %v4519
    %4556 = vmatprep.subr.bf16.mxu0 0
    %4557 = vmatpush1.bf16.msra.mxu0 %v4520
    %4558 = vmatprep.subr.bf16.mxu0 0
    %4559 = vmatpush1.bf16.msra.mxu0 %v4521
    %4560 = vmatprep.subr.bf16.mxu0 0
    %4561 = vmatpush1.bf16.msra.mxu0 %v4522
    %4562 = vmatprep.subr.bf16.mxu0 0
    %4563 = vmatpush1.bf16.msra.mxu0 %v4523
    %4564 = vmatprep.subr.bf16.mxu0 0
    %4565 = vmatpush1.bf16.msra.mxu0 %v4524
    %4566 = vmatprep.subr.bf16.mxu0 0
    %4567 = vmatpush1.bf16.msra.mxu0 %v4525
    %4568 = vmatprep.subr.bf16.mxu0 0
    %4569 = vmatpush1.bf16.msra.mxu0 %v4526
    %4570 = vmatprep.subr.bf16.mxu0 0
    %4571 = vmatpush1.bf16.msra.mxu0 %v4527
    %4572 = vmatprep.subr.bf16.mxu0 0
    %4573 = vmatpush1.bf16.msra.mxu0 %v4528
    %4574 = vmatprep.subr.bf16.mxu0 0
    %4575 = vmatpush1.bf16.msra.mxu0 %v4529
    %4576 = vmatprep.subr.bf16.mxu0 0
    %4577 = vmatpush1.bf16.msra.mxu0 %v4530
    %4578 = vmatprep.subr.bf16.mxu0 0
    %4579 = vmatpush1.bf16.msra.mxu0 %v4531
    %4580 = vmatprep.mubr.bf16.mxu0 %v4412
    %4581 = vmatmul.mubr.bf16.gmra.mrb[0].mxu0 %v4411
    %v4582 = vpop.f32.mrb[0].mxu0
    %v4583 = vadd.f32 %v4450, %v4582
    %v4584 = vpop.f32.mrb[0].mxu0
    %v4585 = vpop.f32.mrb[0].mxu0
    %v4586 = vadd.f32 %v4450, %v4585
    %v4587 = vpop.f32.mrb[0].mxu0
    %4588 = vdwg.mxu0
    %v4589 = vadd.f32 %v4583, %v2362
    %v4590 = vadd.f32 %v4586, %v2363
    %v4591 = vld [vmem:[%s14] sm:$0x1]
    %v4592 = vld [vmem:[%s15] sm:$0x1]
    %v4593 = vsel %vm102, %v4589, 0.0
    %4594 = vadd.xlane.f32.xlu0 %v4593
    %v4595 = vpop.xlane.xlu0 %4594
    %v4596 = vsel %vm102, %v4590, 0.0
    %4597 = vadd.xlane.f32.xlu0 %v4596
    %v4598 = vpop.xlane.xlu0 %4597
    %v4599 = vmul.f32 %v4595, %v2313
    %v4600 = vmul.f32 %v4598, %v2313
    %v4601 = vsub.f32 %v4589, %v4599
    %v4602 = vsub.f32 %v4590, %v4600
    %v4603 = vmul.f32 %v4601, %v4601
    %v4604 = vmul.f32 %v4602, %v4602
    %v4605 = vsel %vm102, %v4603, 0.0
    %4606 = vadd.xlane.f32.xlu0 %v4605
    %v4607 = vpop.xlane.xlu0 %4606
    %v4608 = vsel %vm102, %v4604, 0.0
    %4609 = vadd.xlane.f32.xlu0 %v4608
    %v4610 = vpop.xlane.xlu0 %4609
    %v4611 = vmul.f32 %v4607, 0.032258064
    %v4612 = vmul.f32 %v4610, 0.032258064
    %v4613 = vrsqrt.pop %v4611
    %v4614 = vmul.f32 %v4611, %v4613
    %vm4615 = vcmp.eq.f32.partialorder %v4611, inf
    %v4616 = vsel %vm4615, %v4611, %v4614
    %vm4617 = vcmp.eq.f32.partialorder %v4611, 0.0
    %v4618 = vand.u32 %v4611, 2147483648
    %v4619 = vsel %vm4617, %v4618, %v4616
    %v4620 = vrsqrt.pop %v4612
    %v4621 = vmul.f32 %v4612, %v4620
    %vm4622 = vcmp.eq.f32.partialorder %v4612, inf
    %v4623 = vsel %vm4622, %v4612, %v4621
    %vm4624 = vcmp.eq.f32.partialorder %v4612, 0.0
    %v4625 = vand.u32 %v4612, 2147483648
    %v4626 = vsel %vm4624, %v4625, %v4623
    %v4627 = vadd.f32 %v4619, 0.001
    %v4628 = vadd.f32 %v4626, 0.001
    %v4629 = vrcp.pop %v4627
    %v4630 = vmul.f32 %v4601, %v4629
    %v4631 = vrcp.pop %v4628
    %v4632 = vmul.f32 %v4602, %v4631
    %v4634 = vlaneseq
    %v4635 = vshrl.u32 %v4634, 7
    %v4636 = vsub.s32 0, %v4635
    %v4637 = vrot.slane %v4591, %v4636
    %v4639 = vmul.f32 %v4630, %v4637
    %v4640 = vmul.f32 %v4632, %v4637
    %v4642 = vlaneseq
    %v4643 = vshrl.u32 %v4642, 7
    %v4644 = vsub.s32 0, %v4643
    %v4645 = vrot.slane %v4592, %v4644
    %v4647 = vadd.f32 %v4639, %v4645
    %v4648 = vadd.f32 %v4640, %v4645
    %v4649 = vpack.c.bf16 %v4648, %v4647
    %v4650 = vld [vmem:[%s16] sm:$0xf]
    %v4651 = vld [vmem:[%s16 + $0x4] sm:$0xf]
    %v4652 = vld [vmem:[%s16 + $0x8] sm:$0xf]
    %v4653 = vld [vmem:[%s16 + $0xc] sm:$0xf]
    %v4654 = vld [vmem:[%s17] sm:$0x1]
    %v4656 = vlaneseq
    %v4657 = vshrl.u32 %v4656, 7
    %v4658 = vsub.s32 0, %v4657
    %v4659 = vrot.slane %v4654, %v4658
    %v4665 = vunpack.c.l.b16 %v4650
    %v4666 = vunpack.c.l.b16 %v4651
    %v4667 = vunpack.c.l.b16 %v4652
    %v4668 = vunpack.c.l.b16 %v4653
    %v4669 = vpack.c.b16 %v4666, %v4665
    %v4670 = vpack.c.b16 %v4668, %v4667
    %v4674 = vsel %vm102, %v4649, 0
    %4676 = vmatprep.subr.bf16.mxu0 0
    %4677 = vmatpush1.bf16.msra.mxu0 %v4669
    %4678 = vmatprep.subr.bf16.mxu0 0
    %4679 = vmatpush1.bf16.msra.mxu0 %v4670
    %4680 = vmatprep.subr.bf16.mxu0 0
    %4681 = vmatpush1.bf16.msra.mxu0 0
    %4682 = vmatprep.subr.bf16.mxu0 0
    %4683 = vmatpush1.bf16.msra.mxu0 0
    %4684 = vmatprep.subr.bf16.mxu0 0
    %4685 = vmatpush1.bf16.msra.mxu0 0
    %4686 = vmatprep.subr.bf16.mxu0 0
    %4687 = vmatpush1.bf16.msra.mxu0 0
    %4688 = vmatprep.subr.bf16.mxu0 0
    %4689 = vmatpush1.bf16.msra.mxu0 0
    %4690 = vmatprep.subr.bf16.mxu0 0
    %4691 = vmatpush1.bf16.msra.mxu0 0
    %4692 = vmatprep.subr.bf16.mxu0 0
    %4693 = vmatpush1.bf16.msra.mxu0 0
    %4694 = vmatprep.subr.bf16.mxu0 0
    %4695 = vmatpush1.bf16.msra.mxu0 0
    %4696 = vmatprep.subr.bf16.mxu0 0
    %4697 = vmatpush1.bf16.msra.mxu0 0
    %4698 = vmatprep.subr.bf16.mxu0 0
    %4699 = vmatpush1.bf16.msra.mxu0 0
    %4700 = vmatprep.subr.bf16.mxu0 0
    %4701 = vmatpush1.bf16.msra.mxu0 0
    %4702 = vmatprep.subr.bf16.mxu0 0
    %4703 = vmatpush1.bf16.msra.mxu0 0
    %4704 = vmatprep.subr.bf16.mxu0 0
    %4705 = vmatpush1.bf16.msra.mxu0 0
    %4706 = vmatprep.subr.bf16.mxu0 0
    %4707 = vmatpush1.bf16.msra.mxu0 0
    %4708 = vmatprep.mubr.bf16.mxu0 0
    %4709 = vmatmul.mubr.bf16.gmra.mrb[0].mxu0 %v4674
    %v4710 = vpop.f32.mrb[0].mxu0
    %v4711 = vadd.f32 %v4659, %v4710
    %v4712 = vpop.f32.mrb[0].mxu0
    %v4713 = vpop.f32.mrb[0].mxu0
    %v4714 = vadd.f32 %v4659, %v4713
    %v4715 = vpop.f32.mrb[0].mxu0
    %4716 = vdwg.mxu0
    %v4717 = vmax.f32 %v4711, 0.0
    %v4718 = vmax.f32 %v4714, 0.0
    %v4719 = vpack.c.bf16 %v4718, %v4717
    %v4720 = vld [vmem:[%s18] sm:$0xf]
    %v4721 = vld [vmem:[%s18 + $0x4] sm:$0xf]
    %v4722 = vld [vmem:[%s18 + $0x8] sm:$0xf]
    %v4723 = vld [vmem:[%s18 + $0xc] sm:$0xf]
    %v4724 = vld [vmem:[%s18 + $0x10] sm:$0xf]
    %v4725 = vld [vmem:[%s18 + $0x14] sm:$0xf]
    %v4726 = vld [vmem:[%s18 + $0x18] sm:$0xf]
    %v4727 = vld [vmem:[%s18 + $0x1c] sm:$0xf]
    %v4728 = vld [vmem:[%s18 + $0x20] sm:$0xf]
    %v4729 = vld [vmem:[%s18 + $0x24] sm:$0xf]
    %v4730 = vld [vmem:[%s18 + $0x28] sm:$0xf]
    %v4731 = vld [vmem:[%s18 + $0x2c] sm:$0xf]
    %v4732 = vld [vmem:[%s18 + $0x30] sm:$0xf]
    %v4733 = vld [vmem:[%s18 + $0x34] sm:$0xf]
    %v4734 = vld [vmem:[%s18 + $0x38] sm:$0xf]
    %v4735 = vld [vmem:[%s18 + $0x3c] sm:$0xf]
    %v4736 = vld [vmem:[%s19] sm:$0x1]
    %v4738 = vlaneseq
    %v4739 = vshrl.u32 %v4738, 7
    %v4740 = vsub.s32 0, %v4739
    %v4741 = vrot.slane %v4736, %v4740
    %v4759 = vunpack.c.l.b16 %v4720
    %v4760 = vunpack.c.l.b16 %v4721
    %v4761 = vunpack.c.l.b16 %v4722
    %v4762 = vunpack.c.l.b16 %v4723
    %v4763 = vunpack.c.l.b16 %v4724
    %v4764 = vunpack.c.l.b16 %v4725
    %v4765 = vunpack.c.l.b16 %v4726
    %v4766 = vunpack.c.l.b16 %v4727
    %v4767 = vunpack.c.l.b16 %v4728
    %v4768 = vunpack.c.l.b16 %v4729
    %v4769 = vunpack.c.l.b16 %v4730
    %v4770 = vunpack.c.l.b16 %v4731
    %v4771 = vunpack.c.l.b16 %v4732
    %v4772 = vunpack.c.l.b16 %v4733
    %v4773 = vunpack.c.l.b16 %v4734
    %v4774 = vunpack.c.l.b16 %v4735
    %v4775 = vpack.c.b16 %v4760, %v4759
    %v4776 = vpack.c.b16 %v4762, %v4761
    %v4777 = vpack.c.b16 %v4764, %v4763
    %v4778 = vpack.c.b16 %v4766, %v4765
    %v4779 = vpack.c.b16 %v4768, %v4767
    %v4780 = vpack.c.b16 %v4770, %v4769
    %v4781 = vpack.c.b16 %v4772, %v4771
    %v4782 = vpack.c.b16 %v4774, %v4773
    %4791 = vmatprep.subr.bf16.mxu0 0
    %4792 = vmatpush1.bf16.msra.mxu0 %v4775
    %4793 = vmatprep.subr.bf16.mxu0 0
    %4794 = vmatpush1.bf16.msra.mxu0 %v4776
    %4795 = vmatprep.subr.bf16.mxu0 0
    %4796 = vmatpush1.bf16.msra.mxu0 %v4777
    %4797 = vmatprep.subr.bf16.mxu0 0
    %4798 = vmatpush1.bf16.msra.mxu0 %v4778
    %4799 = vmatprep.subr.bf16.mxu0 0
    %4800 = vmatpush1.bf16.msra.mxu0 %v4779
    %4801 = vmatprep.subr.bf16.mxu0 0
    %4802 = vmatpush1.bf16.msra.mxu0 %v4780
    %4803 = vmatprep.subr.bf16.mxu0 0
    %4804 = vmatpush1.bf16.msra.mxu0 %v4781
    %4805 = vmatprep.subr.bf16.mxu0 0
    %4806 = vmatpush1.bf16.msra.mxu0 %v4782
    %4807 = vmatprep.subr.bf16.mxu0 0
    %4808 = vmatpush1.bf16.msra.mxu0 0
    %4809 = vmatprep.subr.bf16.mxu0 0
    %4810 = vmatpush1.bf16.msra.mxu0 0
    %4811 = vmatprep.subr.bf16.mxu0 0
    %4812 = vmatpush1.bf16.msra.mxu0 0
    %4813 = vmatprep.subr.bf16.mxu0 0
    %4814 = vmatpush1.bf16.msra.mxu0 0
    %4815 = vmatprep.subr.bf16.mxu0 0
    %4816 = vmatpush1.bf16.msra.mxu0 0
    %4817 = vmatprep.subr.bf16.mxu0 0
    %4818 = vmatpush1.bf16.msra.mxu0 0
    %4819 = vmatprep.subr.bf16.mxu0 0
    %4820 = vmatpush1.bf16.msra.mxu0 0
    %4821 = vmatprep.subr.bf16.mxu0 0
    %4822 = vmatpush1.bf16.msra.mxu0 0
    %4823 = vmatprep.mubr.bf16.mxu0 0
    %4824 = vmatmul.mubr.bf16.gmra.mrb[0].mxu0 %v4719
    %v4825 = vpop.f32.mrb[0].mxu0
    %v4826 = vadd.f32 %v4741, %v4825
    %v4827 = vpop.f32.mrb[0].mxu0
    %v4828 = vpop.f32.mrb[0].mxu0
    %v4829 = vadd.f32 %v4741, %v4828
    %v4830 = vpop.f32.mrb[0].mxu0
    %4831 = vdwg.mxu0
    %v4832 = vadd.f32 %v4826, %v4647
    %v4833 = vadd.f32 %v4829, %v4648
    %v4834 = vld [vmem:[%s20] sm:$0x1]
    %v4835 = vld [vmem:[%s21] sm:$0x1]
    %v4836 = vsel %vm102, %v4832, 0.0
    %4837 = vadd.xlane.f32.xlu0 %v4836
    %v4838 = vpop.xlane.xlu0 %4837
    %v4839 = vsel %vm102, %v4833, 0.0
    %4840 = vadd.xlane.f32.xlu0 %v4839
    %v4841 = vpop.xlane.xlu0 %4840
    %v4842 = vmul.f32 %v4838, %v2313
    %v4843 = vmul.f32 %v4841, %v2313
    %v4844 = vsub.f32 %v4832, %v4842
    %v4845 = vsub.f32 %v4833, %v4843
    %v4846 = vmul.f32 %v4844, %v4844
    %v4847 = vmul.f32 %v4845, %v4845
    %v4848 = vsel %vm102, %v4846, 0.0
    %4849 = vadd.xlane.f32.xlu0 %v4848
    %v4850 = vpop.xlane.xlu0 %4849
    %v4851 = vsel %vm102, %v4847, 0.0
    %4852 = vadd.xlane.f32.xlu0 %v4851
    %v4853 = vpop.xlane.xlu0 %4852
    %v4854 = vmul.f32 %v4850, 0.032258064
    %v4855 = vmul.f32 %v4853, 0.032258064
    %v4856 = vrsqrt.pop %v4854
    %v4857 = vmul.f32 %v4854, %v4856
    %vm4858 = vcmp.eq.f32.partialorder %v4854, inf
    %v4859 = vsel %vm4858, %v4854, %v4857
    %vm4860 = vcmp.eq.f32.partialorder %v4854, 0.0
    %v4861 = vand.u32 %v4854, 2147483648
    %v4862 = vsel %vm4860, %v4861, %v4859
    %v4863 = vrsqrt.pop %v4855
    %v4864 = vmul.f32 %v4855, %v4863
    %vm4865 = vcmp.eq.f32.partialorder %v4855, inf
    %v4866 = vsel %vm4865, %v4855, %v4864
    %vm4867 = vcmp.eq.f32.partialorder %v4855, 0.0
    %v4868 = vand.u32 %v4855, 2147483648
    %v4869 = vsel %vm4867, %v4868, %v4866
    %v4870 = vadd.f32 %v4862, 0.001
    %v4871 = vadd.f32 %v4869, 0.001
    %v4872 = vrcp.pop %v4870
    %v4873 = vmul.f32 %v4844, %v4872
    %v4874 = vrcp.pop %v4871
    %v4875 = vmul.f32 %v4845, %v4874
    %v4877 = vlaneseq
    %v4878 = vshrl.u32 %v4877, 7
    %v4879 = vsub.s32 0, %v4878
    %v4880 = vrot.slane %v4834, %v4879
    %v4882 = vmul.f32 %v4873, %v4880
    %v4883 = vmul.f32 %v4875, %v4880
    %v4885 = vlaneseq
    %v4886 = vshrl.u32 %v4885, 7
    %v4887 = vsub.s32 0, %v4886
    %v4888 = vrot.slane %v4835, %v4887
    %v4890 = vadd.f32 %v4882, %v4888
    %v4891 = vadd.f32 %v4883, %v4888
    %4892 = vst.msk [vmem:[#allocation2] sm:$0xff] %vm102, %v4890
    %4893 = vst.msk [vmem:[#allocation2 + $0x8] sm:$0xff] %vm102, %v4891
    // Predicated region
    $region90: #{transformer_layer.1} parent=1 // pred_check
      _
    $region91: #{transformer_layer.1} parent=1 // pred_check_branch
      %4895 = sbr.rel (0) target = $region93
    $region92: #{transformer_layer.1} parent=1 // pred_region
      %s4897 = ssub.s32 256, 256
      %4898 = vsyncadd [#allocation3], %s4897
      %s4899 = sshll.u32 [#allocation2], 4
      %s4900 = int_to_ptr.vmem [resolvable:$true] %s4899
      %4905 = dma.vmem_to_hbm [thread:$0]  %s4900, 256, %s22, [#allocation3], 128, 128, 8
    $region93: #{transformer_layer.1} parent=1 // pred_fallthru
      _
    // Predicated region
    $region94: #{transformer_layer.1} parent=1 // pred_check
      _
    $region95: #{transformer_layer.1} parent=1 // pred_check_branch
      %4907 = sbr.rel (0) target = $region97
    $region96: #{transformer_layer.1} parent=1 // pred_region
      %4908 = dma.done [#allocation3], 256
    $region97: #{transformer_layer.1} parent=1 // pred_fallthru
      _
    %4909 = vsyncpa [#allocation3], 1

</llo_original>
